<compile_context>
chip_gen: v6e
topology: v6e:2x2x1
jax: 0.10.0
libtpu: 0.0.40
codegen_flags: <defaults>
</compile_context>

<pallas_src>
import functools

import jax
import jax.numpy as jnp
from jax.experimental import pallas as pl
from jax.experimental.pallas import tpu as pltpu


# --------------------------------------------------------------------------
# Elementwise helpers (pure jnp: usable inside kernels and in references)
# --------------------------------------------------------------------------
def _softplus(x):
    # Stable softplus: max(x, 0) + log1p(exp(-|x|)).
    return jnp.maximum(x, 0.0) + jnp.log1p(jnp.exp(-jnp.abs(x)))


def _kl_elem(mu, sigma):
    # Elementwise KL( N(mu, sigma^2) || N(0, 1) ); sigma floored before log.
    return (-jnp.log(jnp.maximum(sigma, 1e-30))
            + 0.5 * (sigma * sigma + mu * mu) - 0.5)


def _f32(x):
    return x.astype(jnp.float32)


# --------------------------------------------------------------------------
# Tiled per-child kernel (general path)
#   grid = (Dout // tn, Din // tk)  ->  (j: parallel, k: arbitrary/reduction)
# --------------------------------------------------------------------------
def _bayes_linear_kl_kernel(x_ref, wmu_ref, wrho_ref, weps_ref,
                            bmu_ref, brho_ref, beps_ref,
                            y_ref, kl_ref):
    """One (j, k) tile of a Bayesian linear child.

    y_ref / kl_ref block indices do not depend on k, so they stay resident in
    VMEM across the whole K reduction and serve as the accumulators directly.
    """
    k = pl.program_id(1)
    nk = pl.num_programs(1)

    @pl.when(k == 0)
    def _init():
        y_ref[...] = jnp.zeros_like(y_ref)
        kl_ref[...] = jnp.zeros_like(kl_ref)

    # ---- sample this (tk, tn) weight tile in f32: W = mu + softplus(rho)*eps
    w_mu = _f32(wmu_ref[...])
    sigma_w = _softplus(_f32(wrho_ref[...]))
    w = w_mu + sigma_w * _f32(weps_ref[...])

    # ---- MXU matmul accumulated over K directly into the resident output.
    # (Batch is tiny here so f32 operands are fine; cast x/w to bf16 once the
    #  batch is large enough that the matmul itself matters.)
    y_ref[...] += jnp.dot(x_ref[...], w, preferred_element_type=jnp.float32)

    # ---- fused KL for this weight tile, reduced along K (sublanes) so the
    #      running partial stays a lane-dense (1, tn) row.
    kl_ref[...] += jnp.sum(_kl_elem(w_mu, sigma_w), axis=0, keepdims=True)

    @pl.when(k == nk - 1)
    def _finalize():
        b_mu = _f32(bmu_ref[...])
        sigma_b = _softplus(_f32(brho_ref[...]))
        y_ref[...] += b_mu + sigma_b * _f32(beps_ref[...])   # bias sample + add
        kl_ref[...] += _kl_elem(b_mu, sigma_b)               # bias KL


def _choose_tile(dim, cap):
    """Largest multiple of 128 that divides `dim` and is <= cap, else `dim`."""
    if dim % 128 != 0:
        # TODO(synk): pad feature dims to a multiple of 128 on the host instead
        # of the full-dim fallback (avoids masked stores / VMEM blow-up).
        return dim
    t = max(128, min(cap - cap % 128, dim))
    while dim % t != 0:
        t -= 128
    return t


def _choose_tn(dout, cap):
    if dout % 128 != 0:
        return dout
    if dout >= 256:
        # Keep >= 2 output blocks so the "parallel" axis feeds both v7x TCs.
        cap = min(cap, max(128, (dout // 2) // 128 * 128))
    return _choose_tile(dout, cap)


def bayes_linear_kl(x, w_mu, w_rho, w_eps, b_mu, b_rho, b_eps,
                    *, tk_max=1024, tn_max=512):
    """Tiled fused Bayesian linear child: returns (y, kl_loss)."""
    B, Din = x.shape
    Dout = w_mu.shape[1]
    tk = _choose_tile(Din, tk_max)
    tn = _choose_tn(Dout, tn_max)
    nj, nk = Dout // tn, Din // tk
    wbytes = w_mu.dtype.itemsize

    cost = pl.CostEstimate(
        flops=2 * B * Din * Dout,
        transcendentals=3 * Din * Dout,                # exp + log1p (softplus) + log (KL)
        bytes_accessed=(3 * Din * Dout + 3 * Dout) * wbytes
        + nj * B * Din * 4 + B * Dout * 4 + Dout * 4)

    grid_spec = pltpu.PrefetchScalarGridSpec(
        num_scalar_prefetch=0,
        grid=(nj, nk),
        in_specs=[
            # x is re-fetched once per j block (nj * B * Din * 4 bytes): this is
            # negligible next to the weight stream for small batches.
            pl.BlockSpec((B, tk), lambda j, k: (0, k)),      # x (f32)
            pl.BlockSpec((tk, tn), lambda j, k: (k, j)),     # w_mu  (bf16)
            pl.BlockSpec((tk, tn), lambda j, k: (k, j)),     # w_rho (bf16)
            pl.BlockSpec((tk, tn), lambda j, k: (k, j)),     # eps_w (bf16)
            pl.BlockSpec((1, tn), lambda j, k: (0, j)),      # b_mu
            pl.BlockSpec((1, tn), lambda j, k: (0, j)),      # b_rho
            pl.BlockSpec((1, tn), lambda j, k: (0, j)),      # eps_b
        ],
        out_specs=[
            pl.BlockSpec((B, tn), lambda j, k: (0, j)),      # y  (f32 accumulator)
            pl.BlockSpec((1, tn), lambda j, k: (0, j)),      # KL lane partials
        ],
    )

    y, kl_row = pl.pallas_call(
        _bayes_linear_kl_kernel,
        out_shape=(jax.ShapeDtypeStruct((B, Dout), jnp.float32),
                   jax.ShapeDtypeStruct((1, Dout), jnp.float32)),
        grid_spec=grid_spec,
        compiler_params=pltpu.CompilerParams(
            dimension_semantics=("parallel", "arbitrary"),
            # Working set (3 bf16 weight tiles x 2 buffers + activations) is a
            # few MiB; 32 MiB is safe on every generation incl. v7x (64 MiB phys).
            vmem_limit_bytes=32 * 1024 * 1024),
        cost_estimate=cost,
    )(x, w_mu, w_rho, w_eps, b_mu, b_rho, b_eps)

    # Tiny (1, Dout) host-side reduction; KL is independent of the sampled eps.
    return y, jnp.sum(kl_row)


# --------------------------------------------------------------------------
# Fused whole-stack kernel (used when all parameters fit in VMEM)
# --------------------------------------------------------------------------
def _make_stack_kernel(num_layers):
    def kernel(*refs):
        x_ref = refs[0]
        y_ref, kl_ref = refs[-2], refs[-1]
        prm = refs[1:-2]

        x = _f32(x_ref[...])
        kl = jnp.zeros((1, 1), jnp.float32)
        for li in range(num_layers):
            wmu, wrho, weps, bmu, brho, beps = prm[6 * li:6 * li + 6]
            w_mu = _f32(wmu[...])
            sigma_w = _softplus(_f32(wrho[...]))
            w = w_mu + sigma_w * _f32(weps[...])
            b_mu = _f32(bmu[...])
            sigma_b = _softplus(_f32(brho[...]))
            b = b_mu + sigma_b * _f32(beps[...])
            x = jnp.dot(x, w, preferred_element_type=jnp.float32) + b
            kl = (kl + jnp.sum(_kl_elem(w_mu, sigma_w), keepdims=True)
                     + jnp.sum(_kl_elem(b_mu, sigma_b), keepdims=True))
        y_ref[...] = x.astype(y_ref.dtype)
        kl_ref[...] = kl
    return kernel


_FUSE_VMEM_BUDGET = 16 * 1024 * 1024   # conservative even for v7x (64 MiB physical)


def _fused_footprint_bytes(x, layers):
    n = x.size * x.dtype.itemsize
    for p in layers:
        n += 3 * p["w_mu"].size * p["w_mu"].dtype.itemsize
        n += 3 * p["b_mu"].size * p["b_mu"].dtype.itemsize
    douts = [p["w_mu"].shape[1] for p in layers]
    n += 2 * x.shape[0] * max(douts) * 4        # in-flight activations
    n += x.shape[0] * douts[-1] * 4 + 4         # outputs
    return 2 * n                                # double-buffering headroom


def _fused_stack_forward(x, layers, eps):
    B = x.shape[0]
    Dlast = layers[-1]["w_mu"].shape[1]
    num_layers = len(layers)

    inputs = [x]
    in_specs = [pl.BlockSpec(x.shape, lambda i: (0, 0))]
    flops = trans = wbytes = 0
    for p, (ew, eb) in zip(layers, eps):
        din, dout = p["w_mu"].shape
        for arr in (p["w_mu"], p["w_rho"], ew, p["b_mu"], p["b_rho"], eb):
            inputs.append(arr)
            in_specs.append(pl.BlockSpec(arr.shape, lambda i: (0, 0)))
        flops += 2 * B * din * dout
        trans += 3 * din * dout
        wbytes += (3 * din * dout + 3 * dout) * p["w_mu"].dtype.itemsize

    cost = pl.CostEstimate(
        flops=flops, transcendentals=trans,
        bytes_accessed=wbytes + x.size * x.dtype.itemsize + B * Dlast * 4 + 4)

    y, kl = pl.pallas_call(
        _make_stack_kernel(num_layers),
        out_shape=(jax.ShapeDtypeStruct((B, Dlast), jnp.float32),
                   jax.ShapeDtypeStruct((1, 1), jnp.float32)),
        grid_spec=pltpu.PrefetchScalarGridSpec(
            num_scalar_prefetch=0,
            grid=(1,),
            in_specs=in_specs,
            out_specs=[pl.BlockSpec((B, Dlast), lambda i: (0, 0)),
                       pl.BlockSpec((1, 1), lambda i: (0, 0))]),
        compiler_params=pltpu.CompilerParams(
            dimension_semantics=("arbitrary",),
            vmem_limit_bytes=32 * 1024 * 1024),
        cost_estimate=cost,
    )(*inputs)
    return y, kl[0, 0]


# --------------------------------------------------------------------------
# BayesianBase: sequential children + summed kl_loss()
# --------------------------------------------------------------------------
def _tiled_stack_forward(x, layers, eps, *, tk_max=1024, tn_max=512):
    kl = jnp.zeros((), jnp.float32)
    for p, (ew, eb) in zip(layers, eps):
        x, kl_i = bayes_linear_kl(x, p["w_mu"], p["w_rho"], ew,
                                  p["b_mu"], p["b_rho"], eb,
                                  tk_max=tk_max, tn_max=tn_max)
        kl = kl + kl_i
    return x, kl


def bayesian_base_forward(x, layers, eps):
    """BayesianBase.forward: apply children in order, return (x, summed kl_loss)."""
    if _fused_footprint_bytes(x, layers) <= _FUSE_VMEM_BUDGET:
        return _fused_stack_forward(x, layers, eps)     # one launch, no HBM round-trips
    return _tiled_stack_forward(x, layers, eps)          # general tiled path


# --------------------------------------------------------------------------
# Parameter / noise construction and pure-JAX references
# --------------------------------------------------------------------------
def make_bayesian_stack(key, dims, param_dtype=jnp.bfloat16):
    """dims = [D0, ..., Dk]; builds k Bayesian linear children (bf16 params)."""
    layers = []
    for din, dout in zip(dims[:-1], dims[1:]):
        key, k1, k2 = jax.random.split(key, 3)
        layers.append(dict(
            w_mu=(0.1 * jax.random.normal(k1, (din, dout), jnp.float32)).astype(param_dtype),
            w_rho=jnp.full((din, dout), -3.0, param_dtype),
            b_mu=(0.1 * jax.random.normal(k2, (1, dout), jnp.float32)).astype(param_dtype),
            b_rho=jnp.full((1, dout), -3.0, param_dtype),
        ))
    return layers


def sample_eps(key, layers, eps_dtype=jnp.bfloat16):
    """Fresh reparameterization noise for one forward pass (one eps per param)."""
    eps = []
    for p in layers:
        key, k1, k2 = jax.random.split(key, 3)
        eps.append((jax.random.normal(k1, p["w_mu"].shape, jnp.float32).astype(eps_dtype),
                    jax.random.normal(k2, p["b_mu"].shape, jnp.float32).astype(eps_dtype)))
    return eps


def reference_forward(x, layers, eps):
    """Pure-JAX f32 reference on the same bf16-rounded params / noise."""
    kl = jnp.zeros((), jnp.float32)
    for p, (ew, eb) in zip(layers, eps):
        sig_w = _softplus(_f32(p["w_rho"]))
        sig_b = _softplus(_f32(p["b_rho"]))
        w = _f32(p["w_mu"]) + sig_w * _f32(ew)
        b = _f32(p["b_mu"]) + sig_b * _f32(eb)
        x = jnp.dot(x, w, precision=jax.lax.Precision.HIGHEST) + b
        kl = (kl + jnp.sum(_kl_elem(_f32(p["w_mu"]), sig_w))
                 + jnp.sum(_kl_elem(_f32(p["b_mu"]), sig_b)))
    return x, kl


def reference_mean_forward(x, layers):
    for p in layers:
        x = jnp.dot(x, _f32(p["w_mu"]),
                    precision=jax.lax.Precision.HIGHEST) + _f32(p["b_mu"])
    return x


# --------------------------------------------------------------------------
if __name__ == "__main__":
    key = jax.random.PRNGKey(0)
    key, kx, kp, ke = jax.random.split(key, 4)

    B, dims = 8, [512, 256, 128]            # small, lane-dense feature dims
    x = jax.random.normal(kx, (B, dims[0]), jnp.float32)
    layers = make_bayesian_stack(kp, dims)
    eps = sample_eps(ke, layers)

    # Fused-stack path (chosen automatically: the whole stack fits in VMEM).
    y, kl = jax.jit(bayesian_base_forward)(x, layers, eps)
    jax.block_until_ready((y, kl))

    # General tiled per-child path, with smaller tile caps so both grid axes
    # (output blocks + K reduction accumulation) are actually exercised.
    y_t, kl_t = jax.jit(functools.partial(_tiled_stack_forward,
                                          tk_max=256, tn_max=128))(x, layers, eps)
    jax.block_until_ready((y_t, kl_t))

    # ---- checks against a pure-JAX f32 reference on identical inputs ----
    y_ref, kl_ref = reference_forward(x, layers, eps)
    y_mean = reference_mean_forward(x, layers)
    scale = 1.0 + float(jnp.max(jnp.abs(y_ref)))
    kl_ref_f = float(kl_ref)

    assert y.shape == (B, dims[-1]) and y.dtype == jnp.float32
    assert bool(jnp.all(jnp.isfinite(y))) and bool(jnp.isfinite(kl))

    assert float(jnp.max(jnp.abs(y - y_ref))) / scale < 1e-2
    assert float(jnp.max(jnp.abs(y_t - y_ref))) / scale < 1e-2

    assert abs(float(kl) - kl_ref_f) / max(1.0, abs(kl_ref_f)) < 1e-3
    assert abs(float(kl_t) - kl_ref_f) / max(1.0, abs(kl_ref_f)) < 1e-3

    # The reparameterization noise actually perturbed the output.
    assert float(jnp.max(jnp.abs(y - y_mean))) > 1e-3

    print("KERNEL_OK")
</pallas_src>

<mosaic_0001>
module attributes {stable_mosaic.version = 11 : i64} {
  func.func @kernel(%arg0: i32, %arg1: memref<8x512xf32, #tpu.memory_space<vmem>>, %arg2: memref<512x256xbf16, #tpu.memory_space<vmem>>, %arg3: memref<512x256xbf16, #tpu.memory_space<vmem>>, %arg4: memref<512x256xbf16, #tpu.memory_space<vmem>>, %arg5: memref<1x256xbf16, #tpu.memory_space<vmem>>, %arg6: memref<1x256xbf16, #tpu.memory_space<vmem>>, %arg7: memref<1x256xbf16, #tpu.memory_space<vmem>>, %arg8: memref<256x128xbf16, #tpu.memory_space<vmem>>, %arg9: memref<256x128xbf16, #tpu.memory_space<vmem>>, %arg10: memref<256x128xbf16, #tpu.memory_space<vmem>>, %arg11: memref<1x128xbf16, #tpu.memory_space<vmem>>, %arg12: memref<1x128xbf16, #tpu.memory_space<vmem>>, %arg13: memref<1x128xbf16, #tpu.memory_space<vmem>>, %arg14: memref<8x128xf32, #tpu.memory_space<vmem>>, %arg15: memref<1x1xf32, #tpu.memory_space<vmem>>) attributes {dimension_semantics = [#tpu.dimension_semantics<arbitrary>], iteration_bounds = array<i64: 1>, scalar_prefetch = 0 : i64, scratch_operands = 0 : i64, tpu.core_type = #tpu.core_type<tc>, window_params = [{pipeline_mode = #tpu.pipeline_mode<synchronous>, transform_indices = @transform_0, window_bounds = array<i64: 8, 512>}, {pipeline_mode = #tpu.pipeline_mode<synchronous>, transform_indices = @transform_1, window_bounds = array<i64: 512, 256>}, {pipeline_mode = #tpu.pipeline_mode<synchronous>, transform_indices = @transform_2, window_bounds = array<i64: 512, 256>}, {pipeline_mode = #tpu.pipeline_mode<synchronous>, transform_indices = @transform_3, window_bounds = array<i64: 512, 256>}, {pipeline_mode = #tpu.pipeline_mode<synchronous>, transform_indices = @transform_4, window_bounds = array<i64: 1, 256>}, {pipeline_mode = #tpu.pipeline_mode<synchronous>, transform_indices = @transform_5, window_bounds = array<i64: 1, 256>}, {pipeline_mode = #tpu.pipeline_mode<synchronous>, transform_indices = @transform_6, window_bounds = array<i64: 1, 256>}, {pipeline_mode = #tpu.pipeline_mode<synchronous>, transform_indices = @transform_7, window_bounds = array<i64: 256, 128>}, {pipeline_mode = #tpu.pipeline_mode<synchronous>, transform_indices = @transform_8, window_bounds = array<i64: 256, 128>}, {pipeline_mode = #tpu.pipeline_mode<synchronous>, transform_indices = @transform_9, window_bounds = array<i64: 256, 128>}, {pipeline_mode = #tpu.pipeline_mode<synchronous>, transform_indices = @transform_10, window_bounds = array<i64: 1, 128>}, {pipeline_mode = #tpu.pipeline_mode<synchronous>, transform_indices = @transform_11, window_bounds = array<i64: 1, 128>}, {pipeline_mode = #tpu.pipeline_mode<synchronous>, transform_indices = @transform_12, window_bounds = array<i64: 1, 128>}, {pipeline_mode = #tpu.pipeline_mode<synchronous>, transform_indices = @transform_13, window_bounds = array<i64: 8, 128>}, {pipeline_mode = #tpu.pipeline_mode<synchronous>, transform_indices = @transform_14, window_bounds = array<i64: 1, 1>}]} {
    %c0 = arith.constant 0 : index
    %c0_0 = arith.constant 0 : index
    %0 = vector.load %arg1[%c0, %c0_0] : memref<8x512xf32, #tpu.memory_space<vmem>>, vector<8x512xf32>
    %cst = arith.constant 0.000000e+00 : f32
    %1 = vector.broadcast %cst : f32 to vector<1x1xf32>
    %c0_1 = arith.constant 0 : index
    %c0_2 = arith.constant 0 : index
    %2 = vector.load %arg2[%c0_1, %c0_2] : memref<512x256xbf16, #tpu.memory_space<vmem>>, vector<512x256xbf16>
    %3 = arith.extf %2 : vector<512x256xbf16> to vector<512x256xf32>
    %c0_3 = arith.constant 0 : index
    %c0_4 = arith.constant 0 : index
    %4 = vector.load %arg3[%c0_3, %c0_4] : memref<512x256xbf16, #tpu.memory_space<vmem>>, vector<512x256xbf16>
    %5 = arith.extf %4 : vector<512x256xbf16> to vector<512x256xf32>
    %cst_5 = arith.constant 0.000000e+00 : f32
    %6 = vector.broadcast %cst_5 : f32 to vector<512x256xf32>
    %7 = arith.maximumf %5, %6 : vector<512x256xf32>
    %8 = math.absf %5 : vector<512x256xf32>
    %cst_6 = arith.constant 0.000000e+00 : f32
    %9 = vector.broadcast %cst_6 : f32 to vector<512x256xf32>
    %10 = arith.subf %9, %8 : vector<512x256xf32>
    %11 = math.exp %10 : vector<512x256xf32>
    %12 = math.log1p %11 : vector<512x256xf32>
    %13 = arith.addf %7, %12 : vector<512x256xf32>
    %c0_7 = arith.constant 0 : index
    %c0_8 = arith.constant 0 : index
    %14 = vector.load %arg4[%c0_7, %c0_8] : memref<512x256xbf16, #tpu.memory_space<vmem>>, vector<512x256xbf16>
    %15 = arith.extf %14 : vector<512x256xbf16> to vector<512x256xf32>
    %16 = arith.mulf %13, %15 : vector<512x256xf32>
    %17 = arith.addf %3, %16 : vector<512x256xf32>
    %c0_9 = arith.constant 0 : index
    %c0_10 = arith.constant 0 : index
    %18 = vector.load %arg5[%c0_9, %c0_10] : memref<1x256xbf16, #tpu.memory_space<vmem>>, vector<1x256xbf16>
    %19 = arith.extf %18 : vector<1x256xbf16> to vector<1x256xf32>
    %c0_11 = arith.constant 0 : index
    %c0_12 = arith.constant 0 : index
    %20 = vector.load %arg6[%c0_11, %c0_12] : memref<1x256xbf16, #tpu.memory_space<vmem>>, vector<1x256xbf16>
    %21 = arith.extf %20 : vector<1x256xbf16> to vector<1x256xf32>
    %cst_13 = arith.constant 0.000000e+00 : f32
    %22 = vector.broadcast %cst_13 : f32 to vector<1x256xf32>
    %23 = arith.maximumf %21, %22 : vector<1x256xf32>
    %24 = math.absf %21 : vector<1x256xf32>
    %cst_14 = arith.constant 0.000000e+00 : f32
    %25 = vector.broadcast %cst_14 : f32 to vector<1x256xf32>
    %26 = arith.subf %25, %24 : vector<1x256xf32>
    %27 = math.exp %26 : vector<1x256xf32>
    %28 = math.log1p %27 : vector<1x256xf32>
    %29 = arith.addf %23, %28 : vector<1x256xf32>
    %c0_15 = arith.constant 0 : index
    %c0_16 = arith.constant 0 : index
    %30 = vector.load %arg7[%c0_15, %c0_16] : memref<1x256xbf16, #tpu.memory_space<vmem>>, vector<1x256xbf16>
    %31 = arith.extf %30 : vector<1x256xbf16> to vector<1x256xf32>
    %32 = arith.mulf %29, %31 : vector<1x256xf32>
    %33 = arith.addf %19, %32 : vector<1x256xf32>
    %cst_17 = arith.constant dense<0.000000e+00> : vector<8x256xf32>
    %34 = tpu.matmul %0, %17, %cst_17 {dimension_numbers = #tpu.dot_dimension_numbers<[1], [0], [0], [1], [0, 0, 1, 1], [], []>} : vector<8x512xf32>, vector<512x256xf32>, vector<8x256xf32> -> vector<8x256xf32>
    %35 = vector.broadcast %33 : vector<1x256xf32> to vector<8x256xf32>
    %36 = arith.addf %34, %35 : vector<8x256xf32>
    %cst_18 = arith.constant 1.000000e-30 : f32
    %37 = vector.broadcast %cst_18 : f32 to vector<512x256xf32>
    %38 = arith.maximumf %13, %37 : vector<512x256xf32>
    %39 = math.log %38 : vector<512x256xf32>
    %cst_19 = arith.constant 0.000000e+00 : f32
    %40 = vector.broadcast %cst_19 : f32 to vector<512x256xf32>
    %41 = arith.subf %40, %39 : vector<512x256xf32>
    %42 = arith.mulf %13, %13 : vector<512x256xf32>
    %43 = arith.mulf %3, %3 : vector<512x256xf32>
    %44 = arith.addf %42, %43 : vector<512x256xf32>
    %cst_20 = arith.constant 5.000000e-01 : f32
    %45 = vector.broadcast %cst_20 : f32 to vector<512x256xf32>
    %46 = arith.mulf %45, %44 : vector<512x256xf32>
    %47 = arith.addf %41, %46 : vector<512x256xf32>
    %cst_21 = arith.constant 5.000000e-01 : f32
    %48 = vector.broadcast %cst_21 : f32 to vector<512x256xf32>
    %49 = arith.subf %47, %48 : vector<512x256xf32>
    %50 = vector.shape_cast %49 : vector<512x256xf32> to vector<1x512x256xf32>
    %cst_22 = arith.constant dense<0.000000e+00> : vector<1xf32>
    %51 = vector.multi_reduction <add>, %50, %cst_22 [1, 2] : vector<1x512x256xf32> to vector<1xf32>
    %52 = vector.shape_cast %51 : vector<1xf32> to vector<1x1x1xf32>
    %53 = vector.extract %52[0, 0, 0] : f32 from vector<1x1x1xf32>
    %54 = vector.broadcast %53 : f32 to vector<1x1xf32>
    %55 = arith.addf %1, %54 : vector<1x1xf32>
    %cst_23 = arith.constant 1.000000e-30 : f32
    %56 = vector.broadcast %cst_23 : f32 to vector<1x256xf32>
    %57 = arith.maximumf %29, %56 : vector<1x256xf32>
    %58 = math.log %57 : vector<1x256xf32>
    %cst_24 = arith.constant 0.000000e+00 : f32
    %59 = vector.broadcast %cst_24 : f32 to vector<1x256xf32>
    %60 = arith.subf %59, %58 : vector<1x256xf32>
    %61 = arith.mulf %29, %29 : vector<1x256xf32>
    %62 = arith.mulf %19, %19 : vector<1x256xf32>
    %63 = arith.addf %61, %62 : vector<1x256xf32>
    %cst_25 = arith.constant 5.000000e-01 : f32
    %64 = vector.broadcast %cst_25 : f32 to vector<1x256xf32>
    %65 = arith.mulf %64, %63 : vector<1x256xf32>
    %66 = arith.addf %60, %65 : vector<1x256xf32>
    %cst_26 = arith.constant 5.000000e-01 : f32
    %67 = vector.broadcast %cst_26 : f32 to vector<1x256xf32>
    %68 = arith.subf %66, %67 : vector<1x256xf32>
    %69 = vector.shape_cast %68 : vector<1x256xf32> to vector<1x1x256xf32>
    %cst_27 = arith.constant dense<0.000000e+00> : vector<1xf32>
    %70 = vector.multi_reduction <add>, %69, %cst_27 [1, 2] : vector<1x1x256xf32> to vector<1xf32>
    %71 = vector.shape_cast %70 : vector<1xf32> to vector<1x1x1xf32>
    %72 = vector.extract %71[0, 0, 0] : f32 from vector<1x1x1xf32>
    %73 = vector.broadcast %72 : f32 to vector<1x1xf32>
    %74 = arith.addf %55, %73 : vector<1x1xf32>
    %c0_28 = arith.constant 0 : index
    %c0_29 = arith.constant 0 : index
    %75 = vector.load %arg8[%c0_28, %c0_29] : memref<256x128xbf16, #tpu.memory_space<vmem>>, vector<256x128xbf16>
    %76 = arith.extf %75 : vector<256x128xbf16> to vector<256x128xf32>
    %c0_30 = arith.constant 0 : index
    %c0_31 = arith.constant 0 : index
    %77 = vector.load %arg9[%c0_30, %c0_31] : memref<256x128xbf16, #tpu.memory_space<vmem>>, vector<256x128xbf16>
    %78 = arith.extf %77 : vector<256x128xbf16> to vector<256x128xf32>
    %cst_32 = arith.constant 0.000000e+00 : f32
    %79 = vector.broadcast %cst_32 : f32 to vector<256x128xf32>
    %80 = arith.maximumf %78, %79 : vector<256x128xf32>
    %81 = math.absf %78 : vector<256x128xf32>
    %cst_33 = arith.constant 0.000000e+00 : f32
    %82 = vector.broadcast %cst_33 : f32 to vector<256x128xf32>
    %83 = arith.subf %82, %81 : vector<256x128xf32>
    %84 = math.exp %83 : vector<256x128xf32>
    %85 = math.log1p %84 : vector<256x128xf32>
    %86 = arith.addf %80, %85 : vector<256x128xf32>
    %c0_34 = arith.constant 0 : index
    %c0_35 = arith.constant 0 : index
    %87 = vector.load %arg10[%c0_34, %c0_35] : memref<256x128xbf16, #tpu.memory_space<vmem>>, vector<256x128xbf16>
    %88 = arith.extf %87 : vector<256x128xbf16> to vector<256x128xf32>
    %89 = arith.mulf %86, %88 : vector<256x128xf32>
    %90 = arith.addf %76, %89 : vector<256x128xf32>
    %c0_36 = arith.constant 0 : index
    %c0_37 = arith.constant 0 : index
    %91 = vector.load %arg11[%c0_36, %c0_37] : memref<1x128xbf16, #tpu.memory_space<vmem>>, vector<1x128xbf16>
    %92 = arith.extf %91 : vector<1x128xbf16> to vector<1x128xf32>
    %c0_38 = arith.constant 0 : index
    %c0_39 = arith.constant 0 : index
    %93 = vector.load %arg12[%c0_38, %c0_39] : memref<1x128xbf16, #tpu.memory_space<vmem>>, vector<1x128xbf16>
    %94 = arith.extf %93 : vector<1x128xbf16> to vector<1x128xf32>
    %cst_40 = arith.constant 0.000000e+00 : f32
    %95 = vector.broadcast %cst_40 : f32 to vector<1x128xf32>
    %96 = arith.maximumf %94, %95 : vector<1x128xf32>
    %97 = math.absf %94 : vector<1x128xf32>
    %cst_41 = arith.constant 0.000000e+00 : f32
    %98 = vector.broadcast %cst_41 : f32 to vector<1x128xf32>
    %99 = arith.subf %98, %97 : vector<1x128xf32>
    %100 = math.exp %99 : vector<1x128xf32>
    %101 = math.log1p %100 : vector<1x128xf32>
    %102 = arith.addf %96, %101 : vector<1x128xf32>
    %c0_42 = arith.constant 0 : index
    %c0_43 = arith.constant 0 : index
    %103 = vector.load %arg13[%c0_42, %c0_43] : memref<1x128xbf16, #tpu.memory_space<vmem>>, vector<1x128xbf16>
    %104 = arith.extf %103 : vector<1x128xbf16> to vector<1x128xf32>
    %105 = arith.mulf %102, %104 : vector<1x128xf32>
    %106 = arith.addf %92, %105 : vector<1x128xf32>
    %cst_44 = arith.constant dense<0.000000e+00> : vector<8x128xf32>
    %107 = tpu.matmul %36, %90, %cst_44 {dimension_numbers = #tpu.dot_dimension_numbers<[1], [0], [0], [1], [0, 0, 1, 1], [], []>} : vector<8x256xf32>, vector<256x128xf32>, vector<8x128xf32> -> vector<8x128xf32>
    %108 = vector.broadcast %106 : vector<1x128xf32> to vector<8x128xf32>
    %109 = arith.addf %107, %108 : vector<8x128xf32>
    %cst_45 = arith.constant 1.000000e-30 : f32
    %110 = vector.broadcast %cst_45 : f32 to vector<256x128xf32>
    %111 = arith.maximumf %86, %110 : vector<256x128xf32>
    %112 = math.log %111 : vector<256x128xf32>
    %cst_46 = arith.constant 0.000000e+00 : f32
    %113 = vector.broadcast %cst_46 : f32 to vector<256x128xf32>
    %114 = arith.subf %113, %112 : vector<256x128xf32>
    %115 = arith.mulf %86, %86 : vector<256x128xf32>
    %116 = arith.mulf %76, %76 : vector<256x128xf32>
    %117 = arith.addf %115, %116 : vector<256x128xf32>
    %cst_47 = arith.constant 5.000000e-01 : f32
    %118 = vector.broadcast %cst_47 : f32 to vector<256x128xf32>
    %119 = arith.mulf %118, %117 : vector<256x128xf32>
    %120 = arith.addf %114, %119 : vector<256x128xf32>
    %cst_48 = arith.constant 5.000000e-01 : f32
    %121 = vector.broadcast %cst_48 : f32 to vector<256x128xf32>
    %122 = arith.subf %120, %121 : vector<256x128xf32>
    %123 = vector.shape_cast %122 : vector<256x128xf32> to vector<1x256x128xf32>
    %cst_49 = arith.constant dense<0.000000e+00> : vector<1xf32>
    %124 = vector.multi_reduction <add>, %123, %cst_49 [1, 2] : vector<1x256x128xf32> to vector<1xf32>
    %125 = vector.shape_cast %124 : vector<1xf32> to vector<1x1x1xf32>
    %126 = vector.extract %125[0, 0, 0] : f32 from vector<1x1x1xf32>
    %127 = vector.broadcast %126 : f32 to vector<1x1xf32>
    %128 = arith.addf %74, %127 : vector<1x1xf32>
    %cst_50 = arith.constant 1.000000e-30 : f32
    %129 = vector.broadcast %cst_50 : f32 to vector<1x128xf32>
    %130 = arith.maximumf %102, %129 : vector<1x128xf32>
    %131 = math.log %130 : vector<1x128xf32>
    %cst_51 = arith.constant 0.000000e+00 : f32
    %132 = vector.broadcast %cst_51 : f32 to vector<1x128xf32>
    %133 = arith.subf %132, %131 : vector<1x128xf32>
    %134 = arith.mulf %102, %102 : vector<1x128xf32>
    %135 = arith.mulf %92, %92 : vector<1x128xf32>
    %136 = arith.addf %134, %135 : vector<1x128xf32>
    %cst_52 = arith.constant 5.000000e-01 : f32
    %137 = vector.broadcast %cst_52 : f32 to vector<1x128xf32>
    %138 = arith.mulf %137, %136 : vector<1x128xf32>
    %139 = arith.addf %133, %138 : vector<1x128xf32>
    %cst_53 = arith.constant 5.000000e-01 : f32
    %140 = vector.broadcast %cst_53 : f32 to vector<1x128xf32>
    %141 = arith.subf %139, %140 : vector<1x128xf32>
    %142 = vector.shape_cast %141 : vector<1x128xf32> to vector<1x1x128xf32>
    %cst_54 = arith.constant dense<0.000000e+00> : vector<1xf32>
    %143 = vector.multi_reduction <add>, %142, %cst_54 [1, 2] : vector<1x1x128xf32> to vector<1xf32>
    %144 = vector.shape_cast %143 : vector<1xf32> to vector<1x1x1xf32>
    %145 = vector.extract %144[0, 0, 0] : f32 from vector<1x1x1xf32>
    %146 = vector.broadcast %145 : f32 to vector<1x1xf32>
    %147 = arith.addf %128, %146 : vector<1x1xf32>
    %c0_55 = arith.constant 0 : index
    %c0_56 = arith.constant 0 : index
    %148 = vector.load %arg14[%c0_55, %c0_56] : memref<8x128xf32, #tpu.memory_space<vmem>>, vector<8x128xf32>
    tpu.vector_store %arg14[%c0_55, %c0_56], %109 {strides = array<i32>} : memref<8x128xf32, #tpu.memory_space<vmem>>, vector<8x128xf32>,
    %c0_57 = arith.constant 0 : index
    %c0_58 = arith.constant 0 : index
    %149 = vector.load %arg15[%c0_57, %c0_58] : memref<1x1xf32, #tpu.memory_space<vmem>>, vector<1x1xf32>
    tpu.vector_store %arg15[%c0_57, %c0_58], %147 {strides = array<i32>} : memref<1x1xf32, #tpu.memory_space<vmem>>, vector<1x1xf32>,
    return
  }
  func.func @transform_0(%arg0: i32) -> (i32, i32) {
    %c0_i32 = arith.constant 0 : i32
    %c0_i32_0 = arith.constant 0 : i32
    %c0_i32_1 = arith.constant 0 : i32
    return %c0_i32, %c0_i32_0 : i32, i32
  }
  func.func @transform_1(%arg0: i32) -> (i32, i32) {
    %c0_i32 = arith.constant 0 : i32
    %c0_i32_0 = arith.constant 0 : i32
    %c0_i32_1 = arith.constant 0 : i32
    return %c0_i32, %c0_i32_0 : i32, i32
  }
  func.func @transform_2(%arg0: i32) -> (i32, i32) {
    %c0_i32 = arith.constant 0 : i32
    %c0_i32_0 = arith.constant 0 : i32
    %c0_i32_1 = arith.constant 0 : i32
    return %c0_i32, %c0_i32_0 : i32, i32
  }
  func.func @transform_3(%arg0: i32) -> (i32, i32) {
    %c0_i32 = arith.constant 0 : i32
    %c0_i32_0 = arith.constant 0 : i32
    %c0_i32_1 = arith.constant 0 : i32
    return %c0_i32, %c0_i32_0 : i32, i32
  }
  func.func @transform_4(%arg0: i32) -> (i32, i32) {
    %c0_i32 = arith.constant 0 : i32
    %c0_i32_0 = arith.constant 0 : i32
    %c0_i32_1 = arith.constant 0 : i32
    return %c0_i32, %c0_i32_0 : i32, i32
  }
  func.func @transform_5(%arg0: i32) -> (i32, i32) {
    %c0_i32 = arith.constant 0 : i32
    %c0_i32_0 = arith.constant 0 : i32
    %c0_i32_1 = arith.constant 0 : i32
    return %c0_i32, %c0_i32_0 : i32, i32
  }
  func.func @transform_6(%arg0: i32) -> (i32, i32) {
    %c0_i32 = arith.constant 0 : i32
    %c0_i32_0 = arith.constant 0 : i32
    %c0_i32_1 = arith.constant 0 : i32
    return %c0_i32, %c0_i32_0 : i32, i32
  }
  func.func @transform_7(%arg0: i32) -> (i32, i32) {
    %c0_i32 = arith.constant 0 : i32
    %c0_i32_0 = arith.constant 0 : i32
    %c0_i32_1 = arith.constant 0 : i32
    return %c0_i32, %c0_i32_0 : i32, i32
  }
  func.func @transform_8(%arg0: i32) -> (i32, i32) {
    %c0_i32 = arith.constant 0 : i32
    %c0_i32_0 = arith.constant 0 : i32
    %c0_i32_1 = arith.constant 0 : i32
    return %c0_i32, %c0_i32_0 : i32, i32
  }
  func.func @transform_9(%arg0: i32) -> (i32, i32) {
    %c0_i32 = arith.constant 0 : i32
    %c0_i32_0 = arith.constant 0 : i32
    %c0_i32_1 = arith.constant 0 : i32
    return %c0_i32, %c0_i32_0 : i32, i32
  }
  func.func @transform_10(%arg0: i32) -> (i32, i32) {
    %c0_i32 = arith.constant 0 : i32
    %c0_i32_0 = arith.constant 0 : i32
    %c0_i32_1 = arith.constant 0 : i32
    return %c0_i32, %c0_i32_0 : i32, i32
  }
  func.func @transform_11(%arg0: i32) -> (i32, i32) {
    %c0_i32 = arith.constant 0 : i32
    %c0_i32_0 = arith.constant 0 : i32
    %c0_i32_1 = arith.constant 0 : i32
    return %c0_i32, %c0_i32_0 : i32, i32
  }
  func.func @transform_12(%arg0: i32) -> (i32, i32) {
    %c0_i32 = arith.constant 0 : i32
    %c0_i32_0 = arith.constant 0 : i32
    %c0_i32_1 = arith.constant 0 : i32
    return %c0_i32, %c0_i32_0 : i32, i32
  }
  func.func @transform_13(%arg0: i32) -> (i32, i32) {
    %c0_i32 = arith.constant 0 : i32
    %c0_i32_0 = arith.constant 0 : i32
    %c0_i32_1 = arith.constant 0 : i32
    return %c0_i32, %c0_i32_0 : i32, i32
  }
  func.func @transform_14(%arg0: i32) -> (i32, i32) {
    %c0_i32 = arith.constant 0 : i32
    %c0_i32_0 = arith.constant 0 : i32
    %c0_i32_1 = arith.constant 0 : i32
    return %c0_i32, %c0_i32_0 : i32, i32
  }
}

</mosaic_0001>

<llo_original>
// kernel: bayesian_base_forward.1
$region0: #{bayesian_base_forward.1}
  #allocation0 [shape = 'u32[]', space=smem, size = 0x4, offset = 0x4, fixed_abs, tag = 'smem constant byte address 0x4 - core index']
  #allocation1 [shape = 'u32[144,128]{1,0:T(1,128)}', space=vmem, size = 0x12000, scoped, tag = 'internal scratch']
  %s0 = inlined_call_operand.hbm [shape: f32[8,512], index: 0, kind: input, shape index: {}]
  %s1 = inlined_call_operand.hbm [shape: bf16[512,256], index: 1, kind: input, shape index: {}]
  %s2 = inlined_call_operand.hbm [shape: bf16[512,256], index: 2, kind: input, shape index: {}]
  %s3 = inlined_call_operand.hbm [shape: bf16[512,256], index: 3, kind: input, shape index: {}]
  %s4 = inlined_call_operand.hbm [shape: bf16[1,256], index: 4, kind: input, shape index: {}]
  %s5 = inlined_call_operand.vmem [shape: bf16[1,256], index: 5, kind: input, shape index: {}]
  %s6 = inlined_call_operand.vmem [shape: bf16[1,256], index: 6, kind: input, shape index: {}]
  %s7 = inlined_call_operand.hbm [shape: bf16[256,128], index: 7, kind: input, shape index: {}]
  %s8 = inlined_call_operand.hbm [shape: bf16[256,128], index: 8, kind: input, shape index: {}]
  %s9 = inlined_call_operand.hbm [shape: bf16[256,128], index: 9, kind: input, shape index: {}]
  %s10 = inlined_call_operand.vmem [shape: bf16[1,128], index: 10, kind: input, shape index: {}]
  %s11 = inlined_call_operand.vmem [shape: bf16[1,128], index: 11, kind: input, shape index: {}]
  %s12 = inlined_call_operand.vmem [shape: bf16[1,128], index: 12, kind: input, shape index: {}]
  %s13 = inlined_call_operand.hbm [shape: f32[8,128], index: 13, kind: output, shape index: {0}]
  %s14 = inlined_call_operand.hbm [shape: f32[1,1], index: 14, kind: output, shape index: {1}]
  %15 = xla_tuple %s13, %s14
  %s16 = sld [smem:[#allocation0]]
  $region102: #{bayesian_base_forward.1} parent=0
    _
  %s18 = ssub.s32 1, %s16
  %s19 = scalar_select 0, %s18, %s16
  $region1: #{bayesian_base_forward.1} parent=0
    #allocation2 [shape = 'u8[16384]{0}', space=vmem, size = 0x4000, scoped, tag = 'input window, operand 0, single buffered']
    #allocation3 [shape = 's32[1]{0}', space=sflag, size = 0x4, scoped, tag = 'scoped memory for bayesian_base_forward.1']
    #allocation4 [shape = 's32[1]{0}', space=sflag, size = 0x4, scoped, tag = 'scoped memory for bayesian_base_forward.1']
    #allocation5 [shape = 'u8[262144]{0}', space=vmem, size = 0x40000, scoped, tag = 'input window, operand 1, single buffered']
    #allocation6 [shape = 's32[1]{0}', space=sflag, size = 0x4, scoped, tag = 'scoped memory for bayesian_base_forward.1']
    #allocation7 [shape = 'u8[262144]{0}', space=vmem, size = 0x40000, scoped, tag = 'input window, operand 2, single buffered']
    #allocation8 [shape = 'u8[262144]{0}', space=vmem, size = 0x40000, scoped, tag = 'input window, operand 3, single buffered']
    #allocation9 [shape = 's32[1]{0}', space=sflag, size = 0x4, scoped, tag = 'scoped memory for bayesian_base_forward.1']
    #allocation10 [shape = 'u8[1024]{0}', space=vmem, size = 0x400, scoped, tag = 'input window, operand 4, single buffered']
    #allocation11 [shape = 'u8[65536]{0}', space=vmem, size = 0x10000, scoped, tag = 'input window, operand 7, single buffered']
    #allocation12 [shape = 's32[1]{0}', space=sflag, size = 0x4, scoped, tag = 'scoped memory for bayesian_base_forward.1']
    #allocation13 [shape = 'u8[65536]{0}', space=vmem, size = 0x10000, scoped, tag = 'input window, operand 8, single buffered']
    #allocation14 [shape = 'u8[65536]{0}', space=vmem, size = 0x10000, scoped, tag = 'input window, operand 9, single buffered']
    #allocation15 [shape = 's32[1]{0}', space=sflag, size = 0x4, scoped, tag = 'scoped memory for bayesian_base_forward.1']
    #allocation16 [shape = 'u8[4096]{0}', space=vmem, size = 0x1000, scoped, tag = 'output window, operand 0, single buffered']
    #allocation17 [shape = 'u8[512]{0}', space=vmem, size = 0x400, scoped, tag = 'output window, operand 1, single buffered']
    #allocation18 [shape = 's32[1]{0}', space=sflag, size = 0x4, scoped, tag = 'scoped memory for bayesian_base_forward.1']
    %20 = vsyncpa [#allocation3], 0
    %21 = vsyncpa [#allocation6], 0
    %22 = vsyncpa [#allocation9], 0
    %23 = vsyncpa [#allocation12], 0
    %24 = vsyncpa [#allocation15], 0
    %25 = vsyncpa [#allocation4], 0
    %26 = vsyncpa [#allocation18], 0
    // Predicated region
    $region2: #{bayesian_base_forward.1} parent=1 // pred_check
      _
    $region3: #{bayesian_base_forward.1} parent=1 // pred_check_branch
      %28 = sbr.rel (0) target = $region5
    $region4: #{bayesian_base_forward.1} parent=1 // pred_region
      %s30 = ssub.s32 512, 512
      %31 = vsyncadd [#allocation3], %s30
      %s33 = sshll.u32 [#allocation2], 4
      %s34 = int_to_ptr.vmem [resolvable:$true] %s33
      %36 = dma.hbm_to_vmem [thread:$0]  %s0, 512, %s34, [#allocation3]
    $region5: #{bayesian_base_forward.1} parent=1 // pred_fallthru
      _
    // Predicated region
    $region6: #{bayesian_base_forward.1} parent=1 // pred_check
      _
    $region7: #{bayesian_base_forward.1} parent=1 // pred_check_branch
      %38 = sbr.rel (0) target = $region9
    $region8: #{bayesian_base_forward.1} parent=1 // pred_region
      %s40 = ssub.s32 8192, 8192
      %41 = vsyncadd [#allocation6], %s40
      %s42 = sshll.u32 [#allocation5], 4
      %s43 = int_to_ptr.vmem [resolvable:$true] %s42
      %48 = dma.hbm_to_vmem [thread:$0]  %s1, 8192, %s43, [#allocation6], 128, 128, 8
    $region9: #{bayesian_base_forward.1} parent=1 // pred_fallthru
      _
    // Predicated region
    $region10: #{bayesian_base_forward.1} parent=1 // pred_check
      _
    $region11: #{bayesian_base_forward.1} parent=1 // pred_check_branch
      %50 = sbr.rel (0) target = $region13
    $region12: #{bayesian_base_forward.1} parent=1 // pred_region
      %s52 = ssub.s32 8192, 8192
      %53 = vsyncadd [#allocation6], %s52
      %s54 = sshll.u32 [#allocation7], 4
      %s55 = int_to_ptr.vmem [resolvable:$true] %s54
      %60 = dma.hbm_to_vmem [thread:$0]  %s2, 8192, %s55, [#allocation6], 128, 128, 8
    $region13: #{bayesian_base_forward.1} parent=1 // pred_fallthru
      _
    // Predicated region
    $region14: #{bayesian_base_forward.1} parent=1 // pred_check
      _
    $region15: #{bayesian_base_forward.1} parent=1 // pred_check_branch
      %62 = sbr.rel (0) target = $region17
    $region16: #{bayesian_base_forward.1} parent=1 // pred_region
      %s64 = ssub.s32 8192, 8192
      %65 = vsyncadd [#allocation9], %s64
      %s66 = sshll.u32 [#allocation8], 4
      %s67 = int_to_ptr.vmem [resolvable:$true] %s66
      %72 = dma.hbm_to_vmem [thread:$0]  %s3, 8192, %s67, [#allocation9], 128, 128, 8
    $region17: #{bayesian_base_forward.1} parent=1 // pred_fallthru
      _
    // Predicated region
    $region18: #{bayesian_base_forward.1} parent=1 // pred_check
      _
    $region19: #{bayesian_base_forward.1} parent=1 // pred_check_branch
      %74 = sbr.rel (0) target = $region21
    $region20: #{bayesian_base_forward.1} parent=1 // pred_region
      %s76 = ssub.s32 32, 32
      %77 = vsyncadd [#allocation9], %s76
      %s79 = sshll.u32 [#allocation10], 4
      %s80 = int_to_ptr.vmem [resolvable:$true] %s79
      %82 = dma.hbm_to_vmem [thread:$0]  %s4, 32, %s80, [#allocation9]
    $region21: #{bayesian_base_forward.1} parent=1 // pred_fallthru
      _
    // Predicated region
    $region22: #{bayesian_base_forward.1} parent=1 // pred_check
      _
    $region23: #{bayesian_base_forward.1} parent=1 // pred_check_branch
      %84 = sbr.rel (0) target = $region25
    $region24: #{bayesian_base_forward.1} parent=1 // pred_region
      _
    $region25: #{bayesian_base_forward.1} parent=1 // pred_fallthru
      _
    // Predicated region
    $region26: #{bayesian_base_forward.1} parent=1 // pred_check
      _
    $region27: #{bayesian_base_forward.1} parent=1 // pred_check_branch
      %86 = sbr.rel (0) target = $region29
    $region28: #{bayesian_base_forward.1} parent=1 // pred_region
      _
    $region29: #{bayesian_base_forward.1} parent=1 // pred_fallthru
      _
    // Predicated region
    $region30: #{bayesian_base_forward.1} parent=1 // pred_check
      _
    $region31: #{bayesian_base_forward.1} parent=1 // pred_check_branch
      %88 = sbr.rel (0) target = $region33
    $region32: #{bayesian_base_forward.1} parent=1 // pred_region
      %s90 = ssub.s32 2048, 2048
      %91 = vsyncadd [#allocation12], %s90
      %s92 = sshll.u32 [#allocation11], 4
      %s93 = int_to_ptr.vmem [resolvable:$true] %s92
      %98 = dma.hbm_to_vmem [thread:$0]  %s7, 2048, %s93, [#allocation12], 64, 64, 4
    $region33: #{bayesian_base_forward.1} parent=1 // pred_fallthru
      _
    // Predicated region
    $region34: #{bayesian_base_forward.1} parent=1 // pred_check
      _
    $region35: #{bayesian_base_forward.1} parent=1 // pred_check_branch
      %100 = sbr.rel (0) target = $region37
    $region36: #{bayesian_base_forward.1} parent=1 // pred_region
      %s102 = ssub.s32 2048, 2048
      %103 = vsyncadd [#allocation12], %s102
      %s104 = sshll.u32 [#allocation13], 4
      %s105 = int_to_ptr.vmem [resolvable:$true] %s104
      %110 = dma.hbm_to_vmem [thread:$0]  %s8, 2048, %s105, [#allocation12], 64, 64, 4
    $region37: #{bayesian_base_forward.1} parent=1 // pred_fallthru
      _
    // Predicated region
    $region38: #{bayesian_base_forward.1} parent=1 // pred_check
      _
    $region39: #{bayesian_base_forward.1} parent=1 // pred_check_branch
      %112 = sbr.rel (0) target = $region41
    $region40: #{bayesian_base_forward.1} parent=1 // pred_region
      %s114 = ssub.s32 2048, 2048
      %115 = vsyncadd [#allocation15], %s114
      %s116 = sshll.u32 [#allocation14], 4
      %s117 = int_to_ptr.vmem [resolvable:$true] %s116
      %122 = dma.hbm_to_vmem [thread:$0]  %s9, 2048, %s117, [#allocation15], 64, 64, 4
    $region41: #{bayesian_base_forward.1} parent=1 // pred_fallthru
      _
    // Predicated region
    $region42: #{bayesian_base_forward.1} parent=1 // pred_check
      _
    $region43: #{bayesian_base_forward.1} parent=1 // pred_check_branch
      %124 = sbr.rel (0) target = $region45
    $region44: #{bayesian_base_forward.1} parent=1 // pred_region
      _
    $region45: #{bayesian_base_forward.1} parent=1 // pred_fallthru
      _
    // Predicated region
    $region46: #{bayesian_base_forward.1} parent=1 // pred_check
      _
    $region47: #{bayesian_base_forward.1} parent=1 // pred_check_branch
      %126 = sbr.rel (0) target = $region49
    $region48: #{bayesian_base_forward.1} parent=1 // pred_region
      _
    $region49: #{bayesian_base_forward.1} parent=1 // pred_fallthru
      _
    // Predicated region
    $region50: #{bayesian_base_forward.1} parent=1 // pred_check
      _
    $region51: #{bayesian_base_forward.1} parent=1 // pred_check_branch
      %128 = sbr.rel (0) target = $region53
    $region52: #{bayesian_base_forward.1} parent=1 // pred_region
      _
    $region53: #{bayesian_base_forward.1} parent=1 // pred_fallthru
      _
    // Predicated region
    $region54: #{bayesian_base_forward.1} parent=1 // pred_check
      _
    $region55: #{bayesian_base_forward.1} parent=1 // pred_check_branch
      %130 = sbr.rel (0) target = $region57
    $region56: #{bayesian_base_forward.1} parent=1 // pred_region
      %131 = dma.done [#allocation3], 512
    $region57: #{bayesian_base_forward.1} parent=1 // pred_fallthru
      _
    // Predicated region
    $region58: #{bayesian_base_forward.1} parent=1 // pred_check
      _
    $region59: #{bayesian_base_forward.1} parent=1 // pred_check_branch
      %133 = sbr.rel (0) target = $region61
    $region60: #{bayesian_base_forward.1} parent=1 // pred_region
      %134 = dma.done [#allocation6], 8192
    $region61: #{bayesian_base_forward.1} parent=1 // pred_fallthru
      _
    // Predicated region
    $region62: #{bayesian_base_forward.1} parent=1 // pred_check
      _
    $region63: #{bayesian_base_forward.1} parent=1 // pred_check_branch
      %136 = sbr.rel (0) target = $region65
    $region64: #{bayesian_base_forward.1} parent=1 // pred_region
      %137 = dma.done [#allocation6], 8192
    $region65: #{bayesian_base_forward.1} parent=1 // pred_fallthru
      _
    // Predicated region
    $region66: #{bayesian_base_forward.1} parent=1 // pred_check
      _
    $region67: #{bayesian_base_forward.1} parent=1 // pred_check_branch
      %139 = sbr.rel (0) target = $region69
    $region68: #{bayesian_base_forward.1} parent=1 // pred_region
      %140 = dma.done [#allocation9], 8192
    $region69: #{bayesian_base_forward.1} parent=1 // pred_fallthru
      _
    // Predicated region
    $region70: #{bayesian_base_forward.1} parent=1 // pred_check
      _
    $region71: #{bayesian_base_forward.1} parent=1 // pred_check_branch
      %142 = sbr.rel (0) target = $region73
    $region72: #{bayesian_base_forward.1} parent=1 // pred_region
      %143 = dma.done [#allocation9], 32
    $region73: #{bayesian_base_forward.1} parent=1 // pred_fallthru
      _
    // Predicated region
    $region74: #{bayesian_base_forward.1} parent=1 // pred_check
      _
    $region75: #{bayesian_base_forward.1} parent=1 // pred_check_branch
      %145 = sbr.rel (0) target = $region77
    $region76: #{bayesian_base_forward.1} parent=1 // pred_region
      %146 = dma.done [#allocation12], 2048
    $region77: #{bayesian_base_forward.1} parent=1 // pred_fallthru
      _
    // Predicated region
    $region78: #{bayesian_base_forward.1} parent=1 // pred_check
      _
    $region79: #{bayesian_base_forward.1} parent=1 // pred_check_branch
      %148 = sbr.rel (0) target = $region81
    $region80: #{bayesian_base_forward.1} parent=1 // pred_region
      %149 = dma.done [#allocation12], 2048
    $region81: #{bayesian_base_forward.1} parent=1 // pred_fallthru
      _
    // Predicated region
    $region82: #{bayesian_base_forward.1} parent=1 // pred_check
      _
    $region83: #{bayesian_base_forward.1} parent=1 // pred_check_branch
      %151 = sbr.rel (0) target = $region85
    $region84: #{bayesian_base_forward.1} parent=1 // pred_region
      %152 = dma.done [#allocation15], 2048
    $region85: #{bayesian_base_forward.1} parent=1 // pred_fallthru
      _
    %v153 = vld [vmem:[#allocation2] sm:$0xff]
    %v154 = vld [vmem:[#allocation2 + $0x8] sm:$0xff]
    %v155 = vld [vmem:[#allocation2 + $0x10] sm:$0xff]
    %v156 = vld [vmem:[#allocation2 + $0x18] sm:$0xff]
    %v157 = vld [vmem:[#allocation5] sm:$0xff]
    %v158 = vld [vmem:[#allocation5 + $0x8] sm:$0xff]
    %v159 = vld [vmem:[#allocation5 + $0x10] sm:$0xff]
    %v160 = vld [vmem:[#allocation5 + $0x18] sm:$0xff]
    %v161 = vld [vmem:[#allocation5 + $0x20] sm:$0xff]
    %v162 = vld [vmem:[#allocation5 + $0x28] sm:$0xff]
    %v163 = vld [vmem:[#allocation5 + $0x30] sm:$0xff]
    %v164 = vld [vmem:[#allocation5 + $0x38] sm:$0xff]
    %v165 = vld [vmem:[#allocation5 + $0x40] sm:$0xff]
    %v166 = vld [vmem:[#allocation5 + $0x48] sm:$0xff]
    %v167 = vld [vmem:[#allocation5 + $0x50] sm:$0xff]
    %v168 = vld [vmem:[#allocation5 + $0x58] sm:$0xff]
    %v169 = vld [vmem:[#allocation5 + $0x60] sm:$0xff]
    %v170 = vld [vmem:[#allocation5 + $0x68] sm:$0xff]
    %v171 = vld [vmem:[#allocation5 + $0x70] sm:$0xff]
    %v172 = vld [vmem:[#allocation5 + $0x78] sm:$0xff]
    %v173 = vld [vmem:[#allocation5 + $0x80] sm:$0xff]
    %v174 = vld [vmem:[#allocation5 + $0x88] sm:$0xff]
    %v175 = vld [vmem:[#allocation5 + $0x90] sm:$0xff]
    %v176 = vld [vmem:[#allocation5 + $0x98] sm:$0xff]
    %v177 = vld [vmem:[#allocation5 + $0xa0] sm:$0xff]
    %v178 = vld [vmem:[#allocation5 + $0xa8] sm:$0xff]
    %v179 = vld [vmem:[#allocation5 + $0xb0] sm:$0xff]
    %v180 = vld [vmem:[#allocation5 + $0xb8] sm:$0xff]
    %v181 = vld [vmem:[#allocation5 + $0xc0] sm:$0xff]
    %v182 = vld [vmem:[#allocation5 + $0xc8] sm:$0xff]
    %v183 = vld [vmem:[#allocation5 + $0xd0] sm:$0xff]
    %v184 = vld [vmem:[#allocation5 + $0xd8] sm:$0xff]
    %v185 = vld [vmem:[#allocation5 + $0xe0] sm:$0xff]
    %v186 = vld [vmem:[#allocation5 + $0xe8] sm:$0xff]
    %v187 = vld [vmem:[#allocation5 + $0xf0] sm:$0xff]
    %v188 = vld [vmem:[#allocation5 + $0xf8] sm:$0xff]
    %v189 = vld [vmem:[#allocation5 + $0x100] sm:$0xff]
    %v190 = vld [vmem:[#allocation5 + $0x108] sm:$0xff]
    %v191 = vld [vmem:[#allocation5 + $0x110] sm:$0xff]
    %v192 = vld [vmem:[#allocation5 + $0x118] sm:$0xff]
    %v193 = vld [vmem:[#allocation5 + $0x120] sm:$0xff]
    %v194 = vld [vmem:[#allocation5 + $0x128] sm:$0xff]
    %v195 = vld [vmem:[#allocation5 + $0x130] sm:$0xff]
    %v196 = vld [vmem:[#allocation5 + $0x138] sm:$0xff]
    %v197 = vld [vmem:[#allocation5 + $0x140] sm:$0xff]
    %v198 = vld [vmem:[#allocation5 + $0x148] sm:$0xff]
    %v199 = vld [vmem:[#allocation5 + $0x150] sm:$0xff]
    %v200 = vld [vmem:[#allocation5 + $0x158] sm:$0xff]
    %v201 = vld [vmem:[#allocation5 + $0x160] sm:$0xff]
    %v202 = vld [vmem:[#allocation5 + $0x168] sm:$0xff]
    %v203 = vld [vmem:[#allocation5 + $0x170] sm:$0xff]
    %v204 = vld [vmem:[#allocation5 + $0x178] sm:$0xff]
    %v205 = vld [vmem:[#allocation5 + $0x180] sm:$0xff]
    %v206 = vld [vmem:[#allocation5 + $0x188] sm:$0xff]
    %v207 = vld [vmem:[#allocation5 + $0x190] sm:$0xff]
    %v208 = vld [vmem:[#allocation5 + $0x198] sm:$0xff]
    %v209 = vld [vmem:[#allocation5 + $0x1a0] sm:$0xff]
    %v210 = vld [vmem:[#allocation5 + $0x1a8] sm:$0xff]
    %v211 = vld [vmem:[#allocation5 + $0x1b0] sm:$0xff]
    %v212 = vld [vmem:[#allocation5 + $0x1b8] sm:$0xff]
    %v213 = vld [vmem:[#allocation5 + $0x1c0] sm:$0xff]
    %v214 = vld [vmem:[#allocation5 + $0x1c8] sm:$0xff]
    %v215 = vld [vmem:[#allocation5 + $0x1d0] sm:$0xff]
    %v216 = vld [vmem:[#allocation5 + $0x1d8] sm:$0xff]
    %v217 = vld [vmem:[#allocation5 + $0x1e0] sm:$0xff]
    %v218 = vld [vmem:[#allocation5 + $0x1e8] sm:$0xff]
    %v219 = vld [vmem:[#allocation5 + $0x1f0] sm:$0xff]
    %v220 = vld [vmem:[#allocation5 + $0x1f8] sm:$0xff]
    %v221 = vunpack.c.l.bf16 %v157
    %v222 = vunpack.c.h.bf16 %v157
    %v223 = vunpack.c.l.bf16 %v158
    %v224 = vunpack.c.h.bf16 %v158
    %v225 = vunpack.c.l.bf16 %v159
    %v226 = vunpack.c.h.bf16 %v159
    %v227 = vunpack.c.l.bf16 %v160
    %v228 = vunpack.c.h.bf16 %v160
    %v229 = vunpack.c.l.bf16 %v161
    %v230 = vunpack.c.h.bf16 %v161
    %v231 = vunpack.c.l.bf16 %v162
    %v232 = vunpack.c.h.bf16 %v162
    %v233 = vunpack.c.l.bf16 %v163
    %v234 = vunpack.c.h.bf16 %v163
    %v235 = vunpack.c.l.bf16 %v164
    %v236 = vunpack.c.h.bf16 %v164
    %v237 = vunpack.c.l.bf16 %v165
    %v238 = vunpack.c.h.bf16 %v165
    %v239 = vunpack.c.l.bf16 %v166
    %v240 = vunpack.c.h.bf16 %v166
    %v241 = vunpack.c.l.bf16 %v167
    %v242 = vunpack.c.h.bf16 %v167
    %v243 = vunpack.c.l.bf16 %v168
    %v244 = vunpack.c.h.bf16 %v168
    %v245 = vunpack.c.l.bf16 %v169
    %v246 = vunpack.c.h.bf16 %v169
    %v247 = vunpack.c.l.bf16 %v170
    %v248 = vunpack.c.h.bf16 %v170
    %v249 = vunpack.c.l.bf16 %v171
    %v250 = vunpack.c.h.bf16 %v171
    %v251 = vunpack.c.l.bf16 %v172
    %v252 = vunpack.c.h.bf16 %v172
    %v253 = vunpack.c.l.bf16 %v173
    %v254 = vunpack.c.h.bf16 %v173
    %v255 = vunpack.c.l.bf16 %v174
    %v256 = vunpack.c.h.bf16 %v174
    %v257 = vunpack.c.l.bf16 %v175
    %v258 = vunpack.c.h.bf16 %v175
    %v259 = vunpack.c.l.bf16 %v176
    %v260 = vunpack.c.h.bf16 %v176
    %v261 = vunpack.c.l.bf16 %v177
    %v262 = vunpack.c.h.bf16 %v177
    %v263 = vunpack.c.l.bf16 %v178
    %v264 = vunpack.c.h.bf16 %v178
    %v265 = vunpack.c.l.bf16 %v179
    %v266 = vunpack.c.h.bf16 %v179
    %v267 = vunpack.c.l.bf16 %v180
    %v268 = vunpack.c.h.bf16 %v180
    %v269 = vunpack.c.l.bf16 %v181
    %v270 = vunpack.c.h.bf16 %v181
    %v271 = vunpack.c.l.bf16 %v182
    %v272 = vunpack.c.h.bf16 %v182
    %v273 = vunpack.c.l.bf16 %v183
    %v274 = vunpack.c.h.bf16 %v183
    %v275 = vunpack.c.l.bf16 %v184
    %v276 = vunpack.c.h.bf16 %v184
    %v277 = vunpack.c.l.bf16 %v185
    %v278 = vunpack.c.h.bf16 %v185
    %v279 = vunpack.c.l.bf16 %v186
    %v280 = vunpack.c.h.bf16 %v186
    %v281 = vunpack.c.l.bf16 %v187
    %v282 = vunpack.c.h.bf16 %v187
    %v283 = vunpack.c.l.bf16 %v188
    %v284 = vunpack.c.h.bf16 %v188
    %v285 = vunpack.c.l.bf16 %v189
    %v286 = vunpack.c.h.bf16 %v189
    %v287 = vunpack.c.l.bf16 %v190
    %v288 = vunpack.c.h.bf16 %v190
    %v289 = vunpack.c.l.bf16 %v191
    %v290 = vunpack.c.h.bf16 %v191
    %v291 = vunpack.c.l.bf16 %v192
    %v292 = vunpack.c.h.bf16 %v192
    %v293 = vunpack.c.l.bf16 %v193
    %v294 = vunpack.c.h.bf16 %v193
    %v295 = vunpack.c.l.bf16 %v194
    %v296 = vunpack.c.h.bf16 %v194
    %v297 = vunpack.c.l.bf16 %v195
    %v298 = vunpack.c.h.bf16 %v195
    %v299 = vunpack.c.l.bf16 %v196
    %v300 = vunpack.c.h.bf16 %v196
    %v301 = vunpack.c.l.bf16 %v197
    %v302 = vunpack.c.h.bf16 %v197
    %v303 = vunpack.c.l.bf16 %v198
    %v304 = vunpack.c.h.bf16 %v198
    %v305 = vunpack.c.l.bf16 %v199
    %v306 = vunpack.c.h.bf16 %v199
    %v307 = vunpack.c.l.bf16 %v200
    %v308 = vunpack.c.h.bf16 %v200
    %v309 = vunpack.c.l.bf16 %v201
    %v310 = vunpack.c.h.bf16 %v201
    %v311 = vunpack.c.l.bf16 %v202
    %v312 = vunpack.c.h.bf16 %v202
    %v313 = vunpack.c.l.bf16 %v203
    %v314 = vunpack.c.h.bf16 %v203
    %v315 = vunpack.c.l.bf16 %v204
    %v316 = vunpack.c.h.bf16 %v204
    %v317 = vunpack.c.l.bf16 %v205
    %v318 = vunpack.c.h.bf16 %v205
    %v319 = vunpack.c.l.bf16 %v206
    %v320 = vunpack.c.h.bf16 %v206
    %v321 = vunpack.c.l.bf16 %v207
    %v322 = vunpack.c.h.bf16 %v207
    %v323 = vunpack.c.l.bf16 %v208
    %v324 = vunpack.c.h.bf16 %v208
    %v325 = vunpack.c.l.bf16 %v209
    %v326 = vunpack.c.h.bf16 %v209
    %v327 = vunpack.c.l.bf16 %v210
    %v328 = vunpack.c.h.bf16 %v210
    %v329 = vunpack.c.l.bf16 %v211
    %v330 = vunpack.c.h.bf16 %v211
    %v331 = vunpack.c.l.bf16 %v212
    %v332 = vunpack.c.h.bf16 %v212
    %v333 = vunpack.c.l.bf16 %v213
    %v334 = vunpack.c.h.bf16 %v213
    %v335 = vunpack.c.l.bf16 %v214
    %v336 = vunpack.c.h.bf16 %v214
    %v337 = vunpack.c.l.bf16 %v215
    %v338 = vunpack.c.h.bf16 %v215
    %v339 = vunpack.c.l.bf16 %v216
    %v340 = vunpack.c.h.bf16 %v216
    %v341 = vunpack.c.l.bf16 %v217
    %v342 = vunpack.c.h.bf16 %v217
    %v343 = vunpack.c.l.bf16 %v218
    %v344 = vunpack.c.h.bf16 %v218
    %v345 = vunpack.c.l.bf16 %v219
    %v346 = vunpack.c.h.bf16 %v219
    %v347 = vunpack.c.l.bf16 %v220
    %v348 = vunpack.c.h.bf16 %v220
    %v349 = vld [vmem:[#allocation7] sm:$0xff]
    %v350 = vld [vmem:[#allocation7 + $0x8] sm:$0xff]
    %v351 = vld [vmem:[#allocation7 + $0x10] sm:$0xff]
    %v352 = vld [vmem:[#allocation7 + $0x18] sm:$0xff]
    %v353 = vld [vmem:[#allocation7 + $0x20] sm:$0xff]
    %v354 = vld [vmem:[#allocation7 + $0x28] sm:$0xff]
    %v355 = vld [vmem:[#allocation7 + $0x30] sm:$0xff]
    %v356 = vld [vmem:[#allocation7 + $0x38] sm:$0xff]
    %v357 = vld [vmem:[#allocation7 + $0x40] sm:$0xff]
    %v358 = vld [vmem:[#allocation7 + $0x48] sm:$0xff]
    %v359 = vld [vmem:[#allocation7 + $0x50] sm:$0xff]
    %v360 = vld [vmem:[#allocation7 + $0x58] sm:$0xff]
    %v361 = vld [vmem:[#allocation7 + $0x60] sm:$0xff]
    %v362 = vld [vmem:[#allocation7 + $0x68] sm:$0xff]
    %v363 = vld [vmem:[#allocation7 + $0x70] sm:$0xff]
    %v364 = vld [vmem:[#allocation7 + $0x78] sm:$0xff]
    %v365 = vld [vmem:[#allocation7 + $0x80] sm:$0xff]
    %v366 = vld [vmem:[#allocation7 + $0x88] sm:$0xff]
    %v367 = vld [vmem:[#allocation7 + $0x90] sm:$0xff]
    %v368 = vld [vmem:[#allocation7 + $0x98] sm:$0xff]
    %v369 = vld [vmem:[#allocation7 + $0xa0] sm:$0xff]
    %v370 = vld [vmem:[#allocation7 + $0xa8] sm:$0xff]
    %v371 = vld [vmem:[#allocation7 + $0xb0] sm:$0xff]
    %v372 = vld [vmem:[#allocation7 + $0xb8] sm:$0xff]
    %v373 = vld [vmem:[#allocation7 + $0xc0] sm:$0xff]
    %v374 = vld [vmem:[#allocation7 + $0xc8] sm:$0xff]
    %v375 = vld [vmem:[#allocation7 + $0xd0] sm:$0xff]
    %v376 = vld [vmem:[#allocation7 + $0xd8] sm:$0xff]
    %v377 = vld [vmem:[#allocation7 + $0xe0] sm:$0xff]
    %v378 = vld [vmem:[#allocation7 + $0xe8] sm:$0xff]
    %v379 = vld [vmem:[#allocation7 + $0xf0] sm:$0xff]
    %v380 = vld [vmem:[#allocation7 + $0xf8] sm:$0xff]
    %v381 = vld [vmem:[#allocation7 + $0x100] sm:$0xff]
    %v382 = vld [vmem:[#allocation7 + $0x108] sm:$0xff]
    %v383 = vld [vmem:[#allocation7 + $0x110] sm:$0xff]
    %v384 = vld [vmem:[#allocation7 + $0x118] sm:$0xff]
    %v385 = vld [vmem:[#allocation7 + $0x120] sm:$0xff]
    %v386 = vld [vmem:[#allocation7 + $0x128] sm:$0xff]
    %v387 = vld [vmem:[#allocation7 + $0x130] sm:$0xff]
    %v388 = vld [vmem:[#allocation7 + $0x138] sm:$0xff]
    %v389 = vld [vmem:[#allocation7 + $0x140] sm:$0xff]
    %v390 = vld [vmem:[#allocation7 + $0x148] sm:$0xff]
    %v391 = vld [vmem:[#allocation7 + $0x150] sm:$0xff]
    %v392 = vld [vmem:[#allocation7 + $0x158] sm:$0xff]
    %v393 = vld [vmem:[#allocation7 + $0x160] sm:$0xff]
    %v394 = vld [vmem:[#allocation7 + $0x168] sm:$0xff]
    %v395 = vld [vmem:[#allocation7 + $0x170] sm:$0xff]
    %v396 = vld [vmem:[#allocation7 + $0x178] sm:$0xff]
    %v397 = vld [vmem:[#allocation7 + $0x180] sm:$0xff]
    %v398 = vld [vmem:[#allocation7 + $0x188] sm:$0xff]
    %v399 = vld [vmem:[#allocation7 + $0x190] sm:$0xff]
    %v400 = vld [vmem:[#allocation7 + $0x198] sm:$0xff]
    %v401 = vld [vmem:[#allocation7 + $0x1a0] sm:$0xff]
    %v402 = vld [vmem:[#allocation7 + $0x1a8] sm:$0xff]
    %v403 = vld [vmem:[#allocation7 + $0x1b0] sm:$0xff]
    %v404 = vld [vmem:[#allocation7 + $0x1b8] sm:$0xff]
    %v405 = vld [vmem:[#allocation7 + $0x1c0] sm:$0xff]
    %v406 = vld [vmem:[#allocation7 + $0x1c8] sm:$0xff]
    %v407 = vld [vmem:[#allocation7 + $0x1d0] sm:$0xff]
    %v408 = vld [vmem:[#allocation7 + $0x1d8] sm:$0xff]
    %v409 = vld [vmem:[#allocation7 + $0x1e0] sm:$0xff]
    %v410 = vld [vmem:[#allocation7 + $0x1e8] sm:$0xff]
    %v411 = vld [vmem:[#allocation7 + $0x1f0] sm:$0xff]
    %v412 = vld [vmem:[#allocation7 + $0x1f8] sm:$0xff]
    %v413 = vunpack.c.l.bf16 %v349
    %v414 = vunpack.c.h.bf16 %v349
    %v415 = vunpack.c.l.bf16 %v350
    %v416 = vunpack.c.h.bf16 %v350
    %v417 = vunpack.c.l.bf16 %v351
    %v418 = vunpack.c.h.bf16 %v351
    %v419 = vunpack.c.l.bf16 %v352
    %v420 = vunpack.c.h.bf16 %v352
    %v421 = vunpack.c.l.bf16 %v353
    %v422 = vunpack.c.h.bf16 %v353
    %v423 = vunpack.c.l.bf16 %v354
    %v424 = vunpack.c.h.bf16 %v354
    %v425 = vunpack.c.l.bf16 %v355
    %v426 = vunpack.c.h.bf16 %v355
    %v427 = vunpack.c.l.bf16 %v356
    %v428 = vunpack.c.h.bf16 %v356
    %v429 = vunpack.c.l.bf16 %v357
    %v430 = vunpack.c.h.bf16 %v357
    %v431 = vunpack.c.l.bf16 %v358
    %v432 = vunpack.c.h.bf16 %v358
    %v433 = vunpack.c.l.bf16 %v359
    %v434 = vunpack.c.h.bf16 %v359
    %v435 = vunpack.c.l.bf16 %v360
    %v436 = vunpack.c.h.bf16 %v360
    %v437 = vunpack.c.l.bf16 %v361
    %v438 = vunpack.c.h.bf16 %v361
    %v439 = vunpack.c.l.bf16 %v362
    %v440 = vunpack.c.h.bf16 %v362
    %v441 = vunpack.c.l.bf16 %v363
    %v442 = vunpack.c.h.bf16 %v363
    %v443 = vunpack.c.l.bf16 %v364
    %v444 = vunpack.c.h.bf16 %v364
    %v445 = vunpack.c.l.bf16 %v365
    %v446 = vunpack.c.h.bf16 %v365
    %v447 = vunpack.c.l.bf16 %v366
    %v448 = vunpack.c.h.bf16 %v366
    %v449 = vunpack.c.l.bf16 %v367
    %v450 = vunpack.c.h.bf16 %v367
    %v451 = vunpack.c.l.bf16 %v368
    %v452 = vunpack.c.h.bf16 %v368
    %v453 = vunpack.c.l.bf16 %v369
    %v454 = vunpack.c.h.bf16 %v369
    %v455 = vunpack.c.l.bf16 %v370
    %v456 = vunpack.c.h.bf16 %v370
    %v457 = vunpack.c.l.bf16 %v371
    %v458 = vunpack.c.h.bf16 %v371
    %v459 = vunpack.c.l.bf16 %v372
    %v460 = vunpack.c.h.bf16 %v372
    %v461 = vunpack.c.l.bf16 %v373
    %v462 = vunpack.c.h.bf16 %v373
    %v463 = vunpack.c.l.bf16 %v374
    %v464 = vunpack.c.h.bf16 %v374
    %v465 = vunpack.c.l.bf16 %v375
    %v466 = vunpack.c.h.bf16 %v375
    %v467 = vunpack.c.l.bf16 %v376
    %v468 = vunpack.c.h.bf16 %v376
    %v469 = vunpack.c.l.bf16 %v377
    %v470 = vunpack.c.h.bf16 %v377
    %v471 = vunpack.c.l.bf16 %v378
    %v472 = vunpack.c.h.bf16 %v378
    %v473 = vunpack.c.l.bf16 %v379
    %v474 = vunpack.c.h.bf16 %v379
    %v475 = vunpack.c.l.bf16 %v380
    %v476 = vunpack.c.h.bf16 %v380
    %v477 = vunpack.c.l.bf16 %v381
    %v478 = vunpack.c.h.bf16 %v381
    %v479 = vunpack.c.l.bf16 %v382
    %v480 = vunpack.c.h.bf16 %v382
    %v481 = vunpack.c.l.bf16 %v383
    %v482 = vunpack.c.h.bf16 %v383
    %v483 = vunpack.c.l.bf16 %v384
    %v484 = vunpack.c.h.bf16 %v384
    %v485 = vunpack.c.l.bf16 %v385
    %v486 = vunpack.c.h.bf16 %v385
    %v487 = vunpack.c.l.bf16 %v386
    %v488 = vunpack.c.h.bf16 %v386
    %v489 = vunpack.c.l.bf16 %v387
    %v490 = vunpack.c.h.bf16 %v387
    %v491 = vunpack.c.l.bf16 %v388
    %v492 = vunpack.c.h.bf16 %v388
    %v493 = vunpack.c.l.bf16 %v389
    %v494 = vunpack.c.h.bf16 %v389
    %v495 = vunpack.c.l.bf16 %v390
    %v496 = vunpack.c.h.bf16 %v390
    %v497 = vunpack.c.l.bf16 %v391
    %v498 = vunpack.c.h.bf16 %v391
    %v499 = vunpack.c.l.bf16 %v392
    %v500 = vunpack.c.h.bf16 %v392
    %v501 = vunpack.c.l.bf16 %v393
    %v502 = vunpack.c.h.bf16 %v393
    %v503 = vunpack.c.l.bf16 %v394
    %v504 = vunpack.c.h.bf16 %v394
    %v505 = vunpack.c.l.bf16 %v395
    %v506 = vunpack.c.h.bf16 %v395
    %v507 = vunpack.c.l.bf16 %v396
    %v508 = vunpack.c.h.bf16 %v396
    %v509 = vunpack.c.l.bf16 %v397
    %v510 = vunpack.c.h.bf16 %v397
    %v511 = vunpack.c.l.bf16 %v398
    %v512 = vunpack.c.h.bf16 %v398
    %v513 = vunpack.c.l.bf16 %v399
    %v514 = vunpack.c.h.bf16 %v399
    %v515 = vunpack.c.l.bf16 %v400
    %v516 = vunpack.c.h.bf16 %v400
    %v517 = vunpack.c.l.bf16 %v401
    %v518 = vunpack.c.h.bf16 %v401
    %v519 = vunpack.c.l.bf16 %v402
    %v520 = vunpack.c.h.bf16 %v402
    %v521 = vunpack.c.l.bf16 %v403
    %v522 = vunpack.c.h.bf16 %v403
    %v523 = vunpack.c.l.bf16 %v404
    %v524 = vunpack.c.h.bf16 %v404
    %v525 = vunpack.c.l.bf16 %v405
    %v526 = vunpack.c.h.bf16 %v405
    %v527 = vunpack.c.l.bf16 %v406
    %v528 = vunpack.c.h.bf16 %v406
    %v529 = vunpack.c.l.bf16 %v407
    %v530 = vunpack.c.h.bf16 %v407
    %v531 = vunpack.c.l.bf16 %v408
    %v532 = vunpack.c.h.bf16 %v408
    %v533 = vunpack.c.l.bf16 %v409
    %v534 = vunpack.c.h.bf16 %v409
    %v535 = vunpack.c.l.bf16 %v410
    %v536 = vunpack.c.h.bf16 %v410
    %v537 = vunpack.c.l.bf16 %v411
    %v538 = vunpack.c.h.bf16 %v411
    %v539 = vunpack.c.l.bf16 %v412
    %v540 = vunpack.c.h.bf16 %v412
    %v541 = vmax.f32 %v413, 0.0
    %v542 = vmax.f32 %v414, 0.0
    %v543 = vmax.f32 %v415, 0.0
    %v544 = vmax.f32 %v416, 0.0
    %v545 = vmax.f32 %v417, 0.0
    %v546 = vmax.f32 %v418, 0.0
    %v547 = vmax.f32 %v419, 0.0
    %v548 = vmax.f32 %v420, 0.0
    %v549 = vmax.f32 %v421, 0.0
    %v550 = vmax.f32 %v422, 0.0
    %v551 = vmax.f32 %v423, 0.0
    %v552 = vmax.f32 %v424, 0.0
    %v553 = vmax.f32 %v425, 0.0
    %v554 = vmax.f32 %v426, 0.0
    %v555 = vmax.f32 %v427, 0.0
    %v556 = vmax.f32 %v428, 0.0
    %v557 = vmax.f32 %v429, 0.0
    %v558 = vmax.f32 %v430, 0.0
    %v559 = vmax.f32 %v431, 0.0
    %v560 = vmax.f32 %v432, 0.0
    %v561 = vmax.f32 %v433, 0.0
    %v562 = vmax.f32 %v434, 0.0
    %v563 = vmax.f32 %v435, 0.0
    %v564 = vmax.f32 %v436, 0.0
    %v565 = vmax.f32 %v437, 0.0
    %v566 = vmax.f32 %v438, 0.0
    %v567 = vmax.f32 %v439, 0.0
    %v568 = vmax.f32 %v440, 0.0
    %v569 = vmax.f32 %v441, 0.0
    %v570 = vmax.f32 %v442, 0.0
    %v571 = vmax.f32 %v443, 0.0
    %v572 = vmax.f32 %v444, 0.0
    %v573 = vmax.f32 %v445, 0.0
    %v574 = vmax.f32 %v446, 0.0
    %v575 = vmax.f32 %v447, 0.0
    %v576 = vmax.f32 %v448, 0.0
    %v577 = vmax.f32 %v449, 0.0
    %v578 = vmax.f32 %v450, 0.0
    %v579 = vmax.f32 %v451, 0.0
    %v580 = vmax.f32 %v452, 0.0
    %v581 = vmax.f32 %v453, 0.0
    %v582 = vmax.f32 %v454, 0.0
    %v583 = vmax.f32 %v455, 0.0
    %v584 = vmax.f32 %v456, 0.0
    %v585 = vmax.f32 %v457, 0.0
    %v586 = vmax.f32 %v458, 0.0
    %v587 = vmax.f32 %v459, 0.0
    %v588 = vmax.f32 %v460, 0.0
    %v589 = vmax.f32 %v461, 0.0
    %v590 = vmax.f32 %v462, 0.0
    %v591 = vmax.f32 %v463, 0.0
    %v592 = vmax.f32 %v464, 0.0
    %v593 = vmax.f32 %v465, 0.0
    %v594 = vmax.f32 %v466, 0.0
    %v595 = vmax.f32 %v467, 0.0
    %v596 = vmax.f32 %v468, 0.0
    %v597 = vmax.f32 %v469, 0.0
    %v598 = vmax.f32 %v470, 0.0
    %v599 = vmax.f32 %v471, 0.0
    %v600 = vmax.f32 %v472, 0.0
    %v601 = vmax.f32 %v473, 0.0
    %v602 = vmax.f32 %v474, 0.0
    %v603 = vmax.f32 %v475, 0.0
    %v604 = vmax.f32 %v476, 0.0
    %v605 = vmax.f32 %v477, 0.0
    %v606 = vmax.f32 %v478, 0.0
    %v607 = vmax.f32 %v479, 0.0
    %v608 = vmax.f32 %v480, 0.0
    %v609 = vmax.f32 %v481, 0.0
    %v610 = vmax.f32 %v482, 0.0
    %v611 = vmax.f32 %v483, 0.0
    %v612 = vmax.f32 %v484, 0.0
    %v613 = vmax.f32 %v485, 0.0
    %v614 = vmax.f32 %v486, 0.0
    %v615 = vmax.f32 %v487, 0.0
    %v616 = vmax.f32 %v488, 0.0
    %v617 = vmax.f32 %v489, 0.0
    %v618 = vmax.f32 %v490, 0.0
    %v619 = vmax.f32 %v491, 0.0
    %v620 = vmax.f32 %v492, 0.0
    %v621 = vmax.f32 %v493, 0.0
    %v622 = vmax.f32 %v494, 0.0
    %v623 = vmax.f32 %v495, 0.0
    %v624 = vmax.f32 %v496, 0.0
    %v625 = vmax.f32 %v497, 0.0
    %v626 = vmax.f32 %v498, 0.0
    %v627 = vmax.f32 %v499, 0.0
    %v628 = vmax.f32 %v500, 0.0
    %v629 = vmax.f32 %v501, 0.0
    %v630 = vmax.f32 %v502, 0.0
    %v631 = vmax.f32 %v503, 0.0
    %v632 = vmax.f32 %v504, 0.0
    %v633 = vmax.f32 %v505, 0.0
    %v634 = vmax.f32 %v506, 0.0
    %v635 = vmax.f32 %v507, 0.0
    %v636 = vmax.f32 %v508, 0.0
    %v637 = vmax.f32 %v509, 0.0
    %v638 = vmax.f32 %v510, 0.0
    %v639 = vmax.f32 %v511, 0.0
    %v640 = vmax.f32 %v512, 0.0
    %v641 = vmax.f32 %v513, 0.0
    %v642 = vmax.f32 %v514, 0.0
    %v643 = vmax.f32 %v515, 0.0
    %v644 = vmax.f32 %v516, 0.0
    %v645 = vmax.f32 %v517, 0.0
    %v646 = vmax.f32 %v518, 0.0
    %v647 = vmax.f32 %v519, 0.0
    %v648 = vmax.f32 %v520, 0.0
    %v649 = vmax.f32 %v521, 0.0
    %v650 = vmax.f32 %v522, 0.0
    %v651 = vmax.f32 %v523, 0.0
    %v652 = vmax.f32 %v524, 0.0
    %v653 = vmax.f32 %v525, 0.0
    %v654 = vmax.f32 %v526, 0.0
    %v655 = vmax.f32 %v527, 0.0
    %v656 = vmax.f32 %v528, 0.0
    %v657 = vmax.f32 %v529, 0.0
    %v658 = vmax.f32 %v530, 0.0
    %v659 = vmax.f32 %v531, 0.0
    %v660 = vmax.f32 %v532, 0.0
    %v661 = vmax.f32 %v533, 0.0
    %v662 = vmax.f32 %v534, 0.0
    %v663 = vmax.f32 %v535, 0.0
    %v664 = vmax.f32 %v536, 0.0
    %v665 = vmax.f32 %v537, 0.0
    %v666 = vmax.f32 %v538, 0.0
    %v667 = vmax.f32 %v539, 0.0
    %v668 = vmax.f32 %v540, 0.0
    %v669 = vand.u32 2147483647, %v413
    %v670 = vand.u32 2147483647, %v414
    %v671 = vand.u32 2147483647, %v415
    %v672 = vand.u32 2147483647, %v416
    %v673 = vand.u32 2147483647, %v417
    %v674 = vand.u32 2147483647, %v418
    %v675 = vand.u32 2147483647, %v419
    %v676 = vand.u32 2147483647, %v420
    %v677 = vand.u32 2147483647, %v421
    %v678 = vand.u32 2147483647, %v422
    %v679 = vand.u32 2147483647, %v423
    %v680 = vand.u32 2147483647, %v424
    %v681 = vand.u32 2147483647, %v425
    %v682 = vand.u32 2147483647, %v426
    %v683 = vand.u32 2147483647, %v427
    %v684 = vand.u32 2147483647, %v428
    %v685 = vand.u32 2147483647, %v429
    %v686 = vand.u32 2147483647, %v430
    %v687 = vand.u32 2147483647, %v431
    %v688 = vand.u32 2147483647, %v432
    %v689 = vand.u32 2147483647, %v433
    %v690 = vand.u32 2147483647, %v434
    %v691 = vand.u32 2147483647, %v435
    %v692 = vand.u32 2147483647, %v436
    %v693 = vand.u32 2147483647, %v437
    %v694 = vand.u32 2147483647, %v438
    %v695 = vand.u32 2147483647, %v439
    %v696 = vand.u32 2147483647, %v440
    %v697 = vand.u32 2147483647, %v441
    %v698 = vand.u32 2147483647, %v442
    %v699 = vand.u32 2147483647, %v443
    %v700 = vand.u32 2147483647, %v444
    %v701 = vand.u32 2147483647, %v445
    %v702 = vand.u32 2147483647, %v446
    %v703 = vand.u32 2147483647, %v447
    %v704 = vand.u32 2147483647, %v448
    %v705 = vand.u32 2147483647, %v449
    %v706 = vand.u32 2147483647, %v450
    %v707 = vand.u32 2147483647, %v451
    %v708 = vand.u32 2147483647, %v452
    %v709 = vand.u32 2147483647, %v453
    %v710 = vand.u32 2147483647, %v454
    %v711 = vand.u32 2147483647, %v455
    %v712 = vand.u32 2147483647, %v456
    %v713 = vand.u32 2147483647, %v457
    %v714 = vand.u32 2147483647, %v458
    %v715 = vand.u32 2147483647, %v459
    %v716 = vand.u32 2147483647, %v460
    %v717 = vand.u32 2147483647, %v461
    %v718 = vand.u32 2147483647, %v462
    %v719 = vand.u32 2147483647, %v463
    %v720 = vand.u32 2147483647, %v464
    %v721 = vand.u32 2147483647, %v465
    %v722 = vand.u32 2147483647, %v466
    %v723 = vand.u32 2147483647, %v467
    %v724 = vand.u32 2147483647, %v468
    %v725 = vand.u32 2147483647, %v469
    %v726 = vand.u32 2147483647, %v470
    %v727 = vand.u32 2147483647, %v471
    %v728 = vand.u32 2147483647, %v472
    %v729 = vand.u32 2147483647, %v473
    %v730 = vand.u32 2147483647, %v474
    %v731 = vand.u32 2147483647, %v475
    %v732 = vand.u32 2147483647, %v476
    %v733 = vand.u32 2147483647, %v477
    %v734 = vand.u32 2147483647, %v478
    %v735 = vand.u32 2147483647, %v479
    %v736 = vand.u32 2147483647, %v480
    %v737 = vand.u32 2147483647, %v481
    %v738 = vand.u32 2147483647, %v482
    %v739 = vand.u32 2147483647, %v483
    %v740 = vand.u32 2147483647, %v484
    %v741 = vand.u32 2147483647, %v485
    %v742 = vand.u32 2147483647, %v486
    %v743 = vand.u32 2147483647, %v487
    %v744 = vand.u32 2147483647, %v488
    %v745 = vand.u32 2147483647, %v489
    %v746 = vand.u32 2147483647, %v490
    %v747 = vand.u32 2147483647, %v491
    %v748 = vand.u32 2147483647, %v492
    %v749 = vand.u32 2147483647, %v493
    %v750 = vand.u32 2147483647, %v494
    %v751 = vand.u32 2147483647, %v495
    %v752 = vand.u32 2147483647, %v496
    %v753 = vand.u32 2147483647, %v497
    %v754 = vand.u32 2147483647, %v498
    %v755 = vand.u32 2147483647, %v499
    %v756 = vand.u32 2147483647, %v500
    %v757 = vand.u32 2147483647, %v501
    %v758 = vand.u32 2147483647, %v502
    %v759 = vand.u32 2147483647, %v503
    %v760 = vand.u32 2147483647, %v504
    %v761 = vand.u32 2147483647, %v505
    %v762 = vand.u32 2147483647, %v506
    %v763 = vand.u32 2147483647, %v507
    %v764 = vand.u32 2147483647, %v508
    %v765 = vand.u32 2147483647, %v509
    %v766 = vand.u32 2147483647, %v510
    %v767 = vand.u32 2147483647, %v511
    %v768 = vand.u32 2147483647, %v512
    %v769 = vand.u32 2147483647, %v513
    %v770 = vand.u32 2147483647, %v514
    %v771 = vand.u32 2147483647, %v515
    %v772 = vand.u32 2147483647, %v516
    %v773 = vand.u32 2147483647, %v517
    %v774 = vand.u32 2147483647, %v518
    %v775 = vand.u32 2147483647, %v519
    %v776 = vand.u32 2147483647, %v520
    %v777 = vand.u32 2147483647, %v521
    %v778 = vand.u32 2147483647, %v522
    %v779 = vand.u32 2147483647, %v523
    %v780 = vand.u32 2147483647, %v524
    %v781 = vand.u32 2147483647, %v525
    %v782 = vand.u32 2147483647, %v526
    %v783 = vand.u32 2147483647, %v527
    %v784 = vand.u32 2147483647, %v528
    %v785 = vand.u32 2147483647, %v529
    %v786 = vand.u32 2147483647, %v530
    %v787 = vand.u32 2147483647, %v531
    %v788 = vand.u32 2147483647, %v532
    %v789 = vand.u32 2147483647, %v533
    %v790 = vand.u32 2147483647, %v534
    %v791 = vand.u32 2147483647, %v535
    %v792 = vand.u32 2147483647, %v536
    %v793 = vand.u32 2147483647, %v537
    %v794 = vand.u32 2147483647, %v538
    %v795 = vand.u32 2147483647, %v539
    %v796 = vand.u32 2147483647, %v540
    %v797 = vsub.f32 0.0, %v669
    %v798 = vsub.f32 0.0, %v670
    %v799 = vsub.f32 0.0, %v671
    %v800 = vsub.f32 0.0, %v672
    %v801 = vsub.f32 0.0, %v673
    %v802 = vsub.f32 0.0, %v674
    %v803 = vsub.f32 0.0, %v675
    %v804 = vsub.f32 0.0, %v676
    %v805 = vsub.f32 0.0, %v677
    %v806 = vsub.f32 0.0, %v678
    %v807 = vsub.f32 0.0, %v679
    %v808 = vsub.f32 0.0, %v680
    %v809 = vsub.f32 0.0, %v681
    %v810 = vsub.f32 0.0, %v682
    %v811 = vsub.f32 0.0, %v683
    %v812 = vsub.f32 0.0, %v684
    %v813 = vsub.f32 0.0, %v685
    %v814 = vsub.f32 0.0, %v686
    %v815 = vsub.f32 0.0, %v687
    %v816 = vsub.f32 0.0, %v688
    %v817 = vsub.f32 0.0, %v689
    %v818 = vsub.f32 0.0, %v690
    %v819 = vsub.f32 0.0, %v691
    %v820 = vsub.f32 0.0, %v692
    %v821 = vsub.f32 0.0, %v693
    %v822 = vsub.f32 0.0, %v694
    %v823 = vsub.f32 0.0, %v695
    %v824 = vsub.f32 0.0, %v696
    %v825 = vsub.f32 0.0, %v697
    %v826 = vsub.f32 0.0, %v698
    %v827 = vsub.f32 0.0, %v699
    %v828 = vsub.f32 0.0, %v700
    %v829 = vsub.f32 0.0, %v701
    %v830 = vsub.f32 0.0, %v702
    %v831 = vsub.f32 0.0, %v703
    %v832 = vsub.f32 0.0, %v704
    %v833 = vsub.f32 0.0, %v705
    %v834 = vsub.f32 0.0, %v706
    %v835 = vsub.f32 0.0, %v707
    %v836 = vsub.f32 0.0, %v708
    %v837 = vsub.f32 0.0, %v709
    %v838 = vsub.f32 0.0, %v710
    %v839 = vsub.f32 0.0, %v711
    %v840 = vsub.f32 0.0, %v712
    %v841 = vsub.f32 0.0, %v713
    %v842 = vsub.f32 0.0, %v714
    %v843 = vsub.f32 0.0, %v715
    %v844 = vsub.f32 0.0, %v716
    %v845 = vsub.f32 0.0, %v717
    %v846 = vsub.f32 0.0, %v718
    %v847 = vsub.f32 0.0, %v719
    %v848 = vsub.f32 0.0, %v720
    %v849 = vsub.f32 0.0, %v721
    %v850 = vsub.f32 0.0, %v722
    %v851 = vsub.f32 0.0, %v723
    %v852 = vsub.f32 0.0, %v724
    %v853 = vsub.f32 0.0, %v725
    %v854 = vsub.f32 0.0, %v726
    %v855 = vsub.f32 0.0, %v727
    %v856 = vsub.f32 0.0, %v728
    %v857 = vsub.f32 0.0, %v729
    %v858 = vsub.f32 0.0, %v730
    %v859 = vsub.f32 0.0, %v731
    %v860 = vsub.f32 0.0, %v732
    %v861 = vsub.f32 0.0, %v733
    %v862 = vsub.f32 0.0, %v734
    %v863 = vsub.f32 0.0, %v735
    %v864 = vsub.f32 0.0, %v736
    %v865 = vsub.f32 0.0, %v737
    %v866 = vsub.f32 0.0, %v738
    %v867 = vsub.f32 0.0, %v739
    %v868 = vsub.f32 0.0, %v740
    %v869 = vsub.f32 0.0, %v741
    %v870 = vsub.f32 0.0, %v742
    %v871 = vsub.f32 0.0, %v743
    %v872 = vsub.f32 0.0, %v744
    %v873 = vsub.f32 0.0, %v745
    %v874 = vsub.f32 0.0, %v746
    %v875 = vsub.f32 0.0, %v747
    %v876 = vsub.f32 0.0, %v748
    %v877 = vsub.f32 0.0, %v749
    %v878 = vsub.f32 0.0, %v750
    %v879 = vsub.f32 0.0, %v751
    %v880 = vsub.f32 0.0, %v752
    %v881 = vsub.f32 0.0, %v753
    %v882 = vsub.f32 0.0, %v754
    %v883 = vsub.f32 0.0, %v755
    %v884 = vsub.f32 0.0, %v756
    %v885 = vsub.f32 0.0, %v757
    %v886 = vsub.f32 0.0, %v758
    %v887 = vsub.f32 0.0, %v759
    %v888 = vsub.f32 0.0, %v760
    %v889 = vsub.f32 0.0, %v761
    %v890 = vsub.f32 0.0, %v762
    %v891 = vsub.f32 0.0, %v763
    %v892 = vsub.f32 0.0, %v764
    %v893 = vsub.f32 0.0, %v765
    %v894 = vsub.f32 0.0, %v766
    %v895 = vsub.f32 0.0, %v767
    %v896 = vsub.f32 0.0, %v768
    %v897 = vsub.f32 0.0, %v769
    %v898 = vsub.f32 0.0, %v770
    %v899 = vsub.f32 0.0, %v771
    %v900 = vsub.f32 0.0, %v772
    %v901 = vsub.f32 0.0, %v773
    %v902 = vsub.f32 0.0, %v774
    %v903 = vsub.f32 0.0, %v775
    %v904 = vsub.f32 0.0, %v776
    %v905 = vsub.f32 0.0, %v777
    %v906 = vsub.f32 0.0, %v778
    %v907 = vsub.f32 0.0, %v779
    %v908 = vsub.f32 0.0, %v780
    %v909 = vsub.f32 0.0, %v781
    %v910 = vsub.f32 0.0, %v782
    %v911 = vsub.f32 0.0, %v783
    %v912 = vsub.f32 0.0, %v784
    %v913 = vsub.f32 0.0, %v785
    %v914 = vsub.f32 0.0, %v786
    %v915 = vsub.f32 0.0, %v787
    %v916 = vsub.f32 0.0, %v788
    %v917 = vsub.f32 0.0, %v789
    %v918 = vsub.f32 0.0, %v790
    %v919 = vsub.f32 0.0, %v791
    %v920 = vsub.f32 0.0, %v792
    %v921 = vsub.f32 0.0, %v793
    %v922 = vsub.f32 0.0, %v794
    %v923 = vsub.f32 0.0, %v795
    %v924 = vsub.f32 0.0, %v796
    %v925 = vmul.f32 %v797, 1.442695
    %v926 = vpow.pop %v925
    %v927 = vmul.f32 %v798, 1.442695
    %v928 = vpow.pop %v927
    %v929 = vmul.f32 %v799, 1.442695
    %v930 = vpow.pop %v929
    %v931 = vmul.f32 %v800, 1.442695
    %v932 = vpow.pop %v931
    %v933 = vmul.f32 %v801, 1.442695
    %v934 = vpow.pop %v933
    %v935 = vmul.f32 %v802, 1.442695
    %v936 = vpow.pop %v935
    %v937 = vmul.f32 %v803, 1.442695
    %v938 = vpow.pop %v937
    %v939 = vmul.f32 %v804, 1.442695
    %v940 = vpow.pop %v939
    %v941 = vmul.f32 %v805, 1.442695
    %v942 = vpow.pop %v941
    %v943 = vmul.f32 %v806, 1.442695
    %v944 = vpow.pop %v943
    %v945 = vmul.f32 %v807, 1.442695
    %v946 = vpow.pop %v945
    %v947 = vmul.f32 %v808, 1.442695
    %v948 = vpow.pop %v947
    %v949 = vmul.f32 %v809, 1.442695
    %v950 = vpow.pop %v949
    %v951 = vmul.f32 %v810, 1.442695
    %v952 = vpow.pop %v951
    %v953 = vmul.f32 %v811, 1.442695
    %v954 = vpow.pop %v953
    %v955 = vmul.f32 %v812, 1.442695
    %v956 = vpow.pop %v955
    %v957 = vmul.f32 %v813, 1.442695
    %v958 = vpow.pop %v957
    %v959 = vmul.f32 %v814, 1.442695
    %v960 = vpow.pop %v959
    %v961 = vmul.f32 %v815, 1.442695
    %v962 = vpow.pop %v961
    %v963 = vmul.f32 %v816, 1.442695
    %v964 = vpow.pop %v963
    %v965 = vmul.f32 %v817, 1.442695
    %v966 = vpow.pop %v965
    %v967 = vmul.f32 %v818, 1.442695
    %v968 = vpow.pop %v967
    %v969 = vmul.f32 %v819, 1.442695
    %v970 = vpow.pop %v969
    %v971 = vmul.f32 %v820, 1.442695
    %v972 = vpow.pop %v971
    %v973 = vmul.f32 %v821, 1.442695
    %v974 = vpow.pop %v973
    %v975 = vmul.f32 %v822, 1.442695
    %v976 = vpow.pop %v975
    %v977 = vmul.f32 %v823, 1.442695
    %v978 = vpow.pop %v977
    %v979 = vmul.f32 %v824, 1.442695
    %v980 = vpow.pop %v979
    %v981 = vmul.f32 %v825, 1.442695
    %v982 = vpow.pop %v981
    %v983 = vmul.f32 %v826, 1.442695
    %v984 = vpow.pop %v983
    %v985 = vmul.f32 %v827, 1.442695
    %v986 = vpow.pop %v985
    %v987 = vmul.f32 %v828, 1.442695
    %v988 = vpow.pop %v987
    %v989 = vmul.f32 %v829, 1.442695
    %v990 = vpow.pop %v989
    %v991 = vmul.f32 %v830, 1.442695
    %v992 = vpow.pop %v991
    %v993 = vmul.f32 %v831, 1.442695
    %v994 = vpow.pop %v993
    %v995 = vmul.f32 %v832, 1.442695
    %v996 = vpow.pop %v995
    %v997 = vmul.f32 %v833, 1.442695
    %v998 = vpow.pop %v997
    %v999 = vmul.f32 %v834, 1.442695
    %v1000 = vpow.pop %v999
    %v1001 = vmul.f32 %v835, 1.442695
    %v1002 = vpow.pop %v1001
    %v1003 = vmul.f32 %v836, 1.442695
    %v1004 = vpow.pop %v1003
    %v1005 = vmul.f32 %v837, 1.442695
    %v1006 = vpow.pop %v1005
    %v1007 = vmul.f32 %v838, 1.442695
    %v1008 = vpow.pop %v1007
    %v1009 = vmul.f32 %v839, 1.442695
    %v1010 = vpow.pop %v1009
    %v1011 = vmul.f32 %v840, 1.442695
    %v1012 = vpow.pop %v1011
    %v1013 = vmul.f32 %v841, 1.442695
    %v1014 = vpow.pop %v1013
    %v1015 = vmul.f32 %v842, 1.442695
    %v1016 = vpow.pop %v1015
    %v1017 = vmul.f32 %v843, 1.442695
    %v1018 = vpow.pop %v1017
    %v1019 = vmul.f32 %v844, 1.442695
    %v1020 = vpow.pop %v1019
    %v1021 = vmul.f32 %v845, 1.442695
    %v1022 = vpow.pop %v1021
    %v1023 = vmul.f32 %v846, 1.442695
    %v1024 = vpow.pop %v1023
    %v1025 = vmul.f32 %v847, 1.442695
    %v1026 = vpow.pop %v1025
    %v1027 = vmul.f32 %v848, 1.442695
    %v1028 = vpow.pop %v1027
    %v1029 = vmul.f32 %v849, 1.442695
    %v1030 = vpow.pop %v1029
    %v1031 = vmul.f32 %v850, 1.442695
    %v1032 = vpow.pop %v1031
    %v1033 = vmul.f32 %v851, 1.442695
    %v1034 = vpow.pop %v1033
    %v1035 = vmul.f32 %v852, 1.442695
    %v1036 = vpow.pop %v1035
    %v1037 = vmul.f32 %v853, 1.442695
    %v1038 = vpow.pop %v1037
    %v1039 = vmul.f32 %v854, 1.442695
    %v1040 = vpow.pop %v1039
    %v1041 = vmul.f32 %v855, 1.442695
    %v1042 = vpow.pop %v1041
    %v1043 = vmul.f32 %v856, 1.442695
    %v1044 = vpow.pop %v1043
    %v1045 = vmul.f32 %v857, 1.442695
    %v1046 = vpow.pop %v1045
    %v1047 = vmul.f32 %v858, 1.442695
    %v1048 = vpow.pop %v1047
    %v1049 = vmul.f32 %v859, 1.442695
    %v1050 = vpow.pop %v1049
    %v1051 = vmul.f32 %v860, 1.442695
    %v1052 = vpow.pop %v1051
    %v1053 = vmul.f32 %v861, 1.442695
    %v1054 = vpow.pop %v1053
    %v1055 = vmul.f32 %v862, 1.442695
    %v1056 = vpow.pop %v1055
    %v1057 = vmul.f32 %v863, 1.442695
    %v1058 = vpow.pop %v1057
    %v1059 = vmul.f32 %v864, 1.442695
    %v1060 = vpow.pop %v1059
    %v1061 = vmul.f32 %v865, 1.442695
    %v1062 = vpow.pop %v1061
    %v1063 = vmul.f32 %v866, 1.442695
    %v1064 = vpow.pop %v1063
    %v1065 = vmul.f32 %v867, 1.442695
    %v1066 = vpow.pop %v1065
    %v1067 = vmul.f32 %v868, 1.442695
    %v1068 = vpow.pop %v1067
    %v1069 = vmul.f32 %v869, 1.442695
    %v1070 = vpow.pop %v1069
    %v1071 = vmul.f32 %v870, 1.442695
    %v1072 = vpow.pop %v1071
    %v1073 = vmul.f32 %v871, 1.442695
    %v1074 = vpow.pop %v1073
    %v1075 = vmul.f32 %v872, 1.442695
    %v1076 = vpow.pop %v1075
    %v1077 = vmul.f32 %v873, 1.442695
    %v1078 = vpow.pop %v1077
    %v1079 = vmul.f32 %v874, 1.442695
    %v1080 = vpow.pop %v1079
    %v1081 = vmul.f32 %v875, 1.442695
    %v1082 = vpow.pop %v1081
    %v1083 = vmul.f32 %v876, 1.442695
    %v1084 = vpow.pop %v1083
    %v1085 = vmul.f32 %v877, 1.442695
    %v1086 = vpow.pop %v1085
    %v1087 = vmul.f32 %v878, 1.442695
    %v1088 = vpow.pop %v1087
    %v1089 = vmul.f32 %v879, 1.442695
    %v1090 = vpow.pop %v1089
    %v1091 = vmul.f32 %v880, 1.442695
    %v1092 = vpow.pop %v1091
    %v1093 = vmul.f32 %v881, 1.442695
    %v1094 = vpow.pop %v1093
    %v1095 = vmul.f32 %v882, 1.442695
    %v1096 = vpow.pop %v1095
    %v1097 = vmul.f32 %v883, 1.442695
    %v1098 = vpow.pop %v1097
    %v1099 = vmul.f32 %v884, 1.442695
    %v1100 = vpow.pop %v1099
    %v1101 = vmul.f32 %v885, 1.442695
    %v1102 = vpow.pop %v1101
    %v1103 = vmul.f32 %v886, 1.442695
    %v1104 = vpow.pop %v1103
    %v1105 = vmul.f32 %v887, 1.442695
    %v1106 = vpow.pop %v1105
    %v1107 = vmul.f32 %v888, 1.442695
    %v1108 = vpow.pop %v1107
    %v1109 = vmul.f32 %v889, 1.442695
    %v1110 = vpow.pop %v1109
    %v1111 = vmul.f32 %v890, 1.442695
    %v1112 = vpow.pop %v1111
    %v1113 = vmul.f32 %v891, 1.442695
    %v1114 = vpow.pop %v1113
    %v1115 = vmul.f32 %v892, 1.442695
    %v1116 = vpow.pop %v1115
    %v1117 = vmul.f32 %v893, 1.442695
    %v1118 = vpow.pop %v1117
    %v1119 = vmul.f32 %v894, 1.442695
    %v1120 = vpow.pop %v1119
    %v1121 = vmul.f32 %v895, 1.442695
    %v1122 = vpow.pop %v1121
    %v1123 = vmul.f32 %v896, 1.442695
    %v1124 = vpow.pop %v1123
    %v1125 = vmul.f32 %v897, 1.442695
    %v1126 = vpow.pop %v1125
    %v1127 = vmul.f32 %v898, 1.442695
    %v1128 = vpow.pop %v1127
    %v1129 = vmul.f32 %v899, 1.442695
    %v1130 = vpow.pop %v1129
    %v1131 = vmul.f32 %v900, 1.442695
    %v1132 = vpow.pop %v1131
    %v1133 = vmul.f32 %v901, 1.442695
    %v1134 = vpow.pop %v1133
    %v1135 = vmul.f32 %v902, 1.442695
    %v1136 = vpow.pop %v1135
    %v1137 = vmul.f32 %v903, 1.442695
    %v1138 = vpow.pop %v1137
    %v1139 = vmul.f32 %v904, 1.442695
    %v1140 = vpow.pop %v1139
    %v1141 = vmul.f32 %v905, 1.442695
    %v1142 = vpow.pop %v1141
    %v1143 = vmul.f32 %v906, 1.442695
    %v1144 = vpow.pop %v1143
    %v1145 = vmul.f32 %v907, 1.442695
    %v1146 = vpow.pop %v1145
    %v1147 = vmul.f32 %v908, 1.442695
    %v1148 = vpow.pop %v1147
    %v1149 = vmul.f32 %v909, 1.442695
    %v1150 = vpow.pop %v1149
    %v1151 = vmul.f32 %v910, 1.442695
    %v1152 = vpow.pop %v1151
    %v1153 = vmul.f32 %v911, 1.442695
    %v1154 = vpow.pop %v1153
    %v1155 = vmul.f32 %v912, 1.442695
    %v1156 = vpow.pop %v1155
    %v1157 = vmul.f32 %v913, 1.442695
    %v1158 = vpow.pop %v1157
    %v1159 = vmul.f32 %v914, 1.442695
    %v1160 = vpow.pop %v1159
    %v1161 = vmul.f32 %v915, 1.442695
    %v1162 = vpow.pop %v1161
    %v1163 = vmul.f32 %v916, 1.442695
    %v1164 = vpow.pop %v1163
    %v1165 = vmul.f32 %v917, 1.442695
    %v1166 = vpow.pop %v1165
    %v1167 = vmul.f32 %v918, 1.442695
    %v1168 = vpow.pop %v1167
    %v1169 = vmul.f32 %v919, 1.442695
    %v1170 = vpow.pop %v1169
    %v1171 = vmul.f32 %v920, 1.442695
    %v1172 = vpow.pop %v1171
    %v1173 = vmul.f32 %v921, 1.442695
    %v1174 = vpow.pop %v1173
    %v1175 = vmul.f32 %v922, 1.442695
    %v1176 = vpow.pop %v1175
    %v1177 = vmul.f32 %v923, 1.442695
    %v1178 = vpow.pop %v1177
    %v1179 = vmul.f32 %v924, 1.442695
    %v1180 = vpow.pop %v1179
    %v1181 = vadd.f32 %v926, 1.0
    %v1182 = vlog2.pop %v1181
    %v1183 = vmul.f32 %v1182, 0.6931472
    %v1184 = vmul.f32 -0.5, %v926
    %v1185 = vadd.f32 %v1184, 1.0
    %v1186 = vmul.f32 %v1185, %v926
    %v1187 = vand.u32 2147483647, %v926
    %vm1188 = vcmp.lt.f32.partialorder %v1187, 0.0004427343
    %v1189 = vsel %vm1188, %v1186, %v1183
    %v1190 = vadd.f32 %v928, 1.0
    %v1191 = vlog2.pop %v1190
    %v1192 = vmul.f32 %v1191, 0.6931472
    %v1193 = vmul.f32 -0.5, %v928
    %v1194 = vadd.f32 %v1193, 1.0
    %v1195 = vmul.f32 %v1194, %v928
    %v1196 = vand.u32 2147483647, %v928
    %vm1197 = vcmp.lt.f32.partialorder %v1196, 0.0004427343
    %v1198 = vsel %vm1197, %v1195, %v1192
    %v1199 = vadd.f32 %v930, 1.0
    %v1200 = vlog2.pop %v1199
    %v1201 = vmul.f32 %v1200, 0.6931472
    %v1202 = vmul.f32 -0.5, %v930
    %v1203 = vadd.f32 %v1202, 1.0
    %v1204 = vmul.f32 %v1203, %v930
    %v1205 = vand.u32 2147483647, %v930
    %vm1206 = vcmp.lt.f32.partialorder %v1205, 0.0004427343
    %v1207 = vsel %vm1206, %v1204, %v1201
    %v1208 = vadd.f32 %v932, 1.0
    %v1209 = vlog2.pop %v1208
    %v1210 = vmul.f32 %v1209, 0.6931472
    %v1211 = vmul.f32 -0.5, %v932
    %v1212 = vadd.f32 %v1211, 1.0
    %v1213 = vmul.f32 %v1212, %v932
    %v1214 = vand.u32 2147483647, %v932
    %vm1215 = vcmp.lt.f32.partialorder %v1214, 0.0004427343
    %v1216 = vsel %vm1215, %v1213, %v1210
    %v1217 = vadd.f32 %v934, 1.0
    %v1218 = vlog2.pop %v1217
    %v1219 = vmul.f32 %v1218, 0.6931472
    %v1220 = vmul.f32 -0.5, %v934
    %v1221 = vadd.f32 %v1220, 1.0
    %v1222 = vmul.f32 %v1221, %v934
    %v1223 = vand.u32 2147483647, %v934
    %vm1224 = vcmp.lt.f32.partialorder %v1223, 0.0004427343
    %v1225 = vsel %vm1224, %v1222, %v1219
    %v1226 = vadd.f32 %v936, 1.0
    %v1227 = vlog2.pop %v1226
    %v1228 = vmul.f32 %v1227, 0.6931472
    %v1229 = vmul.f32 -0.5, %v936
    %v1230 = vadd.f32 %v1229, 1.0
    %v1231 = vmul.f32 %v1230, %v936
    %v1232 = vand.u32 2147483647, %v936
    %vm1233 = vcmp.lt.f32.partialorder %v1232, 0.0004427343
    %v1234 = vsel %vm1233, %v1231, %v1228
    %v1235 = vadd.f32 %v938, 1.0
    %v1236 = vlog2.pop %v1235
    %v1237 = vmul.f32 %v1236, 0.6931472
    %v1238 = vmul.f32 -0.5, %v938
    %v1239 = vadd.f32 %v1238, 1.0
    %v1240 = vmul.f32 %v1239, %v938
    %v1241 = vand.u32 2147483647, %v938
    %vm1242 = vcmp.lt.f32.partialorder %v1241, 0.0004427343
    %v1243 = vsel %vm1242, %v1240, %v1237
    %v1244 = vadd.f32 %v940, 1.0
    %v1245 = vlog2.pop %v1244
    %v1246 = vmul.f32 %v1245, 0.6931472
    %v1247 = vmul.f32 -0.5, %v940
    %v1248 = vadd.f32 %v1247, 1.0
    %v1249 = vmul.f32 %v1248, %v940
    %v1250 = vand.u32 2147483647, %v940
    %vm1251 = vcmp.lt.f32.partialorder %v1250, 0.0004427343
    %v1252 = vsel %vm1251, %v1249, %v1246
    %v1253 = vadd.f32 %v942, 1.0
    %v1254 = vlog2.pop %v1253
    %v1255 = vmul.f32 %v1254, 0.6931472
    %v1256 = vmul.f32 -0.5, %v942
    %v1257 = vadd.f32 %v1256, 1.0
    %v1258 = vmul.f32 %v1257, %v942
    %v1259 = vand.u32 2147483647, %v942
    %vm1260 = vcmp.lt.f32.partialorder %v1259, 0.0004427343
    %v1261 = vsel %vm1260, %v1258, %v1255
    %v1262 = vadd.f32 %v944, 1.0
    %v1263 = vlog2.pop %v1262
    %v1264 = vmul.f32 %v1263, 0.6931472
    %v1265 = vmul.f32 -0.5, %v944
    %v1266 = vadd.f32 %v1265, 1.0
    %v1267 = vmul.f32 %v1266, %v944
    %v1268 = vand.u32 2147483647, %v944
    %vm1269 = vcmp.lt.f32.partialorder %v1268, 0.0004427343
    %v1270 = vsel %vm1269, %v1267, %v1264
    %v1271 = vadd.f32 %v946, 1.0
    %v1272 = vlog2.pop %v1271
    %v1273 = vmul.f32 %v1272, 0.6931472
    %v1274 = vmul.f32 -0.5, %v946
    %v1275 = vadd.f32 %v1274, 1.0
    %v1276 = vmul.f32 %v1275, %v946
    %v1277 = vand.u32 2147483647, %v946
    %vm1278 = vcmp.lt.f32.partialorder %v1277, 0.0004427343
    %v1279 = vsel %vm1278, %v1276, %v1273
    %v1280 = vadd.f32 %v948, 1.0
    %v1281 = vlog2.pop %v1280
    %v1282 = vmul.f32 %v1281, 0.6931472
    %v1283 = vmul.f32 -0.5, %v948
    %v1284 = vadd.f32 %v1283, 1.0
    %v1285 = vmul.f32 %v1284, %v948
    %v1286 = vand.u32 2147483647, %v948
    %vm1287 = vcmp.lt.f32.partialorder %v1286, 0.0004427343
    %v1288 = vsel %vm1287, %v1285, %v1282
    %v1289 = vadd.f32 %v950, 1.0
    %v1290 = vlog2.pop %v1289
    %v1291 = vmul.f32 %v1290, 0.6931472
    %v1292 = vmul.f32 -0.5, %v950
    %v1293 = vadd.f32 %v1292, 1.0
    %v1294 = vmul.f32 %v1293, %v950
    %v1295 = vand.u32 2147483647, %v950
    %vm1296 = vcmp.lt.f32.partialorder %v1295, 0.0004427343
    %v1297 = vsel %vm1296, %v1294, %v1291
    %v1298 = vadd.f32 %v952, 1.0
    %v1299 = vlog2.pop %v1298
    %v1300 = vmul.f32 %v1299, 0.6931472
    %v1301 = vmul.f32 -0.5, %v952
    %v1302 = vadd.f32 %v1301, 1.0
    %v1303 = vmul.f32 %v1302, %v952
    %v1304 = vand.u32 2147483647, %v952
    %vm1305 = vcmp.lt.f32.partialorder %v1304, 0.0004427343
    %v1306 = vsel %vm1305, %v1303, %v1300
    %v1307 = vadd.f32 %v954, 1.0
    %v1308 = vlog2.pop %v1307
    %v1309 = vmul.f32 %v1308, 0.6931472
    %v1310 = vmul.f32 -0.5, %v954
    %v1311 = vadd.f32 %v1310, 1.0
    %v1312 = vmul.f32 %v1311, %v954
    %v1313 = vand.u32 2147483647, %v954
    %vm1314 = vcmp.lt.f32.partialorder %v1313, 0.0004427343
    %v1315 = vsel %vm1314, %v1312, %v1309
    %v1316 = vadd.f32 %v956, 1.0
    %v1317 = vlog2.pop %v1316
    %v1318 = vmul.f32 %v1317, 0.6931472
    %v1319 = vmul.f32 -0.5, %v956
    %v1320 = vadd.f32 %v1319, 1.0
    %v1321 = vmul.f32 %v1320, %v956
    %v1322 = vand.u32 2147483647, %v956
    %vm1323 = vcmp.lt.f32.partialorder %v1322, 0.0004427343
    %v1324 = vsel %vm1323, %v1321, %v1318
    %v1325 = vadd.f32 %v958, 1.0
    %v1326 = vlog2.pop %v1325
    %v1327 = vmul.f32 %v1326, 0.6931472
    %v1328 = vmul.f32 -0.5, %v958
    %v1329 = vadd.f32 %v1328, 1.0
    %v1330 = vmul.f32 %v1329, %v958
    %v1331 = vand.u32 2147483647, %v958
    %vm1332 = vcmp.lt.f32.partialorder %v1331, 0.0004427343
    %v1333 = vsel %vm1332, %v1330, %v1327
    %v1334 = vadd.f32 %v960, 1.0
    %v1335 = vlog2.pop %v1334
    %v1336 = vmul.f32 %v1335, 0.6931472
    %v1337 = vmul.f32 -0.5, %v960
    %v1338 = vadd.f32 %v1337, 1.0
    %v1339 = vmul.f32 %v1338, %v960
    %v1340 = vand.u32 2147483647, %v960
    %vm1341 = vcmp.lt.f32.partialorder %v1340, 0.0004427343
    %v1342 = vsel %vm1341, %v1339, %v1336
    %v1343 = vadd.f32 %v962, 1.0
    %v1344 = vlog2.pop %v1343
    %v1345 = vmul.f32 %v1344, 0.6931472
    %v1346 = vmul.f32 -0.5, %v962
    %v1347 = vadd.f32 %v1346, 1.0
    %v1348 = vmul.f32 %v1347, %v962
    %v1349 = vand.u32 2147483647, %v962
    %vm1350 = vcmp.lt.f32.partialorder %v1349, 0.0004427343
    %v1351 = vsel %vm1350, %v1348, %v1345
    %v1352 = vadd.f32 %v964, 1.0
    %v1353 = vlog2.pop %v1352
    %v1354 = vmul.f32 %v1353, 0.6931472
    %v1355 = vmul.f32 -0.5, %v964
    %v1356 = vadd.f32 %v1355, 1.0
    %v1357 = vmul.f32 %v1356, %v964
    %v1358 = vand.u32 2147483647, %v964
    %vm1359 = vcmp.lt.f32.partialorder %v1358, 0.0004427343
    %v1360 = vsel %vm1359, %v1357, %v1354
    %v1361 = vadd.f32 %v966, 1.0
    %v1362 = vlog2.pop %v1361
    %v1363 = vmul.f32 %v1362, 0.6931472
    %v1364 = vmul.f32 -0.5, %v966
    %v1365 = vadd.f32 %v1364, 1.0
    %v1366 = vmul.f32 %v1365, %v966
    %v1367 = vand.u32 2147483647, %v966
    %vm1368 = vcmp.lt.f32.partialorder %v1367, 0.0004427343
    %v1369 = vsel %vm1368, %v1366, %v1363
    %v1370 = vadd.f32 %v968, 1.0
    %v1371 = vlog2.pop %v1370
    %v1372 = vmul.f32 %v1371, 0.6931472
    %v1373 = vmul.f32 -0.5, %v968
    %v1374 = vadd.f32 %v1373, 1.0
    %v1375 = vmul.f32 %v1374, %v968
    %v1376 = vand.u32 2147483647, %v968
    %vm1377 = vcmp.lt.f32.partialorder %v1376, 0.0004427343
    %v1378 = vsel %vm1377, %v1375, %v1372
    %v1379 = vadd.f32 %v970, 1.0
    %v1380 = vlog2.pop %v1379
    %v1381 = vmul.f32 %v1380, 0.6931472
    %v1382 = vmul.f32 -0.5, %v970
    %v1383 = vadd.f32 %v1382, 1.0
    %v1384 = vmul.f32 %v1383, %v970
    %v1385 = vand.u32 2147483647, %v970
    %vm1386 = vcmp.lt.f32.partialorder %v1385, 0.0004427343
    %v1387 = vsel %vm1386, %v1384, %v1381
    %v1388 = vadd.f32 %v972, 1.0
    %v1389 = vlog2.pop %v1388
    %v1390 = vmul.f32 %v1389, 0.6931472
    %v1391 = vmul.f32 -0.5, %v972
    %v1392 = vadd.f32 %v1391, 1.0
    %v1393 = vmul.f32 %v1392, %v972
    %v1394 = vand.u32 2147483647, %v972
    %vm1395 = vcmp.lt.f32.partialorder %v1394, 0.0004427343
    %v1396 = vsel %vm1395, %v1393, %v1390
    %v1397 = vadd.f32 %v974, 1.0
    %v1398 = vlog2.pop %v1397
    %v1399 = vmul.f32 %v1398, 0.6931472
    %v1400 = vmul.f32 -0.5, %v974
    %v1401 = vadd.f32 %v1400, 1.0
    %v1402 = vmul.f32 %v1401, %v974
    %v1403 = vand.u32 2147483647, %v974
    %vm1404 = vcmp.lt.f32.partialorder %v1403, 0.0004427343
    %v1405 = vsel %vm1404, %v1402, %v1399
    %v1406 = vadd.f32 %v976, 1.0
    %v1407 = vlog2.pop %v1406
    %v1408 = vmul.f32 %v1407, 0.6931472
    %v1409 = vmul.f32 -0.5, %v976
    %v1410 = vadd.f32 %v1409, 1.0
    %v1411 = vmul.f32 %v1410, %v976
    %v1412 = vand.u32 2147483647, %v976
    %vm1413 = vcmp.lt.f32.partialorder %v1412, 0.0004427343
    %v1414 = vsel %vm1413, %v1411, %v1408
    %v1415 = vadd.f32 %v978, 1.0
    %v1416 = vlog2.pop %v1415
    %v1417 = vmul.f32 %v1416, 0.6931472
    %v1418 = vmul.f32 -0.5, %v978
    %v1419 = vadd.f32 %v1418, 1.0
    %v1420 = vmul.f32 %v1419, %v978
    %v1421 = vand.u32 2147483647, %v978
    %vm1422 = vcmp.lt.f32.partialorder %v1421, 0.0004427343
    %v1423 = vsel %vm1422, %v1420, %v1417
    %v1424 = vadd.f32 %v980, 1.0
    %v1425 = vlog2.pop %v1424
    %v1426 = vmul.f32 %v1425, 0.6931472
    %v1427 = vmul.f32 -0.5, %v980
    %v1428 = vadd.f32 %v1427, 1.0
    %v1429 = vmul.f32 %v1428, %v980
    %v1430 = vand.u32 2147483647, %v980
    %vm1431 = vcmp.lt.f32.partialorder %v1430, 0.0004427343
    %v1432 = vsel %vm1431, %v1429, %v1426
    %v1433 = vadd.f32 %v982, 1.0
    %v1434 = vlog2.pop %v1433
    %v1435 = vmul.f32 %v1434, 0.6931472
    %v1436 = vmul.f32 -0.5, %v982
    %v1437 = vadd.f32 %v1436, 1.0
    %v1438 = vmul.f32 %v1437, %v982
    %v1439 = vand.u32 2147483647, %v982
    %vm1440 = vcmp.lt.f32.partialorder %v1439, 0.0004427343
    %v1441 = vsel %vm1440, %v1438, %v1435
    %v1442 = vadd.f32 %v984, 1.0
    %v1443 = vlog2.pop %v1442
    %v1444 = vmul.f32 %v1443, 0.6931472
    %v1445 = vmul.f32 -0.5, %v984
    %v1446 = vadd.f32 %v1445, 1.0
    %v1447 = vmul.f32 %v1446, %v984
    %v1448 = vand.u32 2147483647, %v984
    %vm1449 = vcmp.lt.f32.partialorder %v1448, 0.0004427343
    %v1450 = vsel %vm1449, %v1447, %v1444
    %v1451 = vadd.f32 %v986, 1.0
    %v1452 = vlog2.pop %v1451
    %v1453 = vmul.f32 %v1452, 0.6931472
    %v1454 = vmul.f32 -0.5, %v986
    %v1455 = vadd.f32 %v1454, 1.0
    %v1456 = vmul.f32 %v1455, %v986
    %v1457 = vand.u32 2147483647, %v986
    %vm1458 = vcmp.lt.f32.partialorder %v1457, 0.0004427343
    %v1459 = vsel %vm1458, %v1456, %v1453
    %v1460 = vadd.f32 %v988, 1.0
    %v1461 = vlog2.pop %v1460
    %v1462 = vmul.f32 %v1461, 0.6931472
    %v1463 = vmul.f32 -0.5, %v988
    %v1464 = vadd.f32 %v1463, 1.0
    %v1465 = vmul.f32 %v1464, %v988
    %v1466 = vand.u32 2147483647, %v988
    %vm1467 = vcmp.lt.f32.partialorder %v1466, 0.0004427343
    %v1468 = vsel %vm1467, %v1465, %v1462
    %v1469 = vadd.f32 %v990, 1.0
    %v1470 = vlog2.pop %v1469
    %v1471 = vmul.f32 %v1470, 0.6931472
    %v1472 = vmul.f32 -0.5, %v990
    %v1473 = vadd.f32 %v1472, 1.0
    %v1474 = vmul.f32 %v1473, %v990
    %v1475 = vand.u32 2147483647, %v990
    %vm1476 = vcmp.lt.f32.partialorder %v1475, 0.0004427343
    %v1477 = vsel %vm1476, %v1474, %v1471
    %v1478 = vadd.f32 %v992, 1.0
    %v1479 = vlog2.pop %v1478
    %v1480 = vmul.f32 %v1479, 0.6931472
    %v1481 = vmul.f32 -0.5, %v992
    %v1482 = vadd.f32 %v1481, 1.0
    %v1483 = vmul.f32 %v1482, %v992
    %v1484 = vand.u32 2147483647, %v992
    %vm1485 = vcmp.lt.f32.partialorder %v1484, 0.0004427343
    %v1486 = vsel %vm1485, %v1483, %v1480
    %v1487 = vadd.f32 %v994, 1.0
    %v1488 = vlog2.pop %v1487
    %v1489 = vmul.f32 %v1488, 0.6931472
    %v1490 = vmul.f32 -0.5, %v994
    %v1491 = vadd.f32 %v1490, 1.0
    %v1492 = vmul.f32 %v1491, %v994
    %v1493 = vand.u32 2147483647, %v994
    %vm1494 = vcmp.lt.f32.partialorder %v1493, 0.0004427343
    %v1495 = vsel %vm1494, %v1492, %v1489
    %v1496 = vadd.f32 %v996, 1.0
    %v1497 = vlog2.pop %v1496
    %v1498 = vmul.f32 %v1497, 0.6931472
    %v1499 = vmul.f32 -0.5, %v996
    %v1500 = vadd.f32 %v1499, 1.0
    %v1501 = vmul.f32 %v1500, %v996
    %v1502 = vand.u32 2147483647, %v996
    %vm1503 = vcmp.lt.f32.partialorder %v1502, 0.0004427343
    %v1504 = vsel %vm1503, %v1501, %v1498
    %v1505 = vadd.f32 %v998, 1.0
    %v1506 = vlog2.pop %v1505
    %v1507 = vmul.f32 %v1506, 0.6931472
    %v1508 = vmul.f32 -0.5, %v998
    %v1509 = vadd.f32 %v1508, 1.0
    %v1510 = vmul.f32 %v1509, %v998
    %v1511 = vand.u32 2147483647, %v998
    %vm1512 = vcmp.lt.f32.partialorder %v1511, 0.0004427343
    %v1513 = vsel %vm1512, %v1510, %v1507
    %v1514 = vadd.f32 %v1000, 1.0
    %v1515 = vlog2.pop %v1514
    %v1516 = vmul.f32 %v1515, 0.6931472
    %v1517 = vmul.f32 -0.5, %v1000
    %v1518 = vadd.f32 %v1517, 1.0
    %v1519 = vmul.f32 %v1518, %v1000
    %v1520 = vand.u32 2147483647, %v1000
    %vm1521 = vcmp.lt.f32.partialorder %v1520, 0.0004427343
    %v1522 = vsel %vm1521, %v1519, %v1516
    %v1523 = vadd.f32 %v1002, 1.0
    %v1524 = vlog2.pop %v1523
    %v1525 = vmul.f32 %v1524, 0.6931472
    %v1526 = vmul.f32 -0.5, %v1002
    %v1527 = vadd.f32 %v1526, 1.0
    %v1528 = vmul.f32 %v1527, %v1002
    %v1529 = vand.u32 2147483647, %v1002
    %vm1530 = vcmp.lt.f32.partialorder %v1529, 0.0004427343
    %v1531 = vsel %vm1530, %v1528, %v1525
    %v1532 = vadd.f32 %v1004, 1.0
    %v1533 = vlog2.pop %v1532
    %v1534 = vmul.f32 %v1533, 0.6931472
    %v1535 = vmul.f32 -0.5, %v1004
    %v1536 = vadd.f32 %v1535, 1.0
    %v1537 = vmul.f32 %v1536, %v1004
    %v1538 = vand.u32 2147483647, %v1004
    %vm1539 = vcmp.lt.f32.partialorder %v1538, 0.0004427343
    %v1540 = vsel %vm1539, %v1537, %v1534
    %v1541 = vadd.f32 %v1006, 1.0
    %v1542 = vlog2.pop %v1541
    %v1543 = vmul.f32 %v1542, 0.6931472
    %v1544 = vmul.f32 -0.5, %v1006
    %v1545 = vadd.f32 %v1544, 1.0
    %v1546 = vmul.f32 %v1545, %v1006
    %v1547 = vand.u32 2147483647, %v1006
    %vm1548 = vcmp.lt.f32.partialorder %v1547, 0.0004427343
    %v1549 = vsel %vm1548, %v1546, %v1543
    %v1550 = vadd.f32 %v1008, 1.0
    %v1551 = vlog2.pop %v1550
    %v1552 = vmul.f32 %v1551, 0.6931472
    %v1553 = vmul.f32 -0.5, %v1008
    %v1554 = vadd.f32 %v1553, 1.0
    %v1555 = vmul.f32 %v1554, %v1008
    %v1556 = vand.u32 2147483647, %v1008
    %vm1557 = vcmp.lt.f32.partialorder %v1556, 0.0004427343
    %v1558 = vsel %vm1557, %v1555, %v1552
    %v1559 = vadd.f32 %v1010, 1.0
    %v1560 = vlog2.pop %v1559
    %v1561 = vmul.f32 %v1560, 0.6931472
    %v1562 = vmul.f32 -0.5, %v1010
    %v1563 = vadd.f32 %v1562, 1.0
    %v1564 = vmul.f32 %v1563, %v1010
    %v1565 = vand.u32 2147483647, %v1010
    %vm1566 = vcmp.lt.f32.partialorder %v1565, 0.0004427343
    %v1567 = vsel %vm1566, %v1564, %v1561
    %v1568 = vadd.f32 %v1012, 1.0
    %v1569 = vlog2.pop %v1568
    %v1570 = vmul.f32 %v1569, 0.6931472
    %v1571 = vmul.f32 -0.5, %v1012
    %v1572 = vadd.f32 %v1571, 1.0
    %v1573 = vmul.f32 %v1572, %v1012
    %v1574 = vand.u32 2147483647, %v1012
    %vm1575 = vcmp.lt.f32.partialorder %v1574, 0.0004427343
    %v1576 = vsel %vm1575, %v1573, %v1570
    %v1577 = vadd.f32 %v1014, 1.0
    %v1578 = vlog2.pop %v1577
    %v1579 = vmul.f32 %v1578, 0.6931472
    %v1580 = vmul.f32 -0.5, %v1014
    %v1581 = vadd.f32 %v1580, 1.0
    %v1582 = vmul.f32 %v1581, %v1014
    %v1583 = vand.u32 2147483647, %v1014
    %vm1584 = vcmp.lt.f32.partialorder %v1583, 0.0004427343
    %v1585 = vsel %vm1584, %v1582, %v1579
    %v1586 = vadd.f32 %v1016, 1.0
    %v1587 = vlog2.pop %v1586
    %v1588 = vmul.f32 %v1587, 0.6931472
    %v1589 = vmul.f32 -0.5, %v1016
    %v1590 = vadd.f32 %v1589, 1.0
    %v1591 = vmul.f32 %v1590, %v1016
    %v1592 = vand.u32 2147483647, %v1016
    %vm1593 = vcmp.lt.f32.partialorder %v1592, 0.0004427343
    %v1594 = vsel %vm1593, %v1591, %v1588
    %v1595 = vadd.f32 %v1018, 1.0
    %v1596 = vlog2.pop %v1595
    %v1597 = vmul.f32 %v1596, 0.6931472
    %v1598 = vmul.f32 -0.5, %v1018
    %v1599 = vadd.f32 %v1598, 1.0
    %v1600 = vmul.f32 %v1599, %v1018
    %v1601 = vand.u32 2147483647, %v1018
    %vm1602 = vcmp.lt.f32.partialorder %v1601, 0.0004427343
    %v1603 = vsel %vm1602, %v1600, %v1597
    %v1604 = vadd.f32 %v1020, 1.0
    %v1605 = vlog2.pop %v1604
    %v1606 = vmul.f32 %v1605, 0.6931472
    %v1607 = vmul.f32 -0.5, %v1020
    %v1608 = vadd.f32 %v1607, 1.0
    %v1609 = vmul.f32 %v1608, %v1020
    %v1610 = vand.u32 2147483647, %v1020
    %vm1611 = vcmp.lt.f32.partialorder %v1610, 0.0004427343
    %v1612 = vsel %vm1611, %v1609, %v1606
    %v1613 = vadd.f32 %v1022, 1.0
    %v1614 = vlog2.pop %v1613
    %v1615 = vmul.f32 %v1614, 0.6931472
    %v1616 = vmul.f32 -0.5, %v1022
    %v1617 = vadd.f32 %v1616, 1.0
    %v1618 = vmul.f32 %v1617, %v1022
    %v1619 = vand.u32 2147483647, %v1022
    %vm1620 = vcmp.lt.f32.partialorder %v1619, 0.0004427343
    %v1621 = vsel %vm1620, %v1618, %v1615
    %v1622 = vadd.f32 %v1024, 1.0
    %v1623 = vlog2.pop %v1622
    %v1624 = vmul.f32 %v1623, 0.6931472
    %v1625 = vmul.f32 -0.5, %v1024
    %v1626 = vadd.f32 %v1625, 1.0
    %v1627 = vmul.f32 %v1626, %v1024
    %v1628 = vand.u32 2147483647, %v1024
    %vm1629 = vcmp.lt.f32.partialorder %v1628, 0.0004427343
    %v1630 = vsel %vm1629, %v1627, %v1624
    %v1631 = vadd.f32 %v1026, 1.0
    %v1632 = vlog2.pop %v1631
    %v1633 = vmul.f32 %v1632, 0.6931472
    %v1634 = vmul.f32 -0.5, %v1026
    %v1635 = vadd.f32 %v1634, 1.0
    %v1636 = vmul.f32 %v1635, %v1026
    %v1637 = vand.u32 2147483647, %v1026
    %vm1638 = vcmp.lt.f32.partialorder %v1637, 0.0004427343
    %v1639 = vsel %vm1638, %v1636, %v1633
    %v1640 = vadd.f32 %v1028, 1.0
    %v1641 = vlog2.pop %v1640
    %v1642 = vmul.f32 %v1641, 0.6931472
    %v1643 = vmul.f32 -0.5, %v1028
    %v1644 = vadd.f32 %v1643, 1.0
    %v1645 = vmul.f32 %v1644, %v1028
    %v1646 = vand.u32 2147483647, %v1028
    %vm1647 = vcmp.lt.f32.partialorder %v1646, 0.0004427343
    %v1648 = vsel %vm1647, %v1645, %v1642
    %v1649 = vadd.f32 %v1030, 1.0
    %v1650 = vlog2.pop %v1649
    %v1651 = vmul.f32 %v1650, 0.6931472
    %v1652 = vmul.f32 -0.5, %v1030
    %v1653 = vadd.f32 %v1652, 1.0
    %v1654 = vmul.f32 %v1653, %v1030
    %v1655 = vand.u32 2147483647, %v1030
    %vm1656 = vcmp.lt.f32.partialorder %v1655, 0.0004427343
    %v1657 = vsel %vm1656, %v1654, %v1651
    %v1658 = vadd.f32 %v1032, 1.0
    %v1659 = vlog2.pop %v1658
    %v1660 = vmul.f32 %v1659, 0.6931472
    %v1661 = vmul.f32 -0.5, %v1032
    %v1662 = vadd.f32 %v1661, 1.0
    %v1663 = vmul.f32 %v1662, %v1032
    %v1664 = vand.u32 2147483647, %v1032
    %vm1665 = vcmp.lt.f32.partialorder %v1664, 0.0004427343
    %v1666 = vsel %vm1665, %v1663, %v1660
    %v1667 = vadd.f32 %v1034, 1.0
    %v1668 = vlog2.pop %v1667
    %v1669 = vmul.f32 %v1668, 0.6931472
    %v1670 = vmul.f32 -0.5, %v1034
    %v1671 = vadd.f32 %v1670, 1.0
    %v1672 = vmul.f32 %v1671, %v1034
    %v1673 = vand.u32 2147483647, %v1034
    %vm1674 = vcmp.lt.f32.partialorder %v1673, 0.0004427343
    %v1675 = vsel %vm1674, %v1672, %v1669
    %v1676 = vadd.f32 %v1036, 1.0
    %v1677 = vlog2.pop %v1676
    %v1678 = vmul.f32 %v1677, 0.6931472
    %v1679 = vmul.f32 -0.5, %v1036
    %v1680 = vadd.f32 %v1679, 1.0
    %v1681 = vmul.f32 %v1680, %v1036
    %v1682 = vand.u32 2147483647, %v1036
    %vm1683 = vcmp.lt.f32.partialorder %v1682, 0.0004427343
    %v1684 = vsel %vm1683, %v1681, %v1678
    %v1685 = vadd.f32 %v1038, 1.0
    %v1686 = vlog2.pop %v1685
    %v1687 = vmul.f32 %v1686, 0.6931472
    %v1688 = vmul.f32 -0.5, %v1038
    %v1689 = vadd.f32 %v1688, 1.0
    %v1690 = vmul.f32 %v1689, %v1038
    %v1691 = vand.u32 2147483647, %v1038
    %vm1692 = vcmp.lt.f32.partialorder %v1691, 0.0004427343
    %v1693 = vsel %vm1692, %v1690, %v1687
    %v1694 = vadd.f32 %v1040, 1.0
    %v1695 = vlog2.pop %v1694
    %v1696 = vmul.f32 %v1695, 0.6931472
    %v1697 = vmul.f32 -0.5, %v1040
    %v1698 = vadd.f32 %v1697, 1.0
    %v1699 = vmul.f32 %v1698, %v1040
    %v1700 = vand.u32 2147483647, %v1040
    %vm1701 = vcmp.lt.f32.partialorder %v1700, 0.0004427343
    %v1702 = vsel %vm1701, %v1699, %v1696
    %v1703 = vadd.f32 %v1042, 1.0
    %v1704 = vlog2.pop %v1703
    %v1705 = vmul.f32 %v1704, 0.6931472
    %v1706 = vmul.f32 -0.5, %v1042
    %v1707 = vadd.f32 %v1706, 1.0
    %v1708 = vmul.f32 %v1707, %v1042
    %v1709 = vand.u32 2147483647, %v1042
    %vm1710 = vcmp.lt.f32.partialorder %v1709, 0.0004427343
    %v1711 = vsel %vm1710, %v1708, %v1705
    %v1712 = vadd.f32 %v1044, 1.0
    %v1713 = vlog2.pop %v1712
    %v1714 = vmul.f32 %v1713, 0.6931472
    %v1715 = vmul.f32 -0.5, %v1044
    %v1716 = vadd.f32 %v1715, 1.0
    %v1717 = vmul.f32 %v1716, %v1044
    %v1718 = vand.u32 2147483647, %v1044
    %vm1719 = vcmp.lt.f32.partialorder %v1718, 0.0004427343
    %v1720 = vsel %vm1719, %v1717, %v1714
    %v1721 = vadd.f32 %v1046, 1.0
    %v1722 = vlog2.pop %v1721
    %v1723 = vmul.f32 %v1722, 0.6931472
    %v1724 = vmul.f32 -0.5, %v1046
    %v1725 = vadd.f32 %v1724, 1.0
    %v1726 = vmul.f32 %v1725, %v1046
    %v1727 = vand.u32 2147483647, %v1046
    %vm1728 = vcmp.lt.f32.partialorder %v1727, 0.0004427343
    %v1729 = vsel %vm1728, %v1726, %v1723
    %v1730 = vadd.f32 %v1048, 1.0
    %v1731 = vlog2.pop %v1730
    %v1732 = vmul.f32 %v1731, 0.6931472
    %v1733 = vmul.f32 -0.5, %v1048
    %v1734 = vadd.f32 %v1733, 1.0
    %v1735 = vmul.f32 %v1734, %v1048
    %v1736 = vand.u32 2147483647, %v1048
    %vm1737 = vcmp.lt.f32.partialorder %v1736, 0.0004427343
    %v1738 = vsel %vm1737, %v1735, %v1732
    %v1739 = vadd.f32 %v1050, 1.0
    %v1740 = vlog2.pop %v1739
    %v1741 = vmul.f32 %v1740, 0.6931472
    %v1742 = vmul.f32 -0.5, %v1050
    %v1743 = vadd.f32 %v1742, 1.0
    %v1744 = vmul.f32 %v1743, %v1050
    %v1745 = vand.u32 2147483647, %v1050
    %vm1746 = vcmp.lt.f32.partialorder %v1745, 0.0004427343
    %v1747 = vsel %vm1746, %v1744, %v1741
    %v1748 = vadd.f32 %v1052, 1.0
    %v1749 = vlog2.pop %v1748
    %v1750 = vmul.f32 %v1749, 0.6931472
    %v1751 = vmul.f32 -0.5, %v1052
    %v1752 = vadd.f32 %v1751, 1.0
    %v1753 = vmul.f32 %v1752, %v1052
    %v1754 = vand.u32 2147483647, %v1052
    %vm1755 = vcmp.lt.f32.partialorder %v1754, 0.0004427343
    %v1756 = vsel %vm1755, %v1753, %v1750
    %v1757 = vadd.f32 %v1054, 1.0
    %v1758 = vlog2.pop %v1757
    %v1759 = vmul.f32 %v1758, 0.6931472
    %v1760 = vmul.f32 -0.5, %v1054
    %v1761 = vadd.f32 %v1760, 1.0
    %v1762 = vmul.f32 %v1761, %v1054
    %v1763 = vand.u32 2147483647, %v1054
    %vm1764 = vcmp.lt.f32.partialorder %v1763, 0.0004427343
    %v1765 = vsel %vm1764, %v1762, %v1759
    %v1766 = vadd.f32 %v1056, 1.0
    %v1767 = vlog2.pop %v1766
    %v1768 = vmul.f32 %v1767, 0.6931472
    %v1769 = vmul.f32 -0.5, %v1056
    %v1770 = vadd.f32 %v1769, 1.0
    %v1771 = vmul.f32 %v1770, %v1056
    %v1772 = vand.u32 2147483647, %v1056
    %vm1773 = vcmp.lt.f32.partialorder %v1772, 0.0004427343
    %v1774 = vsel %vm1773, %v1771, %v1768
    %v1775 = vadd.f32 %v1058, 1.0
    %v1776 = vlog2.pop %v1775
    %v1777 = vmul.f32 %v1776, 0.6931472
    %v1778 = vmul.f32 -0.5, %v1058
    %v1779 = vadd.f32 %v1778, 1.0
    %v1780 = vmul.f32 %v1779, %v1058
    %v1781 = vand.u32 2147483647, %v1058
    %vm1782 = vcmp.lt.f32.partialorder %v1781, 0.0004427343
    %v1783 = vsel %vm1782, %v1780, %v1777
    %v1784 = vadd.f32 %v1060, 1.0
    %v1785 = vlog2.pop %v1784
    %v1786 = vmul.f32 %v1785, 0.6931472
    %v1787 = vmul.f32 -0.5, %v1060
    %v1788 = vadd.f32 %v1787, 1.0
    %v1789 = vmul.f32 %v1788, %v1060
    %v1790 = vand.u32 2147483647, %v1060
    %vm1791 = vcmp.lt.f32.partialorder %v1790, 0.0004427343
    %v1792 = vsel %vm1791, %v1789, %v1786
    %v1793 = vadd.f32 %v1062, 1.0
    %v1794 = vlog2.pop %v1793
    %v1795 = vmul.f32 %v1794, 0.6931472
    %v1796 = vmul.f32 -0.5, %v1062
    %v1797 = vadd.f32 %v1796, 1.0
    %v1798 = vmul.f32 %v1797, %v1062
    %v1799 = vand.u32 2147483647, %v1062
    %vm1800 = vcmp.lt.f32.partialorder %v1799, 0.0004427343
    %v1801 = vsel %vm1800, %v1798, %v1795
    %v1802 = vadd.f32 %v1064, 1.0
    %v1803 = vlog2.pop %v1802
    %v1804 = vmul.f32 %v1803, 0.6931472
    %v1805 = vmul.f32 -0.5, %v1064
    %v1806 = vadd.f32 %v1805, 1.0
    %v1807 = vmul.f32 %v1806, %v1064
    %v1808 = vand.u32 2147483647, %v1064
    %vm1809 = vcmp.lt.f32.partialorder %v1808, 0.0004427343
    %v1810 = vsel %vm1809, %v1807, %v1804
    %v1811 = vadd.f32 %v1066, 1.0
    %v1812 = vlog2.pop %v1811
    %v1813 = vmul.f32 %v1812, 0.6931472
    %v1814 = vmul.f32 -0.5, %v1066
    %v1815 = vadd.f32 %v1814, 1.0
    %v1816 = vmul.f32 %v1815, %v1066
    %v1817 = vand.u32 2147483647, %v1066
    %vm1818 = vcmp.lt.f32.partialorder %v1817, 0.0004427343
    %v1819 = vsel %vm1818, %v1816, %v1813
    %v1820 = vadd.f32 %v1068, 1.0
    %v1821 = vlog2.pop %v1820
    %v1822 = vmul.f32 %v1821, 0.6931472
    %v1823 = vmul.f32 -0.5, %v1068
    %v1824 = vadd.f32 %v1823, 1.0
    %v1825 = vmul.f32 %v1824, %v1068
    %v1826 = vand.u32 2147483647, %v1068
    %vm1827 = vcmp.lt.f32.partialorder %v1826, 0.0004427343
    %v1828 = vsel %vm1827, %v1825, %v1822
    %v1829 = vadd.f32 %v1070, 1.0
    %v1830 = vlog2.pop %v1829
    %v1831 = vmul.f32 %v1830, 0.6931472
    %v1832 = vmul.f32 -0.5, %v1070
    %v1833 = vadd.f32 %v1832, 1.0
    %v1834 = vmul.f32 %v1833, %v1070
    %v1835 = vand.u32 2147483647, %v1070
    %vm1836 = vcmp.lt.f32.partialorder %v1835, 0.0004427343
    %v1837 = vsel %vm1836, %v1834, %v1831
    %v1838 = vadd.f32 %v1072, 1.0
    %v1839 = vlog2.pop %v1838
    %v1840 = vmul.f32 %v1839, 0.6931472
    %v1841 = vmul.f32 -0.5, %v1072
    %v1842 = vadd.f32 %v1841, 1.0
    %v1843 = vmul.f32 %v1842, %v1072
    %v1844 = vand.u32 2147483647, %v1072
    %vm1845 = vcmp.lt.f32.partialorder %v1844, 0.0004427343
    %v1846 = vsel %vm1845, %v1843, %v1840
    %v1847 = vadd.f32 %v1074, 1.0
    %v1848 = vlog2.pop %v1847
    %v1849 = vmul.f32 %v1848, 0.6931472
    %v1850 = vmul.f32 -0.5, %v1074
    %v1851 = vadd.f32 %v1850, 1.0
    %v1852 = vmul.f32 %v1851, %v1074
    %v1853 = vand.u32 2147483647, %v1074
    %vm1854 = vcmp.lt.f32.partialorder %v1853, 0.0004427343
    %v1855 = vsel %vm1854, %v1852, %v1849
    %v1856 = vadd.f32 %v1076, 1.0
    %v1857 = vlog2.pop %v1856
    %v1858 = vmul.f32 %v1857, 0.6931472
    %v1859 = vmul.f32 -0.5, %v1076
    %v1860 = vadd.f32 %v1859, 1.0
    %v1861 = vmul.f32 %v1860, %v1076
    %v1862 = vand.u32 2147483647, %v1076
    %vm1863 = vcmp.lt.f32.partialorder %v1862, 0.0004427343
    %v1864 = vsel %vm1863, %v1861, %v1858
    %v1865 = vadd.f32 %v1078, 1.0
    %v1866 = vlog2.pop %v1865
    %v1867 = vmul.f32 %v1866, 0.6931472
    %v1868 = vmul.f32 -0.5, %v1078
    %v1869 = vadd.f32 %v1868, 1.0
    %v1870 = vmul.f32 %v1869, %v1078
    %v1871 = vand.u32 2147483647, %v1078
    %vm1872 = vcmp.lt.f32.partialorder %v1871, 0.0004427343
    %v1873 = vsel %vm1872, %v1870, %v1867
    %v1874 = vadd.f32 %v1080, 1.0
    %v1875 = vlog2.pop %v1874
    %v1876 = vmul.f32 %v1875, 0.6931472
    %v1877 = vmul.f32 -0.5, %v1080
    %v1878 = vadd.f32 %v1877, 1.0
    %v1879 = vmul.f32 %v1878, %v1080
    %v1880 = vand.u32 2147483647, %v1080
    %vm1881 = vcmp.lt.f32.partialorder %v1880, 0.0004427343
    %v1882 = vsel %vm1881, %v1879, %v1876
    %v1883 = vadd.f32 %v1082, 1.0
    %v1884 = vlog2.pop %v1883
    %v1885 = vmul.f32 %v1884, 0.6931472
    %v1886 = vmul.f32 -0.5, %v1082
    %v1887 = vadd.f32 %v1886, 1.0
    %v1888 = vmul.f32 %v1887, %v1082
    %v1889 = vand.u32 2147483647, %v1082
    %vm1890 = vcmp.lt.f32.partialorder %v1889, 0.0004427343
    %v1891 = vsel %vm1890, %v1888, %v1885
    %v1892 = vadd.f32 %v1084, 1.0
    %v1893 = vlog2.pop %v1892
    %v1894 = vmul.f32 %v1893, 0.6931472
    %v1895 = vmul.f32 -0.5, %v1084
    %v1896 = vadd.f32 %v1895, 1.0
    %v1897 = vmul.f32 %v1896, %v1084
    %v1898 = vand.u32 2147483647, %v1084
    %vm1899 = vcmp.lt.f32.partialorder %v1898, 0.0004427343
    %v1900 = vsel %vm1899, %v1897, %v1894
    %v1901 = vadd.f32 %v1086, 1.0
    %v1902 = vlog2.pop %v1901
    %v1903 = vmul.f32 %v1902, 0.6931472
    %v1904 = vmul.f32 -0.5, %v1086
    %v1905 = vadd.f32 %v1904, 1.0
    %v1906 = vmul.f32 %v1905, %v1086
    %v1907 = vand.u32 2147483647, %v1086
    %vm1908 = vcmp.lt.f32.partialorder %v1907, 0.0004427343
    %v1909 = vsel %vm1908, %v1906, %v1903
    %v1910 = vadd.f32 %v1088, 1.0
    %v1911 = vlog2.pop %v1910
    %v1912 = vmul.f32 %v1911, 0.6931472
    %v1913 = vmul.f32 -0.5, %v1088
    %v1914 = vadd.f32 %v1913, 1.0
    %v1915 = vmul.f32 %v1914, %v1088
    %v1916 = vand.u32 2147483647, %v1088
    %vm1917 = vcmp.lt.f32.partialorder %v1916, 0.0004427343
    %v1918 = vsel %vm1917, %v1915, %v1912
    %v1919 = vadd.f32 %v1090, 1.0
    %v1920 = vlog2.pop %v1919
    %v1921 = vmul.f32 %v1920, 0.6931472
    %v1922 = vmul.f32 -0.5, %v1090
    %v1923 = vadd.f32 %v1922, 1.0
    %v1924 = vmul.f32 %v1923, %v1090
    %v1925 = vand.u32 2147483647, %v1090
    %vm1926 = vcmp.lt.f32.partialorder %v1925, 0.0004427343
    %v1927 = vsel %vm1926, %v1924, %v1921
    %v1928 = vadd.f32 %v1092, 1.0
    %v1929 = vlog2.pop %v1928
    %v1930 = vmul.f32 %v1929, 0.6931472
    %v1931 = vmul.f32 -0.5, %v1092
    %v1932 = vadd.f32 %v1931, 1.0
    %v1933 = vmul.f32 %v1932, %v1092
    %v1934 = vand.u32 2147483647, %v1092
    %vm1935 = vcmp.lt.f32.partialorder %v1934, 0.0004427343
    %v1936 = vsel %vm1935, %v1933, %v1930
    %v1937 = vadd.f32 %v1094, 1.0
    %v1938 = vlog2.pop %v1937
    %v1939 = vmul.f32 %v1938, 0.6931472
    %v1940 = vmul.f32 -0.5, %v1094
    %v1941 = vadd.f32 %v1940, 1.0
    %v1942 = vmul.f32 %v1941, %v1094
    %v1943 = vand.u32 2147483647, %v1094
    %vm1944 = vcmp.lt.f32.partialorder %v1943, 0.0004427343
    %v1945 = vsel %vm1944, %v1942, %v1939
    %v1946 = vadd.f32 %v1096, 1.0
    %v1947 = vlog2.pop %v1946
    %v1948 = vmul.f32 %v1947, 0.6931472
    %v1949 = vmul.f32 -0.5, %v1096
    %v1950 = vadd.f32 %v1949, 1.0
    %v1951 = vmul.f32 %v1950, %v1096
    %v1952 = vand.u32 2147483647, %v1096
    %vm1953 = vcmp.lt.f32.partialorder %v1952, 0.0004427343
    %v1954 = vsel %vm1953, %v1951, %v1948
    %v1955 = vadd.f32 %v1098, 1.0
    %v1956 = vlog2.pop %v1955
    %v1957 = vmul.f32 %v1956, 0.6931472
    %v1958 = vmul.f32 -0.5, %v1098
    %v1959 = vadd.f32 %v1958, 1.0
    %v1960 = vmul.f32 %v1959, %v1098
    %v1961 = vand.u32 2147483647, %v1098
    %vm1962 = vcmp.lt.f32.partialorder %v1961, 0.0004427343
    %v1963 = vsel %vm1962, %v1960, %v1957
    %v1964 = vadd.f32 %v1100, 1.0
    %v1965 = vlog2.pop %v1964
    %v1966 = vmul.f32 %v1965, 0.6931472
    %v1967 = vmul.f32 -0.5, %v1100
    %v1968 = vadd.f32 %v1967, 1.0
    %v1969 = vmul.f32 %v1968, %v1100
    %v1970 = vand.u32 2147483647, %v1100
    %vm1971 = vcmp.lt.f32.partialorder %v1970, 0.0004427343
    %v1972 = vsel %vm1971, %v1969, %v1966
    %v1973 = vadd.f32 %v1102, 1.0
    %v1974 = vlog2.pop %v1973
    %v1975 = vmul.f32 %v1974, 0.6931472
    %v1976 = vmul.f32 -0.5, %v1102
    %v1977 = vadd.f32 %v1976, 1.0
    %v1978 = vmul.f32 %v1977, %v1102
    %v1979 = vand.u32 2147483647, %v1102
    %vm1980 = vcmp.lt.f32.partialorder %v1979, 0.0004427343
    %v1981 = vsel %vm1980, %v1978, %v1975
    %v1982 = vadd.f32 %v1104, 1.0
    %v1983 = vlog2.pop %v1982
    %v1984 = vmul.f32 %v1983, 0.6931472
    %v1985 = vmul.f32 -0.5, %v1104
    %v1986 = vadd.f32 %v1985, 1.0
    %v1987 = vmul.f32 %v1986, %v1104
    %v1988 = vand.u32 2147483647, %v1104
    %vm1989 = vcmp.lt.f32.partialorder %v1988, 0.0004427343
    %v1990 = vsel %vm1989, %v1987, %v1984
    %v1991 = vadd.f32 %v1106, 1.0
    %v1992 = vlog2.pop %v1991
    %v1993 = vmul.f32 %v1992, 0.6931472
    %v1994 = vmul.f32 -0.5, %v1106
    %v1995 = vadd.f32 %v1994, 1.0
    %v1996 = vmul.f32 %v1995, %v1106
    %v1997 = vand.u32 2147483647, %v1106
    %vm1998 = vcmp.lt.f32.partialorder %v1997, 0.0004427343
    %v1999 = vsel %vm1998, %v1996, %v1993
    %v2000 = vadd.f32 %v1108, 1.0
    %v2001 = vlog2.pop %v2000
    %v2002 = vmul.f32 %v2001, 0.6931472
    %v2003 = vmul.f32 -0.5, %v1108
    %v2004 = vadd.f32 %v2003, 1.0
    %v2005 = vmul.f32 %v2004, %v1108
    %v2006 = vand.u32 2147483647, %v1108
    %vm2007 = vcmp.lt.f32.partialorder %v2006, 0.0004427343
    %v2008 = vsel %vm2007, %v2005, %v2002
    %v2009 = vadd.f32 %v1110, 1.0
    %v2010 = vlog2.pop %v2009
    %v2011 = vmul.f32 %v2010, 0.6931472
    %v2012 = vmul.f32 -0.5, %v1110
    %v2013 = vadd.f32 %v2012, 1.0
    %v2014 = vmul.f32 %v2013, %v1110
    %v2015 = vand.u32 2147483647, %v1110
    %vm2016 = vcmp.lt.f32.partialorder %v2015, 0.0004427343
    %v2017 = vsel %vm2016, %v2014, %v2011
    %v2018 = vadd.f32 %v1112, 1.0
    %v2019 = vlog2.pop %v2018
    %v2020 = vmul.f32 %v2019, 0.6931472
    %v2021 = vmul.f32 -0.5, %v1112
    %v2022 = vadd.f32 %v2021, 1.0
    %v2023 = vmul.f32 %v2022, %v1112
    %v2024 = vand.u32 2147483647, %v1112
    %vm2025 = vcmp.lt.f32.partialorder %v2024, 0.0004427343
    %v2026 = vsel %vm2025, %v2023, %v2020
    %v2027 = vadd.f32 %v1114, 1.0
    %v2028 = vlog2.pop %v2027
    %v2029 = vmul.f32 %v2028, 0.6931472
    %v2030 = vmul.f32 -0.5, %v1114
    %v2031 = vadd.f32 %v2030, 1.0
    %v2032 = vmul.f32 %v2031, %v1114
    %v2033 = vand.u32 2147483647, %v1114
    %vm2034 = vcmp.lt.f32.partialorder %v2033, 0.0004427343
    %v2035 = vsel %vm2034, %v2032, %v2029
    %v2036 = vadd.f32 %v1116, 1.0
    %v2037 = vlog2.pop %v2036
    %v2038 = vmul.f32 %v2037, 0.6931472
    %v2039 = vmul.f32 -0.5, %v1116
    %v2040 = vadd.f32 %v2039, 1.0
    %v2041 = vmul.f32 %v2040, %v1116
    %v2042 = vand.u32 2147483647, %v1116
    %vm2043 = vcmp.lt.f32.partialorder %v2042, 0.0004427343
    %v2044 = vsel %vm2043, %v2041, %v2038
    %v2045 = vadd.f32 %v1118, 1.0
    %v2046 = vlog2.pop %v2045
    %v2047 = vmul.f32 %v2046, 0.6931472
    %v2048 = vmul.f32 -0.5, %v1118
    %v2049 = vadd.f32 %v2048, 1.0
    %v2050 = vmul.f32 %v2049, %v1118
    %v2051 = vand.u32 2147483647, %v1118
    %vm2052 = vcmp.lt.f32.partialorder %v2051, 0.0004427343
    %v2053 = vsel %vm2052, %v2050, %v2047
    %v2054 = vadd.f32 %v1120, 1.0
    %v2055 = vlog2.pop %v2054
    %v2056 = vmul.f32 %v2055, 0.6931472
    %v2057 = vmul.f32 -0.5, %v1120
    %v2058 = vadd.f32 %v2057, 1.0
    %v2059 = vmul.f32 %v2058, %v1120
    %v2060 = vand.u32 2147483647, %v1120
    %vm2061 = vcmp.lt.f32.partialorder %v2060, 0.0004427343
    %v2062 = vsel %vm2061, %v2059, %v2056
    %v2063 = vadd.f32 %v1122, 1.0
    %v2064 = vlog2.pop %v2063
    %v2065 = vmul.f32 %v2064, 0.6931472
    %v2066 = vmul.f32 -0.5, %v1122
    %v2067 = vadd.f32 %v2066, 1.0
    %v2068 = vmul.f32 %v2067, %v1122
    %v2069 = vand.u32 2147483647, %v1122
    %vm2070 = vcmp.lt.f32.partialorder %v2069, 0.0004427343
    %v2071 = vsel %vm2070, %v2068, %v2065
    %v2072 = vadd.f32 %v1124, 1.0
    %v2073 = vlog2.pop %v2072
    %v2074 = vmul.f32 %v2073, 0.6931472
    %v2075 = vmul.f32 -0.5, %v1124
    %v2076 = vadd.f32 %v2075, 1.0
    %v2077 = vmul.f32 %v2076, %v1124
    %v2078 = vand.u32 2147483647, %v1124
    %vm2079 = vcmp.lt.f32.partialorder %v2078, 0.0004427343
    %v2080 = vsel %vm2079, %v2077, %v2074
    %v2081 = vadd.f32 %v1126, 1.0
    %v2082 = vlog2.pop %v2081
    %v2083 = vmul.f32 %v2082, 0.6931472
    %v2084 = vmul.f32 -0.5, %v1126
    %v2085 = vadd.f32 %v2084, 1.0
    %v2086 = vmul.f32 %v2085, %v1126
    %v2087 = vand.u32 2147483647, %v1126
    %vm2088 = vcmp.lt.f32.partialorder %v2087, 0.0004427343
    %v2089 = vsel %vm2088, %v2086, %v2083
    %v2090 = vadd.f32 %v1128, 1.0
    %v2091 = vlog2.pop %v2090
    %v2092 = vmul.f32 %v2091, 0.6931472
    %v2093 = vmul.f32 -0.5, %v1128
    %v2094 = vadd.f32 %v2093, 1.0
    %v2095 = vmul.f32 %v2094, %v1128
    %v2096 = vand.u32 2147483647, %v1128
    %vm2097 = vcmp.lt.f32.partialorder %v2096, 0.0004427343
    %v2098 = vsel %vm2097, %v2095, %v2092
    %v2099 = vadd.f32 %v1130, 1.0
    %v2100 = vlog2.pop %v2099
    %v2101 = vmul.f32 %v2100, 0.6931472
    %v2102 = vmul.f32 -0.5, %v1130
    %v2103 = vadd.f32 %v2102, 1.0
    %v2104 = vmul.f32 %v2103, %v1130
    %v2105 = vand.u32 2147483647, %v1130
    %vm2106 = vcmp.lt.f32.partialorder %v2105, 0.0004427343
    %v2107 = vsel %vm2106, %v2104, %v2101
    %v2108 = vadd.f32 %v1132, 1.0
    %v2109 = vlog2.pop %v2108
    %v2110 = vmul.f32 %v2109, 0.6931472
    %v2111 = vmul.f32 -0.5, %v1132
    %v2112 = vadd.f32 %v2111, 1.0
    %v2113 = vmul.f32 %v2112, %v1132
    %v2114 = vand.u32 2147483647, %v1132
    %vm2115 = vcmp.lt.f32.partialorder %v2114, 0.0004427343
    %v2116 = vsel %vm2115, %v2113, %v2110
    %v2117 = vadd.f32 %v1134, 1.0
    %v2118 = vlog2.pop %v2117
    %v2119 = vmul.f32 %v2118, 0.6931472
    %v2120 = vmul.f32 -0.5, %v1134
    %v2121 = vadd.f32 %v2120, 1.0
    %v2122 = vmul.f32 %v2121, %v1134
    %v2123 = vand.u32 2147483647, %v1134
    %vm2124 = vcmp.lt.f32.partialorder %v2123, 0.0004427343
    %v2125 = vsel %vm2124, %v2122, %v2119
    %v2126 = vadd.f32 %v1136, 1.0
    %v2127 = vlog2.pop %v2126
    %v2128 = vmul.f32 %v2127, 0.6931472
    %v2129 = vmul.f32 -0.5, %v1136
    %v2130 = vadd.f32 %v2129, 1.0
    %v2131 = vmul.f32 %v2130, %v1136
    %v2132 = vand.u32 2147483647, %v1136
    %vm2133 = vcmp.lt.f32.partialorder %v2132, 0.0004427343
    %v2134 = vsel %vm2133, %v2131, %v2128
    %v2135 = vadd.f32 %v1138, 1.0
    %v2136 = vlog2.pop %v2135
    %v2137 = vmul.f32 %v2136, 0.6931472
    %v2138 = vmul.f32 -0.5, %v1138
    %v2139 = vadd.f32 %v2138, 1.0
    %v2140 = vmul.f32 %v2139, %v1138
    %v2141 = vand.u32 2147483647, %v1138
    %vm2142 = vcmp.lt.f32.partialorder %v2141, 0.0004427343
    %v2143 = vsel %vm2142, %v2140, %v2137
    %v2144 = vadd.f32 %v1140, 1.0
    %v2145 = vlog2.pop %v2144
    %v2146 = vmul.f32 %v2145, 0.6931472
    %v2147 = vmul.f32 -0.5, %v1140
    %v2148 = vadd.f32 %v2147, 1.0
    %v2149 = vmul.f32 %v2148, %v1140
    %v2150 = vand.u32 2147483647, %v1140
    %vm2151 = vcmp.lt.f32.partialorder %v2150, 0.0004427343
    %v2152 = vsel %vm2151, %v2149, %v2146
    %v2153 = vadd.f32 %v1142, 1.0
    %v2154 = vlog2.pop %v2153
    %v2155 = vmul.f32 %v2154, 0.6931472
    %v2156 = vmul.f32 -0.5, %v1142
    %v2157 = vadd.f32 %v2156, 1.0
    %v2158 = vmul.f32 %v2157, %v1142
    %v2159 = vand.u32 2147483647, %v1142
    %vm2160 = vcmp.lt.f32.partialorder %v2159, 0.0004427343
    %v2161 = vsel %vm2160, %v2158, %v2155
    %v2162 = vadd.f32 %v1144, 1.0
    %v2163 = vlog2.pop %v2162
    %v2164 = vmul.f32 %v2163, 0.6931472
    %v2165 = vmul.f32 -0.5, %v1144
    %v2166 = vadd.f32 %v2165, 1.0
    %v2167 = vmul.f32 %v2166, %v1144
    %v2168 = vand.u32 2147483647, %v1144
    %vm2169 = vcmp.lt.f32.partialorder %v2168, 0.0004427343
    %v2170 = vsel %vm2169, %v2167, %v2164
    %v2171 = vadd.f32 %v1146, 1.0
    %v2172 = vlog2.pop %v2171
    %v2173 = vmul.f32 %v2172, 0.6931472
    %v2174 = vmul.f32 -0.5, %v1146
    %v2175 = vadd.f32 %v2174, 1.0
    %v2176 = vmul.f32 %v2175, %v1146
    %v2177 = vand.u32 2147483647, %v1146
    %vm2178 = vcmp.lt.f32.partialorder %v2177, 0.0004427343
    %v2179 = vsel %vm2178, %v2176, %v2173
    %v2180 = vadd.f32 %v1148, 1.0
    %v2181 = vlog2.pop %v2180
    %v2182 = vmul.f32 %v2181, 0.6931472
    %v2183 = vmul.f32 -0.5, %v1148
    %v2184 = vadd.f32 %v2183, 1.0
    %v2185 = vmul.f32 %v2184, %v1148
    %v2186 = vand.u32 2147483647, %v1148
    %vm2187 = vcmp.lt.f32.partialorder %v2186, 0.0004427343
    %v2188 = vsel %vm2187, %v2185, %v2182
    %v2189 = vadd.f32 %v1150, 1.0
    %v2190 = vlog2.pop %v2189
    %v2191 = vmul.f32 %v2190, 0.6931472
    %v2192 = vmul.f32 -0.5, %v1150
    %v2193 = vadd.f32 %v2192, 1.0
    %v2194 = vmul.f32 %v2193, %v1150
    %v2195 = vand.u32 2147483647, %v1150
    %vm2196 = vcmp.lt.f32.partialorder %v2195, 0.0004427343
    %v2197 = vsel %vm2196, %v2194, %v2191
    %v2198 = vadd.f32 %v1152, 1.0
    %v2199 = vlog2.pop %v2198
    %v2200 = vmul.f32 %v2199, 0.6931472
    %v2201 = vmul.f32 -0.5, %v1152
    %v2202 = vadd.f32 %v2201, 1.0
    %v2203 = vmul.f32 %v2202, %v1152
    %v2204 = vand.u32 2147483647, %v1152
    %vm2205 = vcmp.lt.f32.partialorder %v2204, 0.0004427343
    %v2206 = vsel %vm2205, %v2203, %v2200
    %v2207 = vadd.f32 %v1154, 1.0
    %v2208 = vlog2.pop %v2207
    %v2209 = vmul.f32 %v2208, 0.6931472
    %v2210 = vmul.f32 -0.5, %v1154
    %v2211 = vadd.f32 %v2210, 1.0
    %v2212 = vmul.f32 %v2211, %v1154
    %v2213 = vand.u32 2147483647, %v1154
    %vm2214 = vcmp.lt.f32.partialorder %v2213, 0.0004427343
    %v2215 = vsel %vm2214, %v2212, %v2209
    %v2216 = vadd.f32 %v1156, 1.0
    %v2217 = vlog2.pop %v2216
    %v2218 = vmul.f32 %v2217, 0.6931472
    %v2219 = vmul.f32 -0.5, %v1156
    %v2220 = vadd.f32 %v2219, 1.0
    %v2221 = vmul.f32 %v2220, %v1156
    %v2222 = vand.u32 2147483647, %v1156
    %vm2223 = vcmp.lt.f32.partialorder %v2222, 0.0004427343
    %v2224 = vsel %vm2223, %v2221, %v2218
    %v2225 = vadd.f32 %v1158, 1.0
    %v2226 = vlog2.pop %v2225
    %v2227 = vmul.f32 %v2226, 0.6931472
    %v2228 = vmul.f32 -0.5, %v1158
    %v2229 = vadd.f32 %v2228, 1.0
    %v2230 = vmul.f32 %v2229, %v1158
    %v2231 = vand.u32 2147483647, %v1158
    %vm2232 = vcmp.lt.f32.partialorder %v2231, 0.0004427343
    %v2233 = vsel %vm2232, %v2230, %v2227
    %v2234 = vadd.f32 %v1160, 1.0
    %v2235 = vlog2.pop %v2234
    %v2236 = vmul.f32 %v2235, 0.6931472
    %v2237 = vmul.f32 -0.5, %v1160
    %v2238 = vadd.f32 %v2237, 1.0
    %v2239 = vmul.f32 %v2238, %v1160
    %v2240 = vand.u32 2147483647, %v1160
    %vm2241 = vcmp.lt.f32.partialorder %v2240, 0.0004427343
    %v2242 = vsel %vm2241, %v2239, %v2236
    %v2243 = vadd.f32 %v1162, 1.0
    %v2244 = vlog2.pop %v2243
    %v2245 = vmul.f32 %v2244, 0.6931472
    %v2246 = vmul.f32 -0.5, %v1162
    %v2247 = vadd.f32 %v2246, 1.0
    %v2248 = vmul.f32 %v2247, %v1162
    %v2249 = vand.u32 2147483647, %v1162
    %vm2250 = vcmp.lt.f32.partialorder %v2249, 0.0004427343
    %v2251 = vsel %vm2250, %v2248, %v2245
    %v2252 = vadd.f32 %v1164, 1.0
    %v2253 = vlog2.pop %v2252
    %v2254 = vmul.f32 %v2253, 0.6931472
    %v2255 = vmul.f32 -0.5, %v1164
    %v2256 = vadd.f32 %v2255, 1.0
    %v2257 = vmul.f32 %v2256, %v1164
    %v2258 = vand.u32 2147483647, %v1164
    %vm2259 = vcmp.lt.f32.partialorder %v2258, 0.0004427343
    %v2260 = vsel %vm2259, %v2257, %v2254
    %v2261 = vadd.f32 %v1166, 1.0
    %v2262 = vlog2.pop %v2261
    %v2263 = vmul.f32 %v2262, 0.6931472
    %v2264 = vmul.f32 -0.5, %v1166
    %v2265 = vadd.f32 %v2264, 1.0
    %v2266 = vmul.f32 %v2265, %v1166
    %v2267 = vand.u32 2147483647, %v1166
    %vm2268 = vcmp.lt.f32.partialorder %v2267, 0.0004427343
    %v2269 = vsel %vm2268, %v2266, %v2263
    %v2270 = vadd.f32 %v1168, 1.0
    %v2271 = vlog2.pop %v2270
    %v2272 = vmul.f32 %v2271, 0.6931472
    %v2273 = vmul.f32 -0.5, %v1168
    %v2274 = vadd.f32 %v2273, 1.0
    %v2275 = vmul.f32 %v2274, %v1168
    %v2276 = vand.u32 2147483647, %v1168
    %vm2277 = vcmp.lt.f32.partialorder %v2276, 0.0004427343
    %v2278 = vsel %vm2277, %v2275, %v2272
    %v2279 = vadd.f32 %v1170, 1.0
    %v2280 = vlog2.pop %v2279
    %v2281 = vmul.f32 %v2280, 0.6931472
    %v2282 = vmul.f32 -0.5, %v1170
    %v2283 = vadd.f32 %v2282, 1.0
    %v2284 = vmul.f32 %v2283, %v1170
    %v2285 = vand.u32 2147483647, %v1170
    %vm2286 = vcmp.lt.f32.partialorder %v2285, 0.0004427343
    %v2287 = vsel %vm2286, %v2284, %v2281
    %v2288 = vadd.f32 %v1172, 1.0
    %v2289 = vlog2.pop %v2288
    %v2290 = vmul.f32 %v2289, 0.6931472
    %v2291 = vmul.f32 -0.5, %v1172
    %v2292 = vadd.f32 %v2291, 1.0
    %v2293 = vmul.f32 %v2292, %v1172
    %v2294 = vand.u32 2147483647, %v1172
    %vm2295 = vcmp.lt.f32.partialorder %v2294, 0.0004427343
    %v2296 = vsel %vm2295, %v2293, %v2290
    %v2297 = vadd.f32 %v1174, 1.0
    %v2298 = vlog2.pop %v2297
    %v2299 = vmul.f32 %v2298, 0.6931472
    %v2300 = vmul.f32 -0.5, %v1174
    %v2301 = vadd.f32 %v2300, 1.0
    %v2302 = vmul.f32 %v2301, %v1174
    %v2303 = vand.u32 2147483647, %v1174
    %vm2304 = vcmp.lt.f32.partialorder %v2303, 0.0004427343
    %v2305 = vsel %vm2304, %v2302, %v2299
    %v2306 = vadd.f32 %v1176, 1.0
    %v2307 = vlog2.pop %v2306
    %v2308 = vmul.f32 %v2307, 0.6931472
    %v2309 = vmul.f32 -0.5, %v1176
    %v2310 = vadd.f32 %v2309, 1.0
    %v2311 = vmul.f32 %v2310, %v1176
    %v2312 = vand.u32 2147483647, %v1176
    %vm2313 = vcmp.lt.f32.partialorder %v2312, 0.0004427343
    %v2314 = vsel %vm2313, %v2311, %v2308
    %v2315 = vadd.f32 %v1178, 1.0
    %v2316 = vlog2.pop %v2315
    %v2317 = vmul.f32 %v2316, 0.6931472
    %v2318 = vmul.f32 -0.5, %v1178
    %v2319 = vadd.f32 %v2318, 1.0
    %v2320 = vmul.f32 %v2319, %v1178
    %v2321 = vand.u32 2147483647, %v1178
    %vm2322 = vcmp.lt.f32.partialorder %v2321, 0.0004427343
    %v2323 = vsel %vm2322, %v2320, %v2317
    %v2324 = vadd.f32 %v1180, 1.0
    %v2325 = vlog2.pop %v2324
    %v2326 = vmul.f32 %v2325, 0.6931472
    %v2327 = vmul.f32 -0.5, %v1180
    %v2328 = vadd.f32 %v2327, 1.0
    %v2329 = vmul.f32 %v2328, %v1180
    %v2330 = vand.u32 2147483647, %v1180
    %vm2331 = vcmp.lt.f32.partialorder %v2330, 0.0004427343
    %v2332 = vsel %vm2331, %v2329, %v2326
    %v2333 = vadd.f32 %v541, %v1189
    %v2334 = vadd.f32 %v542, %v1198
    %v2335 = vadd.f32 %v543, %v1207
    %v2336 = vadd.f32 %v544, %v1216
    %v2337 = vadd.f32 %v545, %v1225
    %v2338 = vadd.f32 %v546, %v1234
    %v2339 = vadd.f32 %v547, %v1243
    %v2340 = vadd.f32 %v548, %v1252
    %v2341 = vadd.f32 %v549, %v1261
    %v2342 = vadd.f32 %v550, %v1270
    %v2343 = vadd.f32 %v551, %v1279
    %v2344 = vadd.f32 %v552, %v1288
    %v2345 = vadd.f32 %v553, %v1297
    %v2346 = vadd.f32 %v554, %v1306
    %v2347 = vadd.f32 %v555, %v1315
    %v2348 = vadd.f32 %v556, %v1324
    %v2349 = vadd.f32 %v557, %v1333
    %v2350 = vadd.f32 %v558, %v1342
    %v2351 = vadd.f32 %v559, %v1351
    %v2352 = vadd.f32 %v560, %v1360
    %v2353 = vadd.f32 %v561, %v1369
    %v2354 = vadd.f32 %v562, %v1378
    %v2355 = vadd.f32 %v563, %v1387
    %v2356 = vadd.f32 %v564, %v1396
    %v2357 = vadd.f32 %v565, %v1405
    %v2358 = vadd.f32 %v566, %v1414
    %v2359 = vadd.f32 %v567, %v1423
    %v2360 = vadd.f32 %v568, %v1432
    %v2361 = vadd.f32 %v569, %v1441
    %v2362 = vadd.f32 %v570, %v1450
    %v2363 = vadd.f32 %v571, %v1459
    %v2364 = vadd.f32 %v572, %v1468
    %v2365 = vadd.f32 %v573, %v1477
    %v2366 = vadd.f32 %v574, %v1486
    %v2367 = vadd.f32 %v575, %v1495
    %v2368 = vadd.f32 %v576, %v1504
    %v2369 = vadd.f32 %v577, %v1513
    %v2370 = vadd.f32 %v578, %v1522
    %v2371 = vadd.f32 %v579, %v1531
    %v2372 = vadd.f32 %v580, %v1540
    %v2373 = vadd.f32 %v581, %v1549
    %v2374 = vadd.f32 %v582, %v1558
    %v2375 = vadd.f32 %v583, %v1567
    %v2376 = vadd.f32 %v584, %v1576
    %v2377 = vadd.f32 %v585, %v1585
    %v2378 = vadd.f32 %v586, %v1594
    %v2379 = vadd.f32 %v587, %v1603
    %v2380 = vadd.f32 %v588, %v1612
    %v2381 = vadd.f32 %v589, %v1621
    %v2382 = vadd.f32 %v590, %v1630
    %v2383 = vadd.f32 %v591, %v1639
    %v2384 = vadd.f32 %v592, %v1648
    %v2385 = vadd.f32 %v593, %v1657
    %v2386 = vadd.f32 %v594, %v1666
    %v2387 = vadd.f32 %v595, %v1675
    %v2388 = vadd.f32 %v596, %v1684
    %v2389 = vadd.f32 %v597, %v1693
    %v2390 = vadd.f32 %v598, %v1702
    %v2391 = vadd.f32 %v599, %v1711
    %v2392 = vadd.f32 %v600, %v1720
    %v2393 = vadd.f32 %v601, %v1729
    %v2394 = vadd.f32 %v602, %v1738
    %v2395 = vadd.f32 %v603, %v1747
    %v2396 = vadd.f32 %v604, %v1756
    %v2397 = vadd.f32 %v605, %v1765
    %v2398 = vadd.f32 %v606, %v1774
    %v2399 = vadd.f32 %v607, %v1783
    %v2400 = vadd.f32 %v608, %v1792
    %v2401 = vadd.f32 %v609, %v1801
    %v2402 = vadd.f32 %v610, %v1810
    %v2403 = vadd.f32 %v611, %v1819
    %v2404 = vadd.f32 %v612, %v1828
    %v2405 = vadd.f32 %v613, %v1837
    %v2406 = vadd.f32 %v614, %v1846
    %v2407 = vadd.f32 %v615, %v1855
    %v2408 = vadd.f32 %v616, %v1864
    %v2409 = vadd.f32 %v617, %v1873
    %v2410 = vadd.f32 %v618, %v1882
    %v2411 = vadd.f32 %v619, %v1891
    %v2412 = vadd.f32 %v620, %v1900
    %v2413 = vadd.f32 %v621, %v1909
    %v2414 = vadd.f32 %v622, %v1918
    %v2415 = vadd.f32 %v623, %v1927
    %v2416 = vadd.f32 %v624, %v1936
    %v2417 = vadd.f32 %v625, %v1945
    %v2418 = vadd.f32 %v626, %v1954
    %v2419 = vadd.f32 %v627, %v1963
    %v2420 = vadd.f32 %v628, %v1972
    %v2421 = vadd.f32 %v629, %v1981
    %v2422 = vadd.f32 %v630, %v1990
    %v2423 = vadd.f32 %v631, %v1999
    %v2424 = vadd.f32 %v632, %v2008
    %v2425 = vadd.f32 %v633, %v2017
    %v2426 = vadd.f32 %v634, %v2026
    %v2427 = vadd.f32 %v635, %v2035
    %v2428 = vadd.f32 %v636, %v2044
    %v2429 = vadd.f32 %v637, %v2053
    %v2430 = vadd.f32 %v638, %v2062
    %v2431 = vadd.f32 %v639, %v2071
    %v2432 = vadd.f32 %v640, %v2080
    %v2433 = vadd.f32 %v641, %v2089
    %v2434 = vadd.f32 %v642, %v2098
    %v2435 = vadd.f32 %v643, %v2107
    %v2436 = vadd.f32 %v644, %v2116
    %v2437 = vadd.f32 %v645, %v2125
    %v2438 = vadd.f32 %v646, %v2134
    %v2439 = vadd.f32 %v647, %v2143
    %v2440 = vadd.f32 %v648, %v2152
    %v2441 = vadd.f32 %v649, %v2161
    %v2442 = vadd.f32 %v650, %v2170
    %v2443 = vadd.f32 %v651, %v2179
    %v2444 = vadd.f32 %v652, %v2188
    %v2445 = vadd.f32 %v653, %v2197
    %v2446 = vadd.f32 %v654, %v2206
    %v2447 = vadd.f32 %v655, %v2215
    %v2448 = vadd.f32 %v656, %v2224
    %v2449 = vadd.f32 %v657, %v2233
    %v2450 = vadd.f32 %v658, %v2242
    %v2451 = vadd.f32 %v659, %v2251
    %v2452 = vadd.f32 %v660, %v2260
    %v2453 = vadd.f32 %v661, %v2269
    %v2454 = vadd.f32 %v662, %v2278
    %v2455 = vadd.f32 %v663, %v2287
    %v2456 = vadd.f32 %v664, %v2296
    %v2457 = vadd.f32 %v665, %v2305
    %v2458 = vadd.f32 %v666, %v2314
    %v2459 = vadd.f32 %v667, %v2323
    %v2460 = vadd.f32 %v668, %v2332
    %v2461 = vld [vmem:[#allocation8] sm:$0xff]
    %v2462 = vld [vmem:[#allocation8 + $0x8] sm:$0xff]
    %v2463 = vld [vmem:[#allocation8 + $0x10] sm:$0xff]
    %v2464 = vld [vmem:[#allocation8 + $0x18] sm:$0xff]
    %v2465 = vld [vmem:[#allocation8 + $0x20] sm:$0xff]
    %v2466 = vld [vmem:[#allocation8 + $0x28] sm:$0xff]
    %v2467 = vld [vmem:[#allocation8 + $0x30] sm:$0xff]
    %v2468 = vld [vmem:[#allocation8 + $0x38] sm:$0xff]
    %v2469 = vld [vmem:[#allocation8 + $0x40] sm:$0xff]
    %v2470 = vld [vmem:[#allocation8 + $0x48] sm:$0xff]
    %v2471 = vld [vmem:[#allocation8 + $0x50] sm:$0xff]
    %v2472 = vld [vmem:[#allocation8 + $0x58] sm:$0xff]
    %v2473 = vld [vmem:[#allocation8 + $0x60] sm:$0xff]
    %v2474 = vld [vmem:[#allocation8 + $0x68] sm:$0xff]
    %v2475 = vld [vmem:[#allocation8 + $0x70] sm:$0xff]
    %v2476 = vld [vmem:[#allocation8 + $0x78] sm:$0xff]
    %v2477 = vld [vmem:[#allocation8 + $0x80] sm:$0xff]
    %v2478 = vld [vmem:[#allocation8 + $0x88] sm:$0xff]
    %v2479 = vld [vmem:[#allocation8 + $0x90] sm:$0xff]
    %v2480 = vld [vmem:[#allocation8 + $0x98] sm:$0xff]
    %v2481 = vld [vmem:[#allocation8 + $0xa0] sm:$0xff]
    %v2482 = vld [vmem:[#allocation8 + $0xa8] sm:$0xff]
    %v2483 = vld [vmem:[#allocation8 + $0xb0] sm:$0xff]
    %v2484 = vld [vmem:[#allocation8 + $0xb8] sm:$0xff]
    %v2485 = vld [vmem:[#allocation8 + $0xc0] sm:$0xff]
    %v2486 = vld [vmem:[#allocation8 + $0xc8] sm:$0xff]
    %v2487 = vld [vmem:[#allocation8 + $0xd0] sm:$0xff]
    %v2488 = vld [vmem:[#allocation8 + $0xd8] sm:$0xff]
    %v2489 = vld [vmem:[#allocation8 + $0xe0] sm:$0xff]
    %v2490 = vld [vmem:[#allocation8 + $0xe8] sm:$0xff]
    %v2491 = vld [vmem:[#allocation8 + $0xf0] sm:$0xff]
    %v2492 = vld [vmem:[#allocation8 + $0xf8] sm:$0xff]
    %v2493 = vld [vmem:[#allocation8 + $0x100] sm:$0xff]
    %v2494 = vld [vmem:[#allocation8 + $0x108] sm:$0xff]
    %v2495 = vld [vmem:[#allocation8 + $0x110] sm:$0xff]
    %v2496 = vld [vmem:[#allocation8 + $0x118] sm:$0xff]
    %v2497 = vld [vmem:[#allocation8 + $0x120] sm:$0xff]
    %v2498 = vld [vmem:[#allocation8 + $0x128] sm:$0xff]
    %v2499 = vld [vmem:[#allocation8 + $0x130] sm:$0xff]
    %v2500 = vld [vmem:[#allocation8 + $0x138] sm:$0xff]
    %v2501 = vld [vmem:[#allocation8 + $0x140] sm:$0xff]
    %v2502 = vld [vmem:[#allocation8 + $0x148] sm:$0xff]
    %v2503 = vld [vmem:[#allocation8 + $0x150] sm:$0xff]
    %v2504 = vld [vmem:[#allocation8 + $0x158] sm:$0xff]
    %v2505 = vld [vmem:[#allocation8 + $0x160] sm:$0xff]
    %v2506 = vld [vmem:[#allocation8 + $0x168] sm:$0xff]
    %v2507 = vld [vmem:[#allocation8 + $0x170] sm:$0xff]
    %v2508 = vld [vmem:[#allocation8 + $0x178] sm:$0xff]
    %v2509 = vld [vmem:[#allocation8 + $0x180] sm:$0xff]
    %v2510 = vld [vmem:[#allocation8 + $0x188] sm:$0xff]
    %v2511 = vld [vmem:[#allocation8 + $0x190] sm:$0xff]
    %v2512 = vld [vmem:[#allocation8 + $0x198] sm:$0xff]
    %v2513 = vld [vmem:[#allocation8 + $0x1a0] sm:$0xff]
    %v2514 = vld [vmem:[#allocation8 + $0x1a8] sm:$0xff]
    %v2515 = vld [vmem:[#allocation8 + $0x1b0] sm:$0xff]
    %v2516 = vld [vmem:[#allocation8 + $0x1b8] sm:$0xff]
    %v2517 = vld [vmem:[#allocation8 + $0x1c0] sm:$0xff]
    %v2518 = vld [vmem:[#allocation8 + $0x1c8] sm:$0xff]
    %v2519 = vld [vmem:[#allocation8 + $0x1d0] sm:$0xff]
    %v2520 = vld [vmem:[#allocation8 + $0x1d8] sm:$0xff]
    %v2521 = vld [vmem:[#allocation8 + $0x1e0] sm:$0xff]
    %v2522 = vld [vmem:[#allocation8 + $0x1e8] sm:$0xff]
    %v2523 = vld [vmem:[#allocation8 + $0x1f0] sm:$0xff]
    %v2524 = vld [vmem:[#allocation8 + $0x1f8] sm:$0xff]
    %v2525 = vunpack.c.l.bf16 %v2461
    %v2526 = vunpack.c.h.bf16 %v2461
    %v2527 = vunpack.c.l.bf16 %v2462
    %v2528 = vunpack.c.h.bf16 %v2462
    %v2529 = vunpack.c.l.bf16 %v2463
    %v2530 = vunpack.c.h.bf16 %v2463
    %v2531 = vunpack.c.l.bf16 %v2464
    %v2532 = vunpack.c.h.bf16 %v2464
    %v2533 = vunpack.c.l.bf16 %v2465
    %v2534 = vunpack.c.h.bf16 %v2465
    %v2535 = vunpack.c.l.bf16 %v2466
    %v2536 = vunpack.c.h.bf16 %v2466
    %v2537 = vunpack.c.l.bf16 %v2467
    %v2538 = vunpack.c.h.bf16 %v2467
    %v2539 = vunpack.c.l.bf16 %v2468
    %v2540 = vunpack.c.h.bf16 %v2468
    %v2541 = vunpack.c.l.bf16 %v2469
    %v2542 = vunpack.c.h.bf16 %v2469
    %v2543 = vunpack.c.l.bf16 %v2470
    %v2544 = vunpack.c.h.bf16 %v2470
    %v2545 = vunpack.c.l.bf16 %v2471
    %v2546 = vunpack.c.h.bf16 %v2471
    %v2547 = vunpack.c.l.bf16 %v2472
    %v2548 = vunpack.c.h.bf16 %v2472
    %v2549 = vunpack.c.l.bf16 %v2473
    %v2550 = vunpack.c.h.bf16 %v2473
    %v2551 = vunpack.c.l.bf16 %v2474
    %v2552 = vunpack.c.h.bf16 %v2474
    %v2553 = vunpack.c.l.bf16 %v2475
    %v2554 = vunpack.c.h.bf16 %v2475
    %v2555 = vunpack.c.l.bf16 %v2476
    %v2556 = vunpack.c.h.bf16 %v2476
    %v2557 = vunpack.c.l.bf16 %v2477
    %v2558 = vunpack.c.h.bf16 %v2477
    %v2559 = vunpack.c.l.bf16 %v2478
    %v2560 = vunpack.c.h.bf16 %v2478
    %v2561 = vunpack.c.l.bf16 %v2479
    %v2562 = vunpack.c.h.bf16 %v2479
    %v2563 = vunpack.c.l.bf16 %v2480
    %v2564 = vunpack.c.h.bf16 %v2480
    %v2565 = vunpack.c.l.bf16 %v2481
    %v2566 = vunpack.c.h.bf16 %v2481
    %v2567 = vunpack.c.l.bf16 %v2482
    %v2568 = vunpack.c.h.bf16 %v2482
    %v2569 = vunpack.c.l.bf16 %v2483
    %v2570 = vunpack.c.h.bf16 %v2483
    %v2571 = vunpack.c.l.bf16 %v2484
    %v2572 = vunpack.c.h.bf16 %v2484
    %v2573 = vunpack.c.l.bf16 %v2485
    %v2574 = vunpack.c.h.bf16 %v2485
    %v2575 = vunpack.c.l.bf16 %v2486
    %v2576 = vunpack.c.h.bf16 %v2486
    %v2577 = vunpack.c.l.bf16 %v2487
    %v2578 = vunpack.c.h.bf16 %v2487
    %v2579 = vunpack.c.l.bf16 %v2488
    %v2580 = vunpack.c.h.bf16 %v2488
    %v2581 = vunpack.c.l.bf16 %v2489
    %v2582 = vunpack.c.h.bf16 %v2489
    %v2583 = vunpack.c.l.bf16 %v2490
    %v2584 = vunpack.c.h.bf16 %v2490
    %v2585 = vunpack.c.l.bf16 %v2491
    %v2586 = vunpack.c.h.bf16 %v2491
    %v2587 = vunpack.c.l.bf16 %v2492
    %v2588 = vunpack.c.h.bf16 %v2492
    %v2589 = vunpack.c.l.bf16 %v2493
    %v2590 = vunpack.c.h.bf16 %v2493
    %v2591 = vunpack.c.l.bf16 %v2494
    %v2592 = vunpack.c.h.bf16 %v2494
    %v2593 = vunpack.c.l.bf16 %v2495
    %v2594 = vunpack.c.h.bf16 %v2495
    %v2595 = vunpack.c.l.bf16 %v2496
    %v2596 = vunpack.c.h.bf16 %v2496
    %v2597 = vunpack.c.l.bf16 %v2497
    %v2598 = vunpack.c.h.bf16 %v2497
    %v2599 = vunpack.c.l.bf16 %v2498
    %v2600 = vunpack.c.h.bf16 %v2498
    %v2601 = vunpack.c.l.bf16 %v2499
    %v2602 = vunpack.c.h.bf16 %v2499
    %v2603 = vunpack.c.l.bf16 %v2500
    %v2604 = vunpack.c.h.bf16 %v2500
    %v2605 = vunpack.c.l.bf16 %v2501
    %v2606 = vunpack.c.h.bf16 %v2501
    %v2607 = vunpack.c.l.bf16 %v2502
    %v2608 = vunpack.c.h.bf16 %v2502
    %v2609 = vunpack.c.l.bf16 %v2503
    %v2610 = vunpack.c.h.bf16 %v2503
    %v2611 = vunpack.c.l.bf16 %v2504
    %v2612 = vunpack.c.h.bf16 %v2504
    %v2613 = vunpack.c.l.bf16 %v2505
    %v2614 = vunpack.c.h.bf16 %v2505
    %v2615 = vunpack.c.l.bf16 %v2506
    %v2616 = vunpack.c.h.bf16 %v2506
    %v2617 = vunpack.c.l.bf16 %v2507
    %v2618 = vunpack.c.h.bf16 %v2507
    %v2619 = vunpack.c.l.bf16 %v2508
    %v2620 = vunpack.c.h.bf16 %v2508
    %v2621 = vunpack.c.l.bf16 %v2509
    %v2622 = vunpack.c.h.bf16 %v2509
    %v2623 = vunpack.c.l.bf16 %v2510
    %v2624 = vunpack.c.h.bf16 %v2510
    %v2625 = vunpack.c.l.bf16 %v2511
    %v2626 = vunpack.c.h.bf16 %v2511
    %v2627 = vunpack.c.l.bf16 %v2512
    %v2628 = vunpack.c.h.bf16 %v2512
    %v2629 = vunpack.c.l.bf16 %v2513
    %v2630 = vunpack.c.h.bf16 %v2513
    %v2631 = vunpack.c.l.bf16 %v2514
    %v2632 = vunpack.c.h.bf16 %v2514
    %v2633 = vunpack.c.l.bf16 %v2515
    %v2634 = vunpack.c.h.bf16 %v2515
    %v2635 = vunpack.c.l.bf16 %v2516
    %v2636 = vunpack.c.h.bf16 %v2516
    %v2637 = vunpack.c.l.bf16 %v2517
    %v2638 = vunpack.c.h.bf16 %v2517
    %v2639 = vunpack.c.l.bf16 %v2518
    %v2640 = vunpack.c.h.bf16 %v2518
    %v2641 = vunpack.c.l.bf16 %v2519
    %v2642 = vunpack.c.h.bf16 %v2519
    %v2643 = vunpack.c.l.bf16 %v2520
    %v2644 = vunpack.c.h.bf16 %v2520
    %v2645 = vunpack.c.l.bf16 %v2521
    %v2646 = vunpack.c.h.bf16 %v2521
    %v2647 = vunpack.c.l.bf16 %v2522
    %v2648 = vunpack.c.h.bf16 %v2522
    %v2649 = vunpack.c.l.bf16 %v2523
    %v2650 = vunpack.c.h.bf16 %v2523
    %v2651 = vunpack.c.l.bf16 %v2524
    %v2652 = vunpack.c.h.bf16 %v2524
    %v2653 = vmul.f32 %v2333, %v2525
    %v2654 = vmul.f32 %v2334, %v2526
    %v2655 = vmul.f32 %v2335, %v2527
    %v2656 = vmul.f32 %v2336, %v2528
    %v2657 = vmul.f32 %v2337, %v2529
    %v2658 = vmul.f32 %v2338, %v2530
    %v2659 = vmul.f32 %v2339, %v2531
    %v2660 = vmul.f32 %v2340, %v2532
    %v2661 = vmul.f32 %v2341, %v2533
    %v2662 = vmul.f32 %v2342, %v2534
    %v2663 = vmul.f32 %v2343, %v2535
    %v2664 = vmul.f32 %v2344, %v2536
    %v2665 = vmul.f32 %v2345, %v2537
    %v2666 = vmul.f32 %v2346, %v2538
    %v2667 = vmul.f32 %v2347, %v2539
    %v2668 = vmul.f32 %v2348, %v2540
    %v2669 = vmul.f32 %v2349, %v2541
    %v2670 = vmul.f32 %v2350, %v2542
    %v2671 = vmul.f32 %v2351, %v2543
    %v2672 = vmul.f32 %v2352, %v2544
    %v2673 = vmul.f32 %v2353, %v2545
    %v2674 = vmul.f32 %v2354, %v2546
    %v2675 = vmul.f32 %v2355, %v2547
    %v2676 = vmul.f32 %v2356, %v2548
    %v2677 = vmul.f32 %v2357, %v2549
    %v2678 = vmul.f32 %v2358, %v2550
    %v2679 = vmul.f32 %v2359, %v2551
    %v2680 = vmul.f32 %v2360, %v2552
    %v2681 = vmul.f32 %v2361, %v2553
    %v2682 = vmul.f32 %v2362, %v2554
    %v2683 = vmul.f32 %v2363, %v2555
    %v2684 = vmul.f32 %v2364, %v2556
    %v2685 = vmul.f32 %v2365, %v2557
    %v2686 = vmul.f32 %v2366, %v2558
    %v2687 = vmul.f32 %v2367, %v2559
    %v2688 = vmul.f32 %v2368, %v2560
    %v2689 = vmul.f32 %v2369, %v2561
    %v2690 = vmul.f32 %v2370, %v2562
    %v2691 = vmul.f32 %v2371, %v2563
    %v2692 = vmul.f32 %v2372, %v2564
    %v2693 = vmul.f32 %v2373, %v2565
    %v2694 = vmul.f32 %v2374, %v2566
    %v2695 = vmul.f32 %v2375, %v2567
    %v2696 = vmul.f32 %v2376, %v2568
    %v2697 = vmul.f32 %v2377, %v2569
    %v2698 = vmul.f32 %v2378, %v2570
    %v2699 = vmul.f32 %v2379, %v2571
    %v2700 = vmul.f32 %v2380, %v2572
    %v2701 = vmul.f32 %v2381, %v2573
    %v2702 = vmul.f32 %v2382, %v2574
    %v2703 = vmul.f32 %v2383, %v2575
    %v2704 = vmul.f32 %v2384, %v2576
    %v2705 = vmul.f32 %v2385, %v2577
    %v2706 = vmul.f32 %v2386, %v2578
    %v2707 = vmul.f32 %v2387, %v2579
    %v2708 = vmul.f32 %v2388, %v2580
    %v2709 = vmul.f32 %v2389, %v2581
    %v2710 = vmul.f32 %v2390, %v2582
    %v2711 = vmul.f32 %v2391, %v2583
    %v2712 = vmul.f32 %v2392, %v2584
    %v2713 = vmul.f32 %v2393, %v2585
    %v2714 = vmul.f32 %v2394, %v2586
    %v2715 = vmul.f32 %v2395, %v2587
    %v2716 = vmul.f32 %v2396, %v2588
    %v2717 = vmul.f32 %v2397, %v2589
    %v2718 = vmul.f32 %v2398, %v2590
    %v2719 = vmul.f32 %v2399, %v2591
    %v2720 = vmul.f32 %v2400, %v2592
    %v2721 = vmul.f32 %v2401, %v2593
    %v2722 = vmul.f32 %v2402, %v2594
    %v2723 = vmul.f32 %v2403, %v2595
    %v2724 = vmul.f32 %v2404, %v2596
    %v2725 = vmul.f32 %v2405, %v2597
    %v2726 = vmul.f32 %v2406, %v2598
    %v2727 = vmul.f32 %v2407, %v2599
    %v2728 = vmul.f32 %v2408, %v2600
    %v2729 = vmul.f32 %v2409, %v2601
    %v2730 = vmul.f32 %v2410, %v2602
    %v2731 = vmul.f32 %v2411, %v2603
    %v2732 = vmul.f32 %v2412, %v2604
    %v2733 = vmul.f32 %v2413, %v2605
    %v2734 = vmul.f32 %v2414, %v2606
    %v2735 = vmul.f32 %v2415, %v2607
    %v2736 = vmul.f32 %v2416, %v2608
    %v2737 = vmul.f32 %v2417, %v2609
    %v2738 = vmul.f32 %v2418, %v2610
    %v2739 = vmul.f32 %v2419, %v2611
    %v2740 = vmul.f32 %v2420, %v2612
    %v2741 = vmul.f32 %v2421, %v2613
    %v2742 = vmul.f32 %v2422, %v2614
    %v2743 = vmul.f32 %v2423, %v2615
    %v2744 = vmul.f32 %v2424, %v2616
    %v2745 = vmul.f32 %v2425, %v2617
    %v2746 = vmul.f32 %v2426, %v2618
    %v2747 = vmul.f32 %v2427, %v2619
    %v2748 = vmul.f32 %v2428, %v2620
    %v2749 = vmul.f32 %v2429, %v2621
    %v2750 = vmul.f32 %v2430, %v2622
    %v2751 = vmul.f32 %v2431, %v2623
    %v2752 = vmul.f32 %v2432, %v2624
    %v2753 = vmul.f32 %v2433, %v2625
    %v2754 = vmul.f32 %v2434, %v2626
    %v2755 = vmul.f32 %v2435, %v2627
    %v2756 = vmul.f32 %v2436, %v2628
    %v2757 = vmul.f32 %v2437, %v2629
    %v2758 = vmul.f32 %v2438, %v2630
    %v2759 = vmul.f32 %v2439, %v2631
    %v2760 = vmul.f32 %v2440, %v2632
    %v2761 = vmul.f32 %v2441, %v2633
    %v2762 = vmul.f32 %v2442, %v2634
    %v2763 = vmul.f32 %v2443, %v2635
    %v2764 = vmul.f32 %v2444, %v2636
    %v2765 = vmul.f32 %v2445, %v2637
    %v2766 = vmul.f32 %v2446, %v2638
    %v2767 = vmul.f32 %v2447, %v2639
    %v2768 = vmul.f32 %v2448, %v2640
    %v2769 = vmul.f32 %v2449, %v2641
    %v2770 = vmul.f32 %v2450, %v2642
    %v2771 = vmul.f32 %v2451, %v2643
    %v2772 = vmul.f32 %v2452, %v2644
    %v2773 = vmul.f32 %v2453, %v2645
    %v2774 = vmul.f32 %v2454, %v2646
    %v2775 = vmul.f32 %v2455, %v2647
    %v2776 = vmul.f32 %v2456, %v2648
    %v2777 = vmul.f32 %v2457, %v2649
    %v2778 = vmul.f32 %v2458, %v2650
    %v2779 = vmul.f32 %v2459, %v2651
    %v2780 = vmul.f32 %v2460, %v2652
    %v2781 = vadd.f32 %v221, %v2653
    %v2782 = vadd.f32 %v222, %v2654
    %v2783 = vadd.f32 %v223, %v2655
    %v2784 = vadd.f32 %v224, %v2656
    %v2785 = vadd.f32 %v225, %v2657
    %v2786 = vadd.f32 %v226, %v2658
    %v2787 = vadd.f32 %v227, %v2659
    %v2788 = vadd.f32 %v228, %v2660
    %v2789 = vadd.f32 %v229, %v2661
    %v2790 = vadd.f32 %v230, %v2662
    %v2791 = vadd.f32 %v231, %v2663
    %v2792 = vadd.f32 %v232, %v2664
    %v2793 = vadd.f32 %v233, %v2665
    %v2794 = vadd.f32 %v234, %v2666
    %v2795 = vadd.f32 %v235, %v2667
    %v2796 = vadd.f32 %v236, %v2668
    %v2797 = vadd.f32 %v237, %v2669
    %v2798 = vadd.f32 %v238, %v2670
    %v2799 = vadd.f32 %v239, %v2671
    %v2800 = vadd.f32 %v240, %v2672
    %v2801 = vadd.f32 %v241, %v2673
    %v2802 = vadd.f32 %v242, %v2674
    %v2803 = vadd.f32 %v243, %v2675
    %v2804 = vadd.f32 %v244, %v2676
    %v2805 = vadd.f32 %v245, %v2677
    %v2806 = vadd.f32 %v246, %v2678
    %v2807 = vadd.f32 %v247, %v2679
    %v2808 = vadd.f32 %v248, %v2680
    %v2809 = vadd.f32 %v249, %v2681
    %v2810 = vadd.f32 %v250, %v2682
    %v2811 = vadd.f32 %v251, %v2683
    %v2812 = vadd.f32 %v252, %v2684
    %v2813 = vadd.f32 %v253, %v2685
    %v2814 = vadd.f32 %v254, %v2686
    %v2815 = vadd.f32 %v255, %v2687
    %v2816 = vadd.f32 %v256, %v2688
    %v2817 = vadd.f32 %v257, %v2689
    %v2818 = vadd.f32 %v258, %v2690
    %v2819 = vadd.f32 %v259, %v2691
    %v2820 = vadd.f32 %v260, %v2692
    %v2821 = vadd.f32 %v261, %v2693
    %v2822 = vadd.f32 %v262, %v2694
    %v2823 = vadd.f32 %v263, %v2695
    %v2824 = vadd.f32 %v264, %v2696
    %v2825 = vadd.f32 %v265, %v2697
    %v2826 = vadd.f32 %v266, %v2698
    %v2827 = vadd.f32 %v267, %v2699
    %v2828 = vadd.f32 %v268, %v2700
    %v2829 = vadd.f32 %v269, %v2701
    %v2830 = vadd.f32 %v270, %v2702
    %v2831 = vadd.f32 %v271, %v2703
    %v2832 = vadd.f32 %v272, %v2704
    %v2833 = vadd.f32 %v273, %v2705
    %v2834 = vadd.f32 %v274, %v2706
    %v2835 = vadd.f32 %v275, %v2707
    %v2836 = vadd.f32 %v276, %v2708
    %v2837 = vadd.f32 %v277, %v2709
    %v2838 = vadd.f32 %v278, %v2710
    %v2839 = vadd.f32 %v279, %v2711
    %v2840 = vadd.f32 %v280, %v2712
    %v2841 = vadd.f32 %v281, %v2713
    %v2842 = vadd.f32 %v282, %v2714
    %v2843 = vadd.f32 %v283, %v2715
    %v2844 = vadd.f32 %v284, %v2716
    %v2845 = vadd.f32 %v285, %v2717
    %v2846 = vadd.f32 %v286, %v2718
    %v2847 = vadd.f32 %v287, %v2719
    %v2848 = vadd.f32 %v288, %v2720
    %v2849 = vadd.f32 %v289, %v2721
    %v2850 = vadd.f32 %v290, %v2722
    %v2851 = vadd.f32 %v291, %v2723
    %v2852 = vadd.f32 %v292, %v2724
    %v2853 = vadd.f32 %v293, %v2725
    %v2854 = vadd.f32 %v294, %v2726
    %v2855 = vadd.f32 %v295, %v2727
    %v2856 = vadd.f32 %v296, %v2728
    %v2857 = vadd.f32 %v297, %v2729
    %v2858 = vadd.f32 %v298, %v2730
    %v2859 = vadd.f32 %v299, %v2731
    %v2860 = vadd.f32 %v300, %v2732
    %v2861 = vadd.f32 %v301, %v2733
    %v2862 = vadd.f32 %v302, %v2734
    %v2863 = vadd.f32 %v303, %v2735
    %v2864 = vadd.f32 %v304, %v2736
    %v2865 = vadd.f32 %v305, %v2737
    %v2866 = vadd.f32 %v306, %v2738
    %v2867 = vadd.f32 %v307, %v2739
    %v2868 = vadd.f32 %v308, %v2740
    %v2869 = vadd.f32 %v309, %v2741
    %v2870 = vadd.f32 %v310, %v2742
    %v2871 = vadd.f32 %v311, %v2743
    %v2872 = vadd.f32 %v312, %v2744
    %v2873 = vadd.f32 %v313, %v2745
    %v2874 = vadd.f32 %v314, %v2746
    %v2875 = vadd.f32 %v315, %v2747
    %v2876 = vadd.f32 %v316, %v2748
    %v2877 = vadd.f32 %v317, %v2749
    %v2878 = vadd.f32 %v318, %v2750
    %v2879 = vadd.f32 %v319, %v2751
    %v2880 = vadd.f32 %v320, %v2752
    %v2881 = vadd.f32 %v321, %v2753
    %v2882 = vadd.f32 %v322, %v2754
    %v2883 = vadd.f32 %v323, %v2755
    %v2884 = vadd.f32 %v324, %v2756
    %v2885 = vadd.f32 %v325, %v2757
    %v2886 = vadd.f32 %v326, %v2758
    %v2887 = vadd.f32 %v327, %v2759
    %v2888 = vadd.f32 %v328, %v2760
    %v2889 = vadd.f32 %v329, %v2761
    %v2890 = vadd.f32 %v330, %v2762
    %v2891 = vadd.f32 %v331, %v2763
    %v2892 = vadd.f32 %v332, %v2764
    %v2893 = vadd.f32 %v333, %v2765
    %v2894 = vadd.f32 %v334, %v2766
    %v2895 = vadd.f32 %v335, %v2767
    %v2896 = vadd.f32 %v336, %v2768
    %v2897 = vadd.f32 %v337, %v2769
    %v2898 = vadd.f32 %v338, %v2770
    %v2899 = vadd.f32 %v339, %v2771
    %v2900 = vadd.f32 %v340, %v2772
    %v2901 = vadd.f32 %v341, %v2773
    %v2902 = vadd.f32 %v342, %v2774
    %v2903 = vadd.f32 %v343, %v2775
    %v2904 = vadd.f32 %v344, %v2776
    %v2905 = vadd.f32 %v345, %v2777
    %v2906 = vadd.f32 %v346, %v2778
    %v2907 = vadd.f32 %v347, %v2779
    %v2908 = vadd.f32 %v348, %v2780
    %v2909 = vld [vmem:[#allocation10] sm:$0x3]
    %v2910 = vunpack.c.l.bf16 %v2909
    %v2911 = vld [vmem:[%s5] sm:$0x3]
    %v2912 = vunpack.c.l.bf16 %v2911
    %v2913 = vmax.f32 %v2912, 0.0
    %v2914 = vand.u32 2147483647, %v2912
    %v2915 = vsub.f32 0.0, %v2914
    %v2916 = vmul.f32 %v2915, 1.442695
    %v2917 = vpow.pop %v2916
    %v2918 = vadd.f32 %v2917, 1.0
    %v2919 = vlog2.pop %v2918
    %v2920 = vmul.f32 %v2919, 0.6931472
    %v2921 = vmul.f32 -0.5, %v2917
    %v2922 = vadd.f32 %v2921, 1.0
    %v2923 = vmul.f32 %v2922, %v2917
    %v2924 = vand.u32 2147483647, %v2917
    %vm2925 = vcmp.lt.f32.partialorder %v2924, 0.0004427343
    %v2926 = vsel %vm2925, %v2923, %v2920
    %v2927 = vadd.f32 %v2913, %v2926
    %v2928 = vld [vmem:[%s6] sm:$0x3]
    %v2929 = vunpack.c.l.bf16 %v2928
    %v2930 = vmul.f32 %v2927, %v2929
    %v2931 = vadd.f32 %v2910, %v2930
    %v2933 = vlaneseq
    %v2934 = vshrl.u32 %v2933, 7
    %v2935 = vsub.s32 0, %v2934
    %v2936 = vrot.slane %v2931, %v2935
    %v2937 = vlaneseq
    %v2938 = vshrl.u32 %v2937, 7
    %v2939 = vsub.s32 2, %v2938
    %v2940 = vrot.slane %v2931, %v2939
    %v2943 = vlaneseq
    %v2944 = vshrl.u32 %v2943, 7
    %v2945 = vsub.s32 0, %v2944
    %v2946 = vrot.slane %v2936, %v2945
    %v2947 = vlaneseq
    %v2948 = vshrl.u32 %v2947, 7
    %v2949 = vsub.s32 0, %v2948
    %v2950 = vrot.slane %v2940, %v2949
    %2951 = vmatprep.subr.mxu0 %v2812
    %2952 = vmatpush1.msra.mxu0 %v2811
    %2953 = vmatprep.subr.mxu0 %v2810
    %2954 = vmatpush1.msra.mxu0 %v2809
    %2955 = vmatprep.subr.mxu0 %v2808
    %2956 = vmatpush1.msra.mxu0 %v2807
    %2957 = vmatprep.subr.mxu0 %v2806
    %2958 = vmatpush1.msra.mxu0 %v2805
    %2959 = vmatprep.subr.mxu0 %v2804
    %2960 = vmatpush1.msra.mxu0 %v2803
    %2961 = vmatprep.subr.mxu0 %v2802
    %2962 = vmatpush1.msra.mxu0 %v2801
    %2963 = vmatprep.subr.mxu0 %v2800
    %2964 = vmatpush1.msra.mxu0 %v2799
    %2965 = vmatprep.subr.mxu0 %v2798
    %2966 = vmatpush1.msra.mxu0 %v2797
    %2967 = vmatprep.subr.mxu0 %v2796
    %2968 = vmatpush1.msra.mxu0 %v2795
    %2969 = vmatprep.subr.mxu0 %v2794
    %2970 = vmatpush1.msra.mxu0 %v2793
    %2971 = vmatprep.subr.mxu0 %v2792
    %2972 = vmatpush1.msra.mxu0 %v2791
    %2973 = vmatprep.subr.mxu0 %v2790
    %2974 = vmatpush1.msra.mxu0 %v2789
    %2975 = vmatprep.subr.mxu0 %v2788
    %2976 = vmatpush1.msra.mxu0 %v2787
    %2977 = vmatprep.subr.mxu0 %v2786
    %2978 = vmatpush1.msra.mxu0 %v2785
    %2979 = vmatprep.subr.mxu0 %v2784
    %2980 = vmatpush1.msra.mxu0 %v2783
    %2981 = vmatprep.subr.mxu0 %v2782
    %2982 = vmatpush1.msra.mxu0 %v2781
    %2983 = vmatprep.subr.mxu0 %v2844
    %2984 = vmatpush2.msra.mxu0 %v2843
    %2985 = vmatprep.subr.mxu0 %v2842
    %2986 = vmatpush2.msra.mxu0 %v2841
    %2987 = vmatprep.subr.mxu0 %v2840
    %2988 = vmatpush2.msra.mxu0 %v2839
    %2989 = vmatprep.subr.mxu0 %v2838
    %2990 = vmatpush2.msra.mxu0 %v2837
    %2991 = vmatprep.subr.mxu0 %v2836
    %2992 = vmatpush2.msra.mxu0 %v2835
    %2993 = vmatprep.subr.mxu0 %v2834
    %2994 = vmatpush2.msra.mxu0 %v2833
    %2995 = vmatprep.subr.mxu0 %v2832
    %2996 = vmatpush2.msra.mxu0 %v2831
    %2997 = vmatprep.subr.mxu0 %v2830
    %2998 = vmatpush2.msra.mxu0 %v2829
    %2999 = vmatprep.subr.mxu0 %v2828
    %3000 = vmatpush2.msra.mxu0 %v2827
    %3001 = vmatprep.subr.mxu0 %v2826
    %3002 = vmatpush2.msra.mxu0 %v2825
    %3003 = vmatprep.subr.mxu0 %v2824
    %3004 = vmatpush2.msra.mxu0 %v2823
    %3005 = vmatprep.subr.mxu0 %v2822
    %3006 = vmatpush2.msra.mxu0 %v2821
    %3007 = vmatprep.subr.mxu0 %v2820
    %3008 = vmatpush2.msra.mxu0 %v2819
    %3009 = vmatprep.subr.mxu0 %v2818
    %3010 = vmatpush2.msra.mxu0 %v2817
    %3011 = vmatprep.subr.mxu0 %v2816
    %3012 = vmatpush2.msra.mxu0 %v2815
    %3013 = vmatprep.subr.mxu0 %v2814
    %3014 = vmatpush2.msra.mxu0 %v2813
    %3015 = vmatprep.mubr.f32.mxu0 %v154
    %3016 = vmatmul.mubr.f32.gmra.mxu0 %v153
    %v3017 = vpop.f32.mrf.mxu0
    %v3018 = vadd.f32 %v2946, %v3017
    %v3019 = vpop.f32.mrf.mxu0
    %v3020 = vadd.f32 %v2950, %v3019
    %3021 = vdwg.mxu0
    %3022 = vmatprep.subr.mxu0 %v2876
    %3023 = vmatpush1.msra.mxu0 %v2875
    %3024 = vmatprep.subr.mxu0 %v2874
    %3025 = vmatpush1.msra.mxu0 %v2873
    %3026 = vmatprep.subr.mxu0 %v2872
    %3027 = vmatpush1.msra.mxu0 %v2871
    %3028 = vmatprep.subr.mxu0 %v2870
    %3029 = vmatpush1.msra.mxu0 %v2869
    %3030 = vmatprep.subr.mxu0 %v2868
    %3031 = vmatpush1.msra.mxu0 %v2867
    %3032 = vmatprep.subr.mxu0 %v2866
    %3033 = vmatpush1.msra.mxu0 %v2865
    %3034 = vmatprep.subr.mxu0 %v2864
    %3035 = vmatpush1.msra.mxu0 %v2863
    %3036 = vmatprep.subr.mxu0 %v2862
    %3037 = vmatpush1.msra.mxu0 %v2861
    %3038 = vmatprep.subr.mxu0 %v2860
    %3039 = vmatpush1.msra.mxu0 %v2859
    %3040 = vmatprep.subr.mxu0 %v2858
    %3041 = vmatpush1.msra.mxu0 %v2857
    %3042 = vmatprep.subr.mxu0 %v2856
    %3043 = vmatpush1.msra.mxu0 %v2855
    %3044 = vmatprep.subr.mxu0 %v2854
    %3045 = vmatpush1.msra.mxu0 %v2853
    %3046 = vmatprep.subr.mxu0 %v2852
    %3047 = vmatpush1.msra.mxu0 %v2851
    %3048 = vmatprep.subr.mxu0 %v2850
    %3049 = vmatpush1.msra.mxu0 %v2849
    %3050 = vmatprep.subr.mxu0 %v2848
    %3051 = vmatpush1.msra.mxu0 %v2847
    %3052 = vmatprep.subr.mxu0 %v2846
    %3053 = vmatpush1.msra.mxu0 %v2845
    %3054 = vmatprep.subr.mxu0 %v2908
    %3055 = vmatpush2.msra.mxu0 %v2907
    %3056 = vmatprep.subr.mxu0 %v2906
    %3057 = vmatpush2.msra.mxu0 %v2905
    %3058 = vmatprep.subr.mxu0 %v2904
    %3059 = vmatpush2.msra.mxu0 %v2903
    %3060 = vmatprep.subr.mxu0 %v2902
    %3061 = vmatpush2.msra.mxu0 %v2901
    %3062 = vmatprep.subr.mxu0 %v2900
    %3063 = vmatpush2.msra.mxu0 %v2899
    %3064 = vmatprep.subr.mxu0 %v2898
    %3065 = vmatpush2.msra.mxu0 %v2897
    %3066 = vmatprep.subr.mxu0 %v2896
    %3067 = vmatpush2.msra.mxu0 %v2895
    %3068 = vmatprep.subr.mxu0 %v2894
    %3069 = vmatpush2.msra.mxu0 %v2893
    %3070 = vmatprep.subr.mxu0 %v2892
    %3071 = vmatpush2.msra.mxu0 %v2891
    %3072 = vmatprep.subr.mxu0 %v2890
    %3073 = vmatpush2.msra.mxu0 %v2889
    %3074 = vmatprep.subr.mxu0 %v2888
    %3075 = vmatpush2.msra.mxu0 %v2887
    %3076 = vmatprep.subr.mxu0 %v2886
    %3077 = vmatpush2.msra.mxu0 %v2885
    %3078 = vmatprep.subr.mxu0 %v2884
    %3079 = vmatpush2.msra.mxu0 %v2883
    %3080 = vmatprep.subr.mxu0 %v2882
    %3081 = vmatpush2.msra.mxu0 %v2881
    %3082 = vmatprep.subr.mxu0 %v2880
    %3083 = vmatpush2.msra.mxu0 %v2879
    %3084 = vmatprep.subr.mxu0 %v2878
    %3085 = vmatpush2.msra.mxu0 %v2877
    %3086 = vmatprep.mubr.f32.mxu0 %v156
    %3087 = vmatmul.mubr.f32.gmra.mxu0 %v155
    %v3088 = vpop.f32.mrf.mxu0
    %v3089 = vadd.f32 %v3018, %v3088
    %v3090 = vpop.f32.mrf.mxu0
    %v3091 = vadd.f32 %v3020, %v3090
    %3092 = vdwg.mxu0
    %v3093 = vmax.f32 %v2333, 1e-30
    %v3094 = vmax.f32 %v2334, 1e-30
    %v3095 = vmax.f32 %v2335, 1e-30
    %v3096 = vmax.f32 %v2336, 1e-30
    %v3097 = vmax.f32 %v2337, 1e-30
    %v3098 = vmax.f32 %v2338, 1e-30
    %v3099 = vmax.f32 %v2339, 1e-30
    %v3100 = vmax.f32 %v2340, 1e-30
    %v3101 = vmax.f32 %v2341, 1e-30
    %v3102 = vmax.f32 %v2342, 1e-30
    %v3103 = vmax.f32 %v2343, 1e-30
    %v3104 = vmax.f32 %v2344, 1e-30
    %v3105 = vmax.f32 %v2345, 1e-30
    %v3106 = vmax.f32 %v2346, 1e-30
    %v3107 = vmax.f32 %v2347, 1e-30
    %v3108 = vmax.f32 %v2348, 1e-30
    %v3109 = vmax.f32 %v2349, 1e-30
    %v3110 = vmax.f32 %v2350, 1e-30
    %v3111 = vmax.f32 %v2351, 1e-30
    %v3112 = vmax.f32 %v2352, 1e-30
    %v3113 = vmax.f32 %v2353, 1e-30
    %v3114 = vmax.f32 %v2354, 1e-30
    %v3115 = vmax.f32 %v2355, 1e-30
    %v3116 = vmax.f32 %v2356, 1e-30
    %v3117 = vmax.f32 %v2357, 1e-30
    %v3118 = vmax.f32 %v2358, 1e-30
    %v3119 = vmax.f32 %v2359, 1e-30
    %v3120 = vmax.f32 %v2360, 1e-30
    %v3121 = vmax.f32 %v2361, 1e-30
    %v3122 = vmax.f32 %v2362, 1e-30
    %v3123 = vmax.f32 %v2363, 1e-30
    %v3124 = vmax.f32 %v2364, 1e-30
    %v3125 = vmax.f32 %v2365, 1e-30
    %v3126 = vmax.f32 %v2366, 1e-30
    %v3127 = vmax.f32 %v2367, 1e-30
    %v3128 = vmax.f32 %v2368, 1e-30
    %v3129 = vmax.f32 %v2369, 1e-30
    %v3130 = vmax.f32 %v2370, 1e-30
    %v3131 = vmax.f32 %v2371, 1e-30
    %v3132 = vmax.f32 %v2372, 1e-30
    %v3133 = vmax.f32 %v2373, 1e-30
    %v3134 = vmax.f32 %v2374, 1e-30
    %v3135 = vmax.f32 %v2375, 1e-30
    %v3136 = vmax.f32 %v2376, 1e-30
    %v3137 = vmax.f32 %v2377, 1e-30
    %v3138 = vmax.f32 %v2378, 1e-30
    %v3139 = vmax.f32 %v2379, 1e-30
    %v3140 = vmax.f32 %v2380, 1e-30
    %v3141 = vmax.f32 %v2381, 1e-30
    %v3142 = vmax.f32 %v2382, 1e-30
    %v3143 = vmax.f32 %v2383, 1e-30
    %v3144 = vmax.f32 %v2384, 1e-30
    %v3145 = vmax.f32 %v2385, 1e-30
    %v3146 = vmax.f32 %v2386, 1e-30
    %v3147 = vmax.f32 %v2387, 1e-30
    %v3148 = vmax.f32 %v2388, 1e-30
    %v3149 = vmax.f32 %v2389, 1e-30
    %v3150 = vmax.f32 %v2390, 1e-30
    %v3151 = vmax.f32 %v2391, 1e-30
    %v3152 = vmax.f32 %v2392, 1e-30
    %v3153 = vmax.f32 %v2393, 1e-30
    %v3154 = vmax.f32 %v2394, 1e-30
    %v3155 = vmax.f32 %v2395, 1e-30
    %v3156 = vmax.f32 %v2396, 1e-30
    %v3157 = vmax.f32 %v2397, 1e-30
    %v3158 = vmax.f32 %v2398, 1e-30
    %v3159 = vmax.f32 %v2399, 1e-30
    %v3160 = vmax.f32 %v2400, 1e-30
    %v3161 = vmax.f32 %v2401, 1e-30
    %v3162 = vmax.f32 %v2402, 1e-30
    %v3163 = vmax.f32 %v2403, 1e-30
    %v3164 = vmax.f32 %v2404, 1e-30
    %v3165 = vmax.f32 %v2405, 1e-30
    %v3166 = vmax.f32 %v2406, 1e-30
    %v3167 = vmax.f32 %v2407, 1e-30
    %v3168 = vmax.f32 %v2408, 1e-30
    %v3169 = vmax.f32 %v2409, 1e-30
    %v3170 = vmax.f32 %v2410, 1e-30
    %v3171 = vmax.f32 %v2411, 1e-30
    %v3172 = vmax.f32 %v2412, 1e-30
    %v3173 = vmax.f32 %v2413, 1e-30
    %v3174 = vmax.f32 %v2414, 1e-30
    %v3175 = vmax.f32 %v2415, 1e-30
    %v3176 = vmax.f32 %v2416, 1e-30
    %v3177 = vmax.f32 %v2417, 1e-30
    %v3178 = vmax.f32 %v2418, 1e-30
    %v3179 = vmax.f32 %v2419, 1e-30
    %v3180 = vmax.f32 %v2420, 1e-30
    %v3181 = vmax.f32 %v2421, 1e-30
    %v3182 = vmax.f32 %v2422, 1e-30
    %v3183 = vmax.f32 %v2423, 1e-30
    %v3184 = vmax.f32 %v2424, 1e-30
    %v3185 = vmax.f32 %v2425, 1e-30
    %v3186 = vmax.f32 %v2426, 1e-30
    %v3187 = vmax.f32 %v2427, 1e-30
    %v3188 = vmax.f32 %v2428, 1e-30
    %v3189 = vmax.f32 %v2429, 1e-30
    %v3190 = vmax.f32 %v2430, 1e-30
    %v3191 = vmax.f32 %v2431, 1e-30
    %v3192 = vmax.f32 %v2432, 1e-30
    %v3193 = vmax.f32 %v2433, 1e-30
    %v3194 = vmax.f32 %v2434, 1e-30
    %v3195 = vmax.f32 %v2435, 1e-30
    %v3196 = vmax.f32 %v2436, 1e-30
    %v3197 = vmax.f32 %v2437, 1e-30
    %v3198 = vmax.f32 %v2438, 1e-30
    %v3199 = vmax.f32 %v2439, 1e-30
    %v3200 = vmax.f32 %v2440, 1e-30
    %v3201 = vmax.f32 %v2441, 1e-30
    %v3202 = vmax.f32 %v2442, 1e-30
    %v3203 = vmax.f32 %v2443, 1e-30
    %v3204 = vmax.f32 %v2444, 1e-30
    %v3205 = vmax.f32 %v2445, 1e-30
    %v3206 = vmax.f32 %v2446, 1e-30
    %v3207 = vmax.f32 %v2447, 1e-30
    %v3208 = vmax.f32 %v2448, 1e-30
    %v3209 = vmax.f32 %v2449, 1e-30
    %v3210 = vmax.f32 %v2450, 1e-30
    %v3211 = vmax.f32 %v2451, 1e-30
    %v3212 = vmax.f32 %v2452, 1e-30
    %v3213 = vmax.f32 %v2453, 1e-30
    %v3214 = vmax.f32 %v2454, 1e-30
    %v3215 = vmax.f32 %v2455, 1e-30
    %v3216 = vmax.f32 %v2456, 1e-30
    %v3217 = vmax.f32 %v2457, 1e-30
    %v3218 = vmax.f32 %v2458, 1e-30
    %v3219 = vmax.f32 %v2459, 1e-30
    %v3220 = vmax.f32 %v2460, 1e-30
    %v3221 = vlog2.pop %v3093
    %v3222 = vmul.f32 %v3221, 0.6931472
    %v3223 = vlog2.pop %v3094
    %v3224 = vmul.f32 %v3223, 0.6931472
    %v3225 = vlog2.pop %v3095
    %v3226 = vmul.f32 %v3225, 0.6931472
    %v3227 = vlog2.pop %v3096
    %v3228 = vmul.f32 %v3227, 0.6931472
    %v3229 = vlog2.pop %v3097
    %v3230 = vmul.f32 %v3229, 0.6931472
    %v3231 = vlog2.pop %v3098
    %v3232 = vmul.f32 %v3231, 0.6931472
    %v3233 = vlog2.pop %v3099
    %v3234 = vmul.f32 %v3233, 0.6931472
    %v3235 = vlog2.pop %v3100
    %v3236 = vmul.f32 %v3235, 0.6931472
    %v3237 = vlog2.pop %v3101
    %v3238 = vmul.f32 %v3237, 0.6931472
    %v3239 = vlog2.pop %v3102
    %v3240 = vmul.f32 %v3239, 0.6931472
    %v3241 = vlog2.pop %v3103
    %v3242 = vmul.f32 %v3241, 0.6931472
    %v3243 = vlog2.pop %v3104
    %v3244 = vmul.f32 %v3243, 0.6931472
    %v3245 = vlog2.pop %v3105
    %v3246 = vmul.f32 %v3245, 0.6931472
    %v3247 = vlog2.pop %v3106
    %v3248 = vmul.f32 %v3247, 0.6931472
    %v3249 = vlog2.pop %v3107
    %v3250 = vmul.f32 %v3249, 0.6931472
    %v3251 = vlog2.pop %v3108
    %v3252 = vmul.f32 %v3251, 0.6931472
    %v3253 = vlog2.pop %v3109
    %v3254 = vmul.f32 %v3253, 0.6931472
    %v3255 = vlog2.pop %v3110
    %v3256 = vmul.f32 %v3255, 0.6931472
    %v3257 = vlog2.pop %v3111
    %v3258 = vmul.f32 %v3257, 0.6931472
    %v3259 = vlog2.pop %v3112
    %v3260 = vmul.f32 %v3259, 0.6931472
    %v3261 = vlog2.pop %v3113
    %v3262 = vmul.f32 %v3261, 0.6931472
    %v3263 = vlog2.pop %v3114
    %v3264 = vmul.f32 %v3263, 0.6931472
    %v3265 = vlog2.pop %v3115
    %v3266 = vmul.f32 %v3265, 0.6931472
    %v3267 = vlog2.pop %v3116
    %v3268 = vmul.f32 %v3267, 0.6931472
    %v3269 = vlog2.pop %v3117
    %v3270 = vmul.f32 %v3269, 0.6931472
    %v3271 = vlog2.pop %v3118
    %v3272 = vmul.f32 %v3271, 0.6931472
    %v3273 = vlog2.pop %v3119
    %v3274 = vmul.f32 %v3273, 0.6931472
    %v3275 = vlog2.pop %v3120
    %v3276 = vmul.f32 %v3275, 0.6931472
    %v3277 = vlog2.pop %v3121
    %v3278 = vmul.f32 %v3277, 0.6931472
    %v3279 = vlog2.pop %v3122
    %v3280 = vmul.f32 %v3279, 0.6931472
    %v3281 = vlog2.pop %v3123
    %v3282 = vmul.f32 %v3281, 0.6931472
    %v3283 = vlog2.pop %v3124
    %v3284 = vmul.f32 %v3283, 0.6931472
    %v3285 = vlog2.pop %v3125
    %v3286 = vmul.f32 %v3285, 0.6931472
    %v3287 = vlog2.pop %v3126
    %v3288 = vmul.f32 %v3287, 0.6931472
    %v3289 = vlog2.pop %v3127
    %v3290 = vmul.f32 %v3289, 0.6931472
    %v3291 = vlog2.pop %v3128
    %v3292 = vmul.f32 %v3291, 0.6931472
    %v3293 = vlog2.pop %v3129
    %v3294 = vmul.f32 %v3293, 0.6931472
    %v3295 = vlog2.pop %v3130
    %v3296 = vmul.f32 %v3295, 0.6931472
    %v3297 = vlog2.pop %v3131
    %v3298 = vmul.f32 %v3297, 0.6931472
    %v3299 = vlog2.pop %v3132
    %v3300 = vmul.f32 %v3299, 0.6931472
    %v3301 = vlog2.pop %v3133
    %v3302 = vmul.f32 %v3301, 0.6931472
    %v3303 = vlog2.pop %v3134
    %v3304 = vmul.f32 %v3303, 0.6931472
    %v3305 = vlog2.pop %v3135
    %v3306 = vmul.f32 %v3305, 0.6931472
    %v3307 = vlog2.pop %v3136
    %v3308 = vmul.f32 %v3307, 0.6931472
    %v3309 = vlog2.pop %v3137
    %v3310 = vmul.f32 %v3309, 0.6931472
    %v3311 = vlog2.pop %v3138
    %v3312 = vmul.f32 %v3311, 0.6931472
    %v3313 = vlog2.pop %v3139
    %v3314 = vmul.f32 %v3313, 0.6931472
    %v3315 = vlog2.pop %v3140
    %v3316 = vmul.f32 %v3315, 0.6931472
    %v3317 = vlog2.pop %v3141
    %v3318 = vmul.f32 %v3317, 0.6931472
    %v3319 = vlog2.pop %v3142
    %v3320 = vmul.f32 %v3319, 0.6931472
    %v3321 = vlog2.pop %v3143
    %v3322 = vmul.f32 %v3321, 0.6931472
    %v3323 = vlog2.pop %v3144
    %v3324 = vmul.f32 %v3323, 0.6931472
    %v3325 = vlog2.pop %v3145
    %v3326 = vmul.f32 %v3325, 0.6931472
    %v3327 = vlog2.pop %v3146
    %v3328 = vmul.f32 %v3327, 0.6931472
    %v3329 = vlog2.pop %v3147
    %v3330 = vmul.f32 %v3329, 0.6931472
    %v3331 = vlog2.pop %v3148
    %v3332 = vmul.f32 %v3331, 0.6931472
    %v3333 = vlog2.pop %v3149
    %v3334 = vmul.f32 %v3333, 0.6931472
    %v3335 = vlog2.pop %v3150
    %v3336 = vmul.f32 %v3335, 0.6931472
    %v3337 = vlog2.pop %v3151
    %v3338 = vmul.f32 %v3337, 0.6931472
    %v3339 = vlog2.pop %v3152
    %v3340 = vmul.f32 %v3339, 0.6931472
    %v3341 = vlog2.pop %v3153
    %v3342 = vmul.f32 %v3341, 0.6931472
    %v3343 = vlog2.pop %v3154
    %v3344 = vmul.f32 %v3343, 0.6931472
    %v3345 = vlog2.pop %v3155
    %v3346 = vmul.f32 %v3345, 0.6931472
    %v3347 = vlog2.pop %v3156
    %v3348 = vmul.f32 %v3347, 0.6931472
    %v3349 = vlog2.pop %v3157
    %v3350 = vmul.f32 %v3349, 0.6931472
    %v3351 = vlog2.pop %v3158
    %v3352 = vmul.f32 %v3351, 0.6931472
    %v3353 = vlog2.pop %v3159
    %v3354 = vmul.f32 %v3353, 0.6931472
    %v3355 = vlog2.pop %v3160
    %v3356 = vmul.f32 %v3355, 0.6931472
    %v3357 = vlog2.pop %v3161
    %v3358 = vmul.f32 %v3357, 0.6931472
    %v3359 = vlog2.pop %v3162
    %v3360 = vmul.f32 %v3359, 0.6931472
    %v3361 = vlog2.pop %v3163
    %v3362 = vmul.f32 %v3361, 0.6931472
    %v3363 = vlog2.pop %v3164
    %v3364 = vmul.f32 %v3363, 0.6931472
    %v3365 = vlog2.pop %v3165
    %v3366 = vmul.f32 %v3365, 0.6931472
    %v3367 = vlog2.pop %v3166
    %v3368 = vmul.f32 %v3367, 0.6931472
    %v3369 = vlog2.pop %v3167
    %v3370 = vmul.f32 %v3369, 0.6931472
    %v3371 = vlog2.pop %v3168
    %v3372 = vmul.f32 %v3371, 0.6931472
    %v3373 = vlog2.pop %v3169
    %v3374 = vmul.f32 %v3373, 0.6931472
    %v3375 = vlog2.pop %v3170
    %v3376 = vmul.f32 %v3375, 0.6931472
    %v3377 = vlog2.pop %v3171
    %v3378 = vmul.f32 %v3377, 0.6931472
    %v3379 = vlog2.pop %v3172
    %v3380 = vmul.f32 %v3379, 0.6931472
    %v3381 = vlog2.pop %v3173
    %v3382 = vmul.f32 %v3381, 0.6931472
    %v3383 = vlog2.pop %v3174
    %v3384 = vmul.f32 %v3383, 0.6931472
    %v3385 = vlog2.pop %v3175
    %v3386 = vmul.f32 %v3385, 0.6931472
    %v3387 = vlog2.pop %v3176
    %v3388 = vmul.f32 %v3387, 0.6931472
    %v3389 = vlog2.pop %v3177
    %v3390 = vmul.f32 %v3389, 0.6931472
    %v3391 = vlog2.pop %v3178
    %v3392 = vmul.f32 %v3391, 0.6931472
    %v3393 = vlog2.pop %v3179
    %v3394 = vmul.f32 %v3393, 0.6931472
    %v3395 = vlog2.pop %v3180
    %v3396 = vmul.f32 %v3395, 0.6931472
    %v3397 = vlog2.pop %v3181
    %v3398 = vmul.f32 %v3397, 0.6931472
    %v3399 = vlog2.pop %v3182
    %v3400 = vmul.f32 %v3399, 0.6931472
    %v3401 = vlog2.pop %v3183
    %v3402 = vmul.f32 %v3401, 0.6931472
    %v3403 = vlog2.pop %v3184
    %v3404 = vmul.f32 %v3403, 0.6931472
    %v3405 = vlog2.pop %v3185
    %v3406 = vmul.f32 %v3405, 0.6931472
    %v3407 = vlog2.pop %v3186
    %v3408 = vmul.f32 %v3407, 0.6931472
    %v3409 = vlog2.pop %v3187
    %v3410 = vmul.f32 %v3409, 0.6931472
    %v3411 = vlog2.pop %v3188
    %v3412 = vmul.f32 %v3411, 0.6931472
    %v3413 = vlog2.pop %v3189
    %v3414 = vmul.f32 %v3413, 0.6931472
    %v3415 = vlog2.pop %v3190
    %v3416 = vmul.f32 %v3415, 0.6931472
    %v3417 = vlog2.pop %v3191
    %v3418 = vmul.f32 %v3417, 0.6931472
    %v3419 = vlog2.pop %v3192
    %v3420 = vmul.f32 %v3419, 0.6931472
    %v3421 = vlog2.pop %v3193
    %v3422 = vmul.f32 %v3421, 0.6931472
    %v3423 = vlog2.pop %v3194
    %v3424 = vmul.f32 %v3423, 0.6931472
    %v3425 = vlog2.pop %v3195
    %v3426 = vmul.f32 %v3425, 0.6931472
    %v3427 = vlog2.pop %v3196
    %v3428 = vmul.f32 %v3427, 0.6931472
    %v3429 = vlog2.pop %v3197
    %v3430 = vmul.f32 %v3429, 0.6931472
    %v3431 = vlog2.pop %v3198
    %v3432 = vmul.f32 %v3431, 0.6931472
    %v3433 = vlog2.pop %v3199
    %v3434 = vmul.f32 %v3433, 0.6931472
    %v3435 = vlog2.pop %v3200
    %v3436 = vmul.f32 %v3435, 0.6931472
    %v3437 = vlog2.pop %v3201
    %v3438 = vmul.f32 %v3437, 0.6931472
    %v3439 = vlog2.pop %v3202
    %v3440 = vmul.f32 %v3439, 0.6931472
    %v3441 = vlog2.pop %v3203
    %v3442 = vmul.f32 %v3441, 0.6931472
    %v3443 = vlog2.pop %v3204
    %v3444 = vmul.f32 %v3443, 0.6931472
    %v3445 = vlog2.pop %v3205
    %v3446 = vmul.f32 %v3445, 0.6931472
    %v3447 = vlog2.pop %v3206
    %v3448 = vmul.f32 %v3447, 0.6931472
    %v3449 = vlog2.pop %v3207
    %v3450 = vmul.f32 %v3449, 0.6931472
    %v3451 = vlog2.pop %v3208
    %v3452 = vmul.f32 %v3451, 0.6931472
    %v3453 = vlog2.pop %v3209
    %v3454 = vmul.f32 %v3453, 0.6931472
    %v3455 = vlog2.pop %v3210
    %v3456 = vmul.f32 %v3455, 0.6931472
    %v3457 = vlog2.pop %v3211
    %v3458 = vmul.f32 %v3457, 0.6931472
    %v3459 = vlog2.pop %v3212
    %v3460 = vmul.f32 %v3459, 0.6931472
    %v3461 = vlog2.pop %v3213
    %v3462 = vmul.f32 %v3461, 0.6931472
    %v3463 = vlog2.pop %v3214
    %v3464 = vmul.f32 %v3463, 0.6931472
    %v3465 = vlog2.pop %v3215
    %v3466 = vmul.f32 %v3465, 0.6931472
    %v3467 = vlog2.pop %v3216
    %v3468 = vmul.f32 %v3467, 0.6931472
    %v3469 = vlog2.pop %v3217
    %v3470 = vmul.f32 %v3469, 0.6931472
    %v3471 = vlog2.pop %v3218
    %v3472 = vmul.f32 %v3471, 0.6931472
    %v3473 = vlog2.pop %v3219
    %v3474 = vmul.f32 %v3473, 0.6931472
    %v3475 = vlog2.pop %v3220
    %v3476 = vmul.f32 %v3475, 0.6931472
    %v3477 = vsub.f32 0.0, %v3222
    %v3478 = vsub.f32 0.0, %v3224
    %v3479 = vsub.f32 0.0, %v3226
    %v3480 = vsub.f32 0.0, %v3228
    %v3481 = vsub.f32 0.0, %v3230
    %v3482 = vsub.f32 0.0, %v3232
    %v3483 = vsub.f32 0.0, %v3234
    %v3484 = vsub.f32 0.0, %v3236
    %v3485 = vsub.f32 0.0, %v3238
    %v3486 = vsub.f32 0.0, %v3240
    %v3487 = vsub.f32 0.0, %v3242
    %v3488 = vsub.f32 0.0, %v3244
    %v3489 = vsub.f32 0.0, %v3246
    %v3490 = vsub.f32 0.0, %v3248
    %v3491 = vsub.f32 0.0, %v3250
    %v3492 = vsub.f32 0.0, %v3252
    %v3493 = vsub.f32 0.0, %v3254
    %v3494 = vsub.f32 0.0, %v3256
    %v3495 = vsub.f32 0.0, %v3258
    %v3496 = vsub.f32 0.0, %v3260
    %v3497 = vsub.f32 0.0, %v3262
    %v3498 = vsub.f32 0.0, %v3264
    %v3499 = vsub.f32 0.0, %v3266
    %v3500 = vsub.f32 0.0, %v3268
    %v3501 = vsub.f32 0.0, %v3270
    %v3502 = vsub.f32 0.0, %v3272
    %v3503 = vsub.f32 0.0, %v3274
    %v3504 = vsub.f32 0.0, %v3276
    %v3505 = vsub.f32 0.0, %v3278
    %v3506 = vsub.f32 0.0, %v3280
    %v3507 = vsub.f32 0.0, %v3282
    %v3508 = vsub.f32 0.0, %v3284
    %v3509 = vsub.f32 0.0, %v3286
    %v3510 = vsub.f32 0.0, %v3288
    %v3511 = vsub.f32 0.0, %v3290
    %v3512 = vsub.f32 0.0, %v3292
    %v3513 = vsub.f32 0.0, %v3294
    %v3514 = vsub.f32 0.0, %v3296
    %v3515 = vsub.f32 0.0, %v3298
    %v3516 = vsub.f32 0.0, %v3300
    %v3517 = vsub.f32 0.0, %v3302
    %v3518 = vsub.f32 0.0, %v3304
    %v3519 = vsub.f32 0.0, %v3306
    %v3520 = vsub.f32 0.0, %v3308
    %v3521 = vsub.f32 0.0, %v3310
    %v3522 = vsub.f32 0.0, %v3312
    %v3523 = vsub.f32 0.0, %v3314
    %v3524 = vsub.f32 0.0, %v3316
    %v3525 = vsub.f32 0.0, %v3318
    %v3526 = vsub.f32 0.0, %v3320
    %v3527 = vsub.f32 0.0, %v3322
    %v3528 = vsub.f32 0.0, %v3324
    %v3529 = vsub.f32 0.0, %v3326
    %v3530 = vsub.f32 0.0, %v3328
    %v3531 = vsub.f32 0.0, %v3330
    %v3532 = vsub.f32 0.0, %v3332
    %v3533 = vsub.f32 0.0, %v3334
    %v3534 = vsub.f32 0.0, %v3336
    %v3535 = vsub.f32 0.0, %v3338
    %v3536 = vsub.f32 0.0, %v3340
    %v3537 = vsub.f32 0.0, %v3342
    %v3538 = vsub.f32 0.0, %v3344
    %v3539 = vsub.f32 0.0, %v3346
    %v3540 = vsub.f32 0.0, %v3348
    %v3541 = vsub.f32 0.0, %v3350
    %v3542 = vsub.f32 0.0, %v3352
    %v3543 = vsub.f32 0.0, %v3354
    %v3544 = vsub.f32 0.0, %v3356
    %v3545 = vsub.f32 0.0, %v3358
    %v3546 = vsub.f32 0.0, %v3360
    %v3547 = vsub.f32 0.0, %v3362
    %v3548 = vsub.f32 0.0, %v3364
    %v3549 = vsub.f32 0.0, %v3366
    %v3550 = vsub.f32 0.0, %v3368
    %v3551 = vsub.f32 0.0, %v3370
    %v3552 = vsub.f32 0.0, %v3372
    %v3553 = vsub.f32 0.0, %v3374
    %v3554 = vsub.f32 0.0, %v3376
    %v3555 = vsub.f32 0.0, %v3378
    %v3556 = vsub.f32 0.0, %v3380
    %v3557 = vsub.f32 0.0, %v3382
    %v3558 = vsub.f32 0.0, %v3384
    %v3559 = vsub.f32 0.0, %v3386
    %v3560 = vsub.f32 0.0, %v3388
    %v3561 = vsub.f32 0.0, %v3390
    %v3562 = vsub.f32 0.0, %v3392
    %v3563 = vsub.f32 0.0, %v3394
    %v3564 = vsub.f32 0.0, %v3396
    %v3565 = vsub.f32 0.0, %v3398
    %v3566 = vsub.f32 0.0, %v3400
    %v3567 = vsub.f32 0.0, %v3402
    %v3568 = vsub.f32 0.0, %v3404
    %v3569 = vsub.f32 0.0, %v3406
    %v3570 = vsub.f32 0.0, %v3408
    %v3571 = vsub.f32 0.0, %v3410
    %v3572 = vsub.f32 0.0, %v3412
    %v3573 = vsub.f32 0.0, %v3414
    %v3574 = vsub.f32 0.0, %v3416
    %v3575 = vsub.f32 0.0, %v3418
    %v3576 = vsub.f32 0.0, %v3420
    %v3577 = vsub.f32 0.0, %v3422
    %v3578 = vsub.f32 0.0, %v3424
    %v3579 = vsub.f32 0.0, %v3426
    %v3580 = vsub.f32 0.0, %v3428
    %v3581 = vsub.f32 0.0, %v3430
    %v3582 = vsub.f32 0.0, %v3432
    %v3583 = vsub.f32 0.0, %v3434
    %v3584 = vsub.f32 0.0, %v3436
    %v3585 = vsub.f32 0.0, %v3438
    %v3586 = vsub.f32 0.0, %v3440
    %v3587 = vsub.f32 0.0, %v3442
    %v3588 = vsub.f32 0.0, %v3444
    %v3589 = vsub.f32 0.0, %v3446
    %v3590 = vsub.f32 0.0, %v3448
    %v3591 = vsub.f32 0.0, %v3450
    %v3592 = vsub.f32 0.0, %v3452
    %v3593 = vsub.f32 0.0, %v3454
    %v3594 = vsub.f32 0.0, %v3456
    %v3595 = vsub.f32 0.0, %v3458
    %v3596 = vsub.f32 0.0, %v3460
    %v3597 = vsub.f32 0.0, %v3462
    %v3598 = vsub.f32 0.0, %v3464
    %v3599 = vsub.f32 0.0, %v3466
    %v3600 = vsub.f32 0.0, %v3468
    %v3601 = vsub.f32 0.0, %v3470
    %v3602 = vsub.f32 0.0, %v3472
    %v3603 = vsub.f32 0.0, %v3474
    %v3604 = vsub.f32 0.0, %v3476
    %v3605 = vmul.f32 %v2333, %v2333
    %v3606 = vmul.f32 %v2334, %v2334
    %v3607 = vmul.f32 %v2335, %v2335
    %v3608 = vmul.f32 %v2336, %v2336
    %v3609 = vmul.f32 %v2337, %v2337
    %v3610 = vmul.f32 %v2338, %v2338
    %v3611 = vmul.f32 %v2339, %v2339
    %v3612 = vmul.f32 %v2340, %v2340
    %v3613 = vmul.f32 %v2341, %v2341
    %v3614 = vmul.f32 %v2342, %v2342
    %v3615 = vmul.f32 %v2343, %v2343
    %v3616 = vmul.f32 %v2344, %v2344
    %v3617 = vmul.f32 %v2345, %v2345
    %v3618 = vmul.f32 %v2346, %v2346
    %v3619 = vmul.f32 %v2347, %v2347
    %v3620 = vmul.f32 %v2348, %v2348
    %v3621 = vmul.f32 %v2349, %v2349
    %v3622 = vmul.f32 %v2350, %v2350
    %v3623 = vmul.f32 %v2351, %v2351
    %v3624 = vmul.f32 %v2352, %v2352
    %v3625 = vmul.f32 %v2353, %v2353
    %v3626 = vmul.f32 %v2354, %v2354
    %v3627 = vmul.f32 %v2355, %v2355
    %v3628 = vmul.f32 %v2356, %v2356
    %v3629 = vmul.f32 %v2357, %v2357
    %v3630 = vmul.f32 %v2358, %v2358
    %v3631 = vmul.f32 %v2359, %v2359
    %v3632 = vmul.f32 %v2360, %v2360
    %v3633 = vmul.f32 %v2361, %v2361
    %v3634 = vmul.f32 %v2362, %v2362
    %v3635 = vmul.f32 %v2363, %v2363
    %v3636 = vmul.f32 %v2364, %v2364
    %v3637 = vmul.f32 %v2365, %v2365
    %v3638 = vmul.f32 %v2366, %v2366
    %v3639 = vmul.f32 %v2367, %v2367
    %v3640 = vmul.f32 %v2368, %v2368
    %v3641 = vmul.f32 %v2369, %v2369
    %v3642 = vmul.f32 %v2370, %v2370
    %v3643 = vmul.f32 %v2371, %v2371
    %v3644 = vmul.f32 %v2372, %v2372
    %v3645 = vmul.f32 %v2373, %v2373
    %v3646 = vmul.f32 %v2374, %v2374
    %v3647 = vmul.f32 %v2375, %v2375
    %v3648 = vmul.f32 %v2376, %v2376
    %v3649 = vmul.f32 %v2377, %v2377
    %v3650 = vmul.f32 %v2378, %v2378
    %v3651 = vmul.f32 %v2379, %v2379
    %v3652 = vmul.f32 %v2380, %v2380
    %v3653 = vmul.f32 %v2381, %v2381
    %v3654 = vmul.f32 %v2382, %v2382
    %v3655 = vmul.f32 %v2383, %v2383
    %v3656 = vmul.f32 %v2384, %v2384
    %v3657 = vmul.f32 %v2385, %v2385
    %v3658 = vmul.f32 %v2386, %v2386
    %v3659 = vmul.f32 %v2387, %v2387
    %v3660 = vmul.f32 %v2388, %v2388
    %v3661 = vmul.f32 %v2389, %v2389
    %v3662 = vmul.f32 %v2390, %v2390
    %v3663 = vmul.f32 %v2391, %v2391
    %v3664 = vmul.f32 %v2392, %v2392
    %v3665 = vmul.f32 %v2393, %v2393
    %v3666 = vmul.f32 %v2394, %v2394
    %v3667 = vmul.f32 %v2395, %v2395
    %v3668 = vmul.f32 %v2396, %v2396
    %v3669 = vmul.f32 %v2397, %v2397
    %v3670 = vmul.f32 %v2398, %v2398
    %v3671 = vmul.f32 %v2399, %v2399
    %v3672 = vmul.f32 %v2400, %v2400
    %v3673 = vmul.f32 %v2401, %v2401
    %v3674 = vmul.f32 %v2402, %v2402
    %v3675 = vmul.f32 %v2403, %v2403
    %v3676 = vmul.f32 %v2404, %v2404
    %v3677 = vmul.f32 %v2405, %v2405
    %v3678 = vmul.f32 %v2406, %v2406
    %v3679 = vmul.f32 %v2407, %v2407
    %v3680 = vmul.f32 %v2408, %v2408
    %v3681 = vmul.f32 %v2409, %v2409
    %v3682 = vmul.f32 %v2410, %v2410
    %v3683 = vmul.f32 %v2411, %v2411
    %v3684 = vmul.f32 %v2412, %v2412
    %v3685 = vmul.f32 %v2413, %v2413
    %v3686 = vmul.f32 %v2414, %v2414
    %v3687 = vmul.f32 %v2415, %v2415
    %v3688 = vmul.f32 %v2416, %v2416
    %v3689 = vmul.f32 %v2417, %v2417
    %v3690 = vmul.f32 %v2418, %v2418
    %v3691 = vmul.f32 %v2419, %v2419
    %v3692 = vmul.f32 %v2420, %v2420
    %v3693 = vmul.f32 %v2421, %v2421
    %v3694 = vmul.f32 %v2422, %v2422
    %v3695 = vmul.f32 %v2423, %v2423
    %v3696 = vmul.f32 %v2424, %v2424
    %v3697 = vmul.f32 %v2425, %v2425
    %v3698 = vmul.f32 %v2426, %v2426
    %v3699 = vmul.f32 %v2427, %v2427
    %v3700 = vmul.f32 %v2428, %v2428
    %v3701 = vmul.f32 %v2429, %v2429
    %v3702 = vmul.f32 %v2430, %v2430
    %v3703 = vmul.f32 %v2431, %v2431
    %v3704 = vmul.f32 %v2432, %v2432
    %v3705 = vmul.f32 %v2433, %v2433
    %v3706 = vmul.f32 %v2434, %v2434
    %v3707 = vmul.f32 %v2435, %v2435
    %v3708 = vmul.f32 %v2436, %v2436
    %v3709 = vmul.f32 %v2437, %v2437
    %v3710 = vmul.f32 %v2438, %v2438
    %v3711 = vmul.f32 %v2439, %v2439
    %v3712 = vmul.f32 %v2440, %v2440
    %v3713 = vmul.f32 %v2441, %v2441
    %v3714 = vmul.f32 %v2442, %v2442
    %v3715 = vmul.f32 %v2443, %v2443
    %v3716 = vmul.f32 %v2444, %v2444
    %v3717 = vmul.f32 %v2445, %v2445
    %v3718 = vmul.f32 %v2446, %v2446
    %v3719 = vmul.f32 %v2447, %v2447
    %v3720 = vmul.f32 %v2448, %v2448
    %v3721 = vmul.f32 %v2449, %v2449
    %v3722 = vmul.f32 %v2450, %v2450
    %v3723 = vmul.f32 %v2451, %v2451
    %v3724 = vmul.f32 %v2452, %v2452
    %v3725 = vmul.f32 %v2453, %v2453
    %v3726 = vmul.f32 %v2454, %v2454
    %v3727 = vmul.f32 %v2455, %v2455
    %v3728 = vmul.f32 %v2456, %v2456
    %v3729 = vmul.f32 %v2457, %v2457
    %v3730 = vmul.f32 %v2458, %v2458
    %v3731 = vmul.f32 %v2459, %v2459
    %v3732 = vmul.f32 %v2460, %v2460
    %v3733 = vmul.f32 %v221, %v221
    %v3734 = vmul.f32 %v222, %v222
    %v3735 = vmul.f32 %v223, %v223
    %v3736 = vmul.f32 %v224, %v224
    %v3737 = vmul.f32 %v225, %v225
    %v3738 = vmul.f32 %v226, %v226
    %v3739 = vmul.f32 %v227, %v227
    %v3740 = vmul.f32 %v228, %v228
    %v3741 = vmul.f32 %v229, %v229
    %v3742 = vmul.f32 %v230, %v230
    %v3743 = vmul.f32 %v231, %v231
    %v3744 = vmul.f32 %v232, %v232
    %v3745 = vmul.f32 %v233, %v233
    %v3746 = vmul.f32 %v234, %v234
    %v3747 = vmul.f32 %v235, %v235
    %v3748 = vmul.f32 %v236, %v236
    %v3749 = vmul.f32 %v237, %v237
    %v3750 = vmul.f32 %v238, %v238
    %v3751 = vmul.f32 %v239, %v239
    %v3752 = vmul.f32 %v240, %v240
    %v3753 = vmul.f32 %v241, %v241
    %v3754 = vmul.f32 %v242, %v242
    %v3755 = vmul.f32 %v243, %v243
    %v3756 = vmul.f32 %v244, %v244
    %v3757 = vmul.f32 %v245, %v245
    %v3758 = vmul.f32 %v246, %v246
    %v3759 = vmul.f32 %v247, %v247
    %v3760 = vmul.f32 %v248, %v248
    %v3761 = vmul.f32 %v249, %v249
    %v3762 = vmul.f32 %v250, %v250
    %v3763 = vmul.f32 %v251, %v251
    %v3764 = vmul.f32 %v252, %v252
    %v3765 = vmul.f32 %v253, %v253
    %v3766 = vmul.f32 %v254, %v254
    %v3767 = vmul.f32 %v255, %v255
    %v3768 = vmul.f32 %v256, %v256
    %v3769 = vmul.f32 %v257, %v257
    %v3770 = vmul.f32 %v258, %v258
    %v3771 = vmul.f32 %v259, %v259
    %v3772 = vmul.f32 %v260, %v260
    %v3773 = vmul.f32 %v261, %v261
    %v3774 = vmul.f32 %v262, %v262
    %v3775 = vmul.f32 %v263, %v263
    %v3776 = vmul.f32 %v264, %v264
    %v3777 = vmul.f32 %v265, %v265
    %v3778 = vmul.f32 %v266, %v266
    %v3779 = vmul.f32 %v267, %v267
    %v3780 = vmul.f32 %v268, %v268
    %v3781 = vmul.f32 %v269, %v269
    %v3782 = vmul.f32 %v270, %v270
    %v3783 = vmul.f32 %v271, %v271
    %v3784 = vmul.f32 %v272, %v272
    %v3785 = vmul.f32 %v273, %v273
    %v3786 = vmul.f32 %v274, %v274
    %v3787 = vmul.f32 %v275, %v275
    %v3788 = vmul.f32 %v276, %v276
    %v3789 = vmul.f32 %v277, %v277
    %v3790 = vmul.f32 %v278, %v278
    %v3791 = vmul.f32 %v279, %v279
    %v3792 = vmul.f32 %v280, %v280
    %v3793 = vmul.f32 %v281, %v281
    %v3794 = vmul.f32 %v282, %v282
    %v3795 = vmul.f32 %v283, %v283
    %v3796 = vmul.f32 %v284, %v284
    %v3797 = vmul.f32 %v285, %v285
    %v3798 = vmul.f32 %v286, %v286
    %v3799 = vmul.f32 %v287, %v287
    %v3800 = vmul.f32 %v288, %v288
    %v3801 = vmul.f32 %v289, %v289
    %v3802 = vmul.f32 %v290, %v290
    %v3803 = vmul.f32 %v291, %v291
    %v3804 = vmul.f32 %v292, %v292
    %v3805 = vmul.f32 %v293, %v293
    %v3806 = vmul.f32 %v294, %v294
    %v3807 = vmul.f32 %v295, %v295
    %v3808 = vmul.f32 %v296, %v296
    %v3809 = vmul.f32 %v297, %v297
    %v3810 = vmul.f32 %v298, %v298
    %v3811 = vmul.f32 %v299, %v299
    %v3812 = vmul.f32 %v300, %v300
    %v3813 = vmul.f32 %v301, %v301
    %v3814 = vmul.f32 %v302, %v302
    %v3815 = vmul.f32 %v303, %v303
    %v3816 = vmul.f32 %v304, %v304
    %v3817 = vmul.f32 %v305, %v305
    %v3818 = vmul.f32 %v306, %v306
    %v3819 = vmul.f32 %v307, %v307
    %v3820 = vmul.f32 %v308, %v308
    %v3821 = vmul.f32 %v309, %v309
    %v3822 = vmul.f32 %v310, %v310
    %v3823 = vmul.f32 %v311, %v311
    %v3824 = vmul.f32 %v312, %v312
    %v3825 = vmul.f32 %v313, %v313
    %v3826 = vmul.f32 %v314, %v314
    %v3827 = vmul.f32 %v315, %v315
    %v3828 = vmul.f32 %v316, %v316
    %v3829 = vmul.f32 %v317, %v317
    %v3830 = vmul.f32 %v318, %v318
    %v3831 = vmul.f32 %v319, %v319
    %v3832 = vmul.f32 %v320, %v320
    %v3833 = vmul.f32 %v321, %v321
    %v3834 = vmul.f32 %v322, %v322
    %v3835 = vmul.f32 %v323, %v323
    %v3836 = vmul.f32 %v324, %v324
    %v3837 = vmul.f32 %v325, %v325
    %v3838 = vmul.f32 %v326, %v326
    %v3839 = vmul.f32 %v327, %v327
    %v3840 = vmul.f32 %v328, %v328
    %v3841 = vmul.f32 %v329, %v329
    %v3842 = vmul.f32 %v330, %v330
    %v3843 = vmul.f32 %v331, %v331
    %v3844 = vmul.f32 %v332, %v332
    %v3845 = vmul.f32 %v333, %v333
    %v3846 = vmul.f32 %v334, %v334
    %v3847 = vmul.f32 %v335, %v335
    %v3848 = vmul.f32 %v336, %v336
    %v3849 = vmul.f32 %v337, %v337
    %v3850 = vmul.f32 %v338, %v338
    %v3851 = vmul.f32 %v339, %v339
    %v3852 = vmul.f32 %v340, %v340
    %v3853 = vmul.f32 %v341, %v341
    %v3854 = vmul.f32 %v342, %v342
    %v3855 = vmul.f32 %v343, %v343
    %v3856 = vmul.f32 %v344, %v344
    %v3857 = vmul.f32 %v345, %v345
    %v3858 = vmul.f32 %v346, %v346
    %v3859 = vmul.f32 %v347, %v347
    %v3860 = vmul.f32 %v348, %v348
    %v3861 = vadd.f32 %v3605, %v3733
    %v3862 = vadd.f32 %v3606, %v3734
    %v3863 = vadd.f32 %v3607, %v3735
    %v3864 = vadd.f32 %v3608, %v3736
    %v3865 = vadd.f32 %v3609, %v3737
    %v3866 = vadd.f32 %v3610, %v3738
    %v3867 = vadd.f32 %v3611, %v3739
    %v3868 = vadd.f32 %v3612, %v3740
    %v3869 = vadd.f32 %v3613, %v3741
    %v3870 = vadd.f32 %v3614, %v3742
    %v3871 = vadd.f32 %v3615, %v3743
    %v3872 = vadd.f32 %v3616, %v3744
    %v3873 = vadd.f32 %v3617, %v3745
    %v3874 = vadd.f32 %v3618, %v3746
    %v3875 = vadd.f32 %v3619, %v3747
    %v3876 = vadd.f32 %v3620, %v3748
    %v3877 = vadd.f32 %v3621, %v3749
    %v3878 = vadd.f32 %v3622, %v3750
    %v3879 = vadd.f32 %v3623, %v3751
    %v3880 = vadd.f32 %v3624, %v3752
    %v3881 = vadd.f32 %v3625, %v3753
    %v3882 = vadd.f32 %v3626, %v3754
    %v3883 = vadd.f32 %v3627, %v3755
    %v3884 = vadd.f32 %v3628, %v3756
    %v3885 = vadd.f32 %v3629, %v3757
    %v3886 = vadd.f32 %v3630, %v3758
    %v3887 = vadd.f32 %v3631, %v3759
    %v3888 = vadd.f32 %v3632, %v3760
    %v3889 = vadd.f32 %v3633, %v3761
    %v3890 = vadd.f32 %v3634, %v3762
    %v3891 = vadd.f32 %v3635, %v3763
    %v3892 = vadd.f32 %v3636, %v3764
    %v3893 = vadd.f32 %v3637, %v3765
    %v3894 = vadd.f32 %v3638, %v3766
    %v3895 = vadd.f32 %v3639, %v3767
    %v3896 = vadd.f32 %v3640, %v3768
    %v3897 = vadd.f32 %v3641, %v3769
    %v3898 = vadd.f32 %v3642, %v3770
    %v3899 = vadd.f32 %v3643, %v3771
    %v3900 = vadd.f32 %v3644, %v3772
    %v3901 = vadd.f32 %v3645, %v3773
    %v3902 = vadd.f32 %v3646, %v3774
    %v3903 = vadd.f32 %v3647, %v3775
    %v3904 = vadd.f32 %v3648, %v3776
    %v3905 = vadd.f32 %v3649, %v3777
    %v3906 = vadd.f32 %v3650, %v3778
    %v3907 = vadd.f32 %v3651, %v3779
    %v3908 = vadd.f32 %v3652, %v3780
    %v3909 = vadd.f32 %v3653, %v3781
    %v3910 = vadd.f32 %v3654, %v3782
    %v3911 = vadd.f32 %v3655, %v3783
    %v3912 = vadd.f32 %v3656, %v3784
    %v3913 = vadd.f32 %v3657, %v3785
    %v3914 = vadd.f32 %v3658, %v3786
    %v3915 = vadd.f32 %v3659, %v3787
    %v3916 = vadd.f32 %v3660, %v3788
    %v3917 = vadd.f32 %v3661, %v3789
    %v3918 = vadd.f32 %v3662, %v3790
    %v3919 = vadd.f32 %v3663, %v3791
    %v3920 = vadd.f32 %v3664, %v3792
    %v3921 = vadd.f32 %v3665, %v3793
    %v3922 = vadd.f32 %v3666, %v3794
    %v3923 = vadd.f32 %v3667, %v3795
    %v3924 = vadd.f32 %v3668, %v3796
    %v3925 = vadd.f32 %v3669, %v3797
    %v3926 = vadd.f32 %v3670, %v3798
    %v3927 = vadd.f32 %v3671, %v3799
    %v3928 = vadd.f32 %v3672, %v3800
    %v3929 = vadd.f32 %v3673, %v3801
    %v3930 = vadd.f32 %v3674, %v3802
    %v3931 = vadd.f32 %v3675, %v3803
    %v3932 = vadd.f32 %v3676, %v3804
    %v3933 = vadd.f32 %v3677, %v3805
    %v3934 = vadd.f32 %v3678, %v3806
    %v3935 = vadd.f32 %v3679, %v3807
    %v3936 = vadd.f32 %v3680, %v3808
    %v3937 = vadd.f32 %v3681, %v3809
    %v3938 = vadd.f32 %v3682, %v3810
    %v3939 = vadd.f32 %v3683, %v3811
    %v3940 = vadd.f32 %v3684, %v3812
    %v3941 = vadd.f32 %v3685, %v3813
    %v3942 = vadd.f32 %v3686, %v3814
    %v3943 = vadd.f32 %v3687, %v3815
    %v3944 = vadd.f32 %v3688, %v3816
    %v3945 = vadd.f32 %v3689, %v3817
    %v3946 = vadd.f32 %v3690, %v3818
    %v3947 = vadd.f32 %v3691, %v3819
    %v3948 = vadd.f32 %v3692, %v3820
    %v3949 = vadd.f32 %v3693, %v3821
    %v3950 = vadd.f32 %v3694, %v3822
    %v3951 = vadd.f32 %v3695, %v3823
    %v3952 = vadd.f32 %v3696, %v3824
    %v3953 = vadd.f32 %v3697, %v3825
    %v3954 = vadd.f32 %v3698, %v3826
    %v3955 = vadd.f32 %v3699, %v3827
    %v3956 = vadd.f32 %v3700, %v3828
    %v3957 = vadd.f32 %v3701, %v3829
    %v3958 = vadd.f32 %v3702, %v3830
    %v3959 = vadd.f32 %v3703, %v3831
    %v3960 = vadd.f32 %v3704, %v3832
    %v3961 = vadd.f32 %v3705, %v3833
    %v3962 = vadd.f32 %v3706, %v3834
    %v3963 = vadd.f32 %v3707, %v3835
    %v3964 = vadd.f32 %v3708, %v3836
    %v3965 = vadd.f32 %v3709, %v3837
    %v3966 = vadd.f32 %v3710, %v3838
    %v3967 = vadd.f32 %v3711, %v3839
    %v3968 = vadd.f32 %v3712, %v3840
    %v3969 = vadd.f32 %v3713, %v3841
    %v3970 = vadd.f32 %v3714, %v3842
    %v3971 = vadd.f32 %v3715, %v3843
    %v3972 = vadd.f32 %v3716, %v3844
    %v3973 = vadd.f32 %v3717, %v3845
    %v3974 = vadd.f32 %v3718, %v3846
    %v3975 = vadd.f32 %v3719, %v3847
    %v3976 = vadd.f32 %v3720, %v3848
    %v3977 = vadd.f32 %v3721, %v3849
    %v3978 = vadd.f32 %v3722, %v3850
    %v3979 = vadd.f32 %v3723, %v3851
    %v3980 = vadd.f32 %v3724, %v3852
    %v3981 = vadd.f32 %v3725, %v3853
    %v3982 = vadd.f32 %v3726, %v3854
    %v3983 = vadd.f32 %v3727, %v3855
    %v3984 = vadd.f32 %v3728, %v3856
    %v3985 = vadd.f32 %v3729, %v3857
    %v3986 = vadd.f32 %v3730, %v3858
    %v3987 = vadd.f32 %v3731, %v3859
    %v3988 = vadd.f32 %v3732, %v3860
    %v3989 = vmul.f32 %v3861, 0.5
    %v3990 = vmul.f32 %v3862, 0.5
    %v3991 = vmul.f32 %v3863, 0.5
    %v3992 = vmul.f32 %v3864, 0.5
    %v3993 = vmul.f32 %v3865, 0.5
    %v3994 = vmul.f32 %v3866, 0.5
    %v3995 = vmul.f32 %v3867, 0.5
    %v3996 = vmul.f32 %v3868, 0.5
    %v3997 = vmul.f32 %v3869, 0.5
    %v3998 = vmul.f32 %v3870, 0.5
    %v3999 = vmul.f32 %v3871, 0.5
    %v4000 = vmul.f32 %v3872, 0.5
    %v4001 = vmul.f32 %v3873, 0.5
    %v4002 = vmul.f32 %v3874, 0.5
    %v4003 = vmul.f32 %v3875, 0.5
    %v4004 = vmul.f32 %v3876, 0.5
    %v4005 = vmul.f32 %v3877, 0.5
    %v4006 = vmul.f32 %v3878, 0.5
    %v4007 = vmul.f32 %v3879, 0.5
    %v4008 = vmul.f32 %v3880, 0.5
    %v4009 = vmul.f32 %v3881, 0.5
    %v4010 = vmul.f32 %v3882, 0.5
    %v4011 = vmul.f32 %v3883, 0.5
    %v4012 = vmul.f32 %v3884, 0.5
    %v4013 = vmul.f32 %v3885, 0.5
    %v4014 = vmul.f32 %v3886, 0.5
    %v4015 = vmul.f32 %v3887, 0.5
    %v4016 = vmul.f32 %v3888, 0.5
    %v4017 = vmul.f32 %v3889, 0.5
    %v4018 = vmul.f32 %v3890, 0.5
    %v4019 = vmul.f32 %v3891, 0.5
    %v4020 = vmul.f32 %v3892, 0.5
    %v4021 = vmul.f32 %v3893, 0.5
    %v4022 = vmul.f32 %v3894, 0.5
    %v4023 = vmul.f32 %v3895, 0.5
    %v4024 = vmul.f32 %v3896, 0.5
    %v4025 = vmul.f32 %v3897, 0.5
    %v4026 = vmul.f32 %v3898, 0.5
    %v4027 = vmul.f32 %v3899, 0.5
    %v4028 = vmul.f32 %v3900, 0.5
    %v4029 = vmul.f32 %v3901, 0.5
    %v4030 = vmul.f32 %v3902, 0.5
    %v4031 = vmul.f32 %v3903, 0.5
    %v4032 = vmul.f32 %v3904, 0.5
    %v4033 = vmul.f32 %v3905, 0.5
    %v4034 = vmul.f32 %v3906, 0.5
    %v4035 = vmul.f32 %v3907, 0.5
    %v4036 = vmul.f32 %v3908, 0.5
    %v4037 = vmul.f32 %v3909, 0.5
    %v4038 = vmul.f32 %v3910, 0.5
    %v4039 = vmul.f32 %v3911, 0.5
    %v4040 = vmul.f32 %v3912, 0.5
    %v4041 = vmul.f32 %v3913, 0.5
    %v4042 = vmul.f32 %v3914, 0.5
    %v4043 = vmul.f32 %v3915, 0.5
    %v4044 = vmul.f32 %v3916, 0.5
    %v4045 = vmul.f32 %v3917, 0.5
    %v4046 = vmul.f32 %v3918, 0.5
    %v4047 = vmul.f32 %v3919, 0.5
    %v4048 = vmul.f32 %v3920, 0.5
    %v4049 = vmul.f32 %v3921, 0.5
    %v4050 = vmul.f32 %v3922, 0.5
    %v4051 = vmul.f32 %v3923, 0.5
    %v4052 = vmul.f32 %v3924, 0.5
    %v4053 = vmul.f32 %v3925, 0.5
    %v4054 = vmul.f32 %v3926, 0.5
    %v4055 = vmul.f32 %v3927, 0.5
    %v4056 = vmul.f32 %v3928, 0.5
    %v4057 = vmul.f32 %v3929, 0.5
    %v4058 = vmul.f32 %v3930, 0.5
    %v4059 = vmul.f32 %v3931, 0.5
    %v4060 = vmul.f32 %v3932, 0.5
    %v4061 = vmul.f32 %v3933, 0.5
    %v4062 = vmul.f32 %v3934, 0.5
    %v4063 = vmul.f32 %v3935, 0.5
    %v4064 = vmul.f32 %v3936, 0.5
    %v4065 = vmul.f32 %v3937, 0.5
    %v4066 = vmul.f32 %v3938, 0.5
    %v4067 = vmul.f32 %v3939, 0.5
    %v4068 = vmul.f32 %v3940, 0.5
    %v4069 = vmul.f32 %v3941, 0.5
    %v4070 = vmul.f32 %v3942, 0.5
    %v4071 = vmul.f32 %v3943, 0.5
    %v4072 = vmul.f32 %v3944, 0.5
    %v4073 = vmul.f32 %v3945, 0.5
    %v4074 = vmul.f32 %v3946, 0.5
    %v4075 = vmul.f32 %v3947, 0.5
    %v4076 = vmul.f32 %v3948, 0.5
    %v4077 = vmul.f32 %v3949, 0.5
    %v4078 = vmul.f32 %v3950, 0.5
    %v4079 = vmul.f32 %v3951, 0.5
    %v4080 = vmul.f32 %v3952, 0.5
    %v4081 = vmul.f32 %v3953, 0.5
    %v4082 = vmul.f32 %v3954, 0.5
    %v4083 = vmul.f32 %v3955, 0.5
    %v4084 = vmul.f32 %v3956, 0.5
    %v4085 = vmul.f32 %v3957, 0.5
    %v4086 = vmul.f32 %v3958, 0.5
    %v4087 = vmul.f32 %v3959, 0.5
    %v4088 = vmul.f32 %v3960, 0.5
    %v4089 = vmul.f32 %v3961, 0.5
    %v4090 = vmul.f32 %v3962, 0.5
    %v4091 = vmul.f32 %v3963, 0.5
    %v4092 = vmul.f32 %v3964, 0.5
    %v4093 = vmul.f32 %v3965, 0.5
    %v4094 = vmul.f32 %v3966, 0.5
    %v4095 = vmul.f32 %v3967, 0.5
    %v4096 = vmul.f32 %v3968, 0.5
    %v4097 = vmul.f32 %v3969, 0.5
    %v4098 = vmul.f32 %v3970, 0.5
    %v4099 = vmul.f32 %v3971, 0.5
    %v4100 = vmul.f32 %v3972, 0.5
    %v4101 = vmul.f32 %v3973, 0.5
    %v4102 = vmul.f32 %v3974, 0.5
    %v4103 = vmul.f32 %v3975, 0.5
    %v4104 = vmul.f32 %v3976, 0.5
    %v4105 = vmul.f32 %v3977, 0.5
    %v4106 = vmul.f32 %v3978, 0.5
    %v4107 = vmul.f32 %v3979, 0.5
    %v4108 = vmul.f32 %v3980, 0.5
    %v4109 = vmul.f32 %v3981, 0.5
    %v4110 = vmul.f32 %v3982, 0.5
    %v4111 = vmul.f32 %v3983, 0.5
    %v4112 = vmul.f32 %v3984, 0.5
    %v4113 = vmul.f32 %v3985, 0.5
    %v4114 = vmul.f32 %v3986, 0.5
    %v4115 = vmul.f32 %v3987, 0.5
    %v4116 = vmul.f32 %v3988, 0.5
    %v4117 = vadd.f32 %v3477, %v3989
    %v4118 = vadd.f32 %v3478, %v3990
    %v4119 = vadd.f32 %v3479, %v3991
    %v4120 = vadd.f32 %v3480, %v3992
    %v4121 = vadd.f32 %v3481, %v3993
    %v4122 = vadd.f32 %v3482, %v3994
    %v4123 = vadd.f32 %v3483, %v3995
    %v4124 = vadd.f32 %v3484, %v3996
    %v4125 = vadd.f32 %v3485, %v3997
    %v4126 = vadd.f32 %v3486, %v3998
    %v4127 = vadd.f32 %v3487, %v3999
    %v4128 = vadd.f32 %v3488, %v4000
    %v4129 = vadd.f32 %v3489, %v4001
    %v4130 = vadd.f32 %v3490, %v4002
    %v4131 = vadd.f32 %v3491, %v4003
    %v4132 = vadd.f32 %v3492, %v4004
    %v4133 = vadd.f32 %v3493, %v4005
    %v4134 = vadd.f32 %v3494, %v4006
    %v4135 = vadd.f32 %v3495, %v4007
    %v4136 = vadd.f32 %v3496, %v4008
    %v4137 = vadd.f32 %v3497, %v4009
    %v4138 = vadd.f32 %v3498, %v4010
    %v4139 = vadd.f32 %v3499, %v4011
    %v4140 = vadd.f32 %v3500, %v4012
    %v4141 = vadd.f32 %v3501, %v4013
    %v4142 = vadd.f32 %v3502, %v4014
    %v4143 = vadd.f32 %v3503, %v4015
    %v4144 = vadd.f32 %v3504, %v4016
    %v4145 = vadd.f32 %v3505, %v4017
    %v4146 = vadd.f32 %v3506, %v4018
    %v4147 = vadd.f32 %v3507, %v4019
    %v4148 = vadd.f32 %v3508, %v4020
    %v4149 = vadd.f32 %v3509, %v4021
    %v4150 = vadd.f32 %v3510, %v4022
    %v4151 = vadd.f32 %v3511, %v4023
    %v4152 = vadd.f32 %v3512, %v4024
    %v4153 = vadd.f32 %v3513, %v4025
    %v4154 = vadd.f32 %v3514, %v4026
    %v4155 = vadd.f32 %v3515, %v4027
    %v4156 = vadd.f32 %v3516, %v4028
    %v4157 = vadd.f32 %v3517, %v4029
    %v4158 = vadd.f32 %v3518, %v4030
    %v4159 = vadd.f32 %v3519, %v4031
    %v4160 = vadd.f32 %v3520, %v4032
    %v4161 = vadd.f32 %v3521, %v4033
    %v4162 = vadd.f32 %v3522, %v4034
    %v4163 = vadd.f32 %v3523, %v4035
    %v4164 = vadd.f32 %v3524, %v4036
    %v4165 = vadd.f32 %v3525, %v4037
    %v4166 = vadd.f32 %v3526, %v4038
    %v4167 = vadd.f32 %v3527, %v4039
    %v4168 = vadd.f32 %v3528, %v4040
    %v4169 = vadd.f32 %v3529, %v4041
    %v4170 = vadd.f32 %v3530, %v4042
    %v4171 = vadd.f32 %v3531, %v4043
    %v4172 = vadd.f32 %v3532, %v4044
    %v4173 = vadd.f32 %v3533, %v4045
    %v4174 = vadd.f32 %v3534, %v4046
    %v4175 = vadd.f32 %v3535, %v4047
    %v4176 = vadd.f32 %v3536, %v4048
    %v4177 = vadd.f32 %v3537, %v4049
    %v4178 = vadd.f32 %v3538, %v4050
    %v4179 = vadd.f32 %v3539, %v4051
    %v4180 = vadd.f32 %v3540, %v4052
    %v4181 = vadd.f32 %v3541, %v4053
    %v4182 = vadd.f32 %v3542, %v4054
    %v4183 = vadd.f32 %v3543, %v4055
    %v4184 = vadd.f32 %v3544, %v4056
    %v4185 = vadd.f32 %v3545, %v4057
    %v4186 = vadd.f32 %v3546, %v4058
    %v4187 = vadd.f32 %v3547, %v4059
    %v4188 = vadd.f32 %v3548, %v4060
    %v4189 = vadd.f32 %v3549, %v4061
    %v4190 = vadd.f32 %v3550, %v4062
    %v4191 = vadd.f32 %v3551, %v4063
    %v4192 = vadd.f32 %v3552, %v4064
    %v4193 = vadd.f32 %v3553, %v4065
    %v4194 = vadd.f32 %v3554, %v4066
    %v4195 = vadd.f32 %v3555, %v4067
    %v4196 = vadd.f32 %v3556, %v4068
    %v4197 = vadd.f32 %v3557, %v4069
    %v4198 = vadd.f32 %v3558, %v4070
    %v4199 = vadd.f32 %v3559, %v4071
    %v4200 = vadd.f32 %v3560, %v4072
    %v4201 = vadd.f32 %v3561, %v4073
    %v4202 = vadd.f32 %v3562, %v4074
    %v4203 = vadd.f32 %v3563, %v4075
    %v4204 = vadd.f32 %v3564, %v4076
    %v4205 = vadd.f32 %v3565, %v4077
    %v4206 = vadd.f32 %v3566, %v4078
    %v4207 = vadd.f32 %v3567, %v4079
    %v4208 = vadd.f32 %v3568, %v4080
    %v4209 = vadd.f32 %v3569, %v4081
    %v4210 = vadd.f32 %v3570, %v4082
    %v4211 = vadd.f32 %v3571, %v4083
    %v4212 = vadd.f32 %v3572, %v4084
    %v4213 = vadd.f32 %v3573, %v4085
    %v4214 = vadd.f32 %v3574, %v4086
    %v4215 = vadd.f32 %v3575, %v4087
    %v4216 = vadd.f32 %v3576, %v4088
    %v4217 = vadd.f32 %v3577, %v4089
    %v4218 = vadd.f32 %v3578, %v4090
    %v4219 = vadd.f32 %v3579, %v4091
    %v4220 = vadd.f32 %v3580, %v4092
    %v4221 = vadd.f32 %v3581, %v4093
    %v4222 = vadd.f32 %v3582, %v4094
    %v4223 = vadd.f32 %v3583, %v4095
    %v4224 = vadd.f32 %v3584, %v4096
    %v4225 = vadd.f32 %v3585, %v4097
    %v4226 = vadd.f32 %v3586, %v4098
    %v4227 = vadd.f32 %v3587, %v4099
    %v4228 = vadd.f32 %v3588, %v4100
    %v4229 = vadd.f32 %v3589, %v4101
    %v4230 = vadd.f32 %v3590, %v4102
    %v4231 = vadd.f32 %v3591, %v4103
    %v4232 = vadd.f32 %v3592, %v4104
    %v4233 = vadd.f32 %v3593, %v4105
    %v4234 = vadd.f32 %v3594, %v4106
    %v4235 = vadd.f32 %v3595, %v4107
    %v4236 = vadd.f32 %v3596, %v4108
    %v4237 = vadd.f32 %v3597, %v4109
    %v4238 = vadd.f32 %v3598, %v4110
    %v4239 = vadd.f32 %v3599, %v4111
    %v4240 = vadd.f32 %v3600, %v4112
    %v4241 = vadd.f32 %v3601, %v4113
    %v4242 = vadd.f32 %v3602, %v4114
    %v4243 = vadd.f32 %v3603, %v4115
    %v4244 = vadd.f32 %v3604, %v4116
    %v4245 = vsub.f32 %v4117, 0.5
    %v4246 = vsub.f32 %v4118, 0.5
    %v4247 = vsub.f32 %v4119, 0.5
    %v4248 = vsub.f32 %v4120, 0.5
    %v4249 = vsub.f32 %v4121, 0.5
    %v4250 = vsub.f32 %v4122, 0.5
    %v4251 = vsub.f32 %v4123, 0.5
    %v4252 = vsub.f32 %v4124, 0.5
    %v4253 = vsub.f32 %v4125, 0.5
    %v4254 = vsub.f32 %v4126, 0.5
    %v4255 = vsub.f32 %v4127, 0.5
    %v4256 = vsub.f32 %v4128, 0.5
    %v4257 = vsub.f32 %v4129, 0.5
    %v4258 = vsub.f32 %v4130, 0.5
    %v4259 = vsub.f32 %v4131, 0.5
    %v4260 = vsub.f32 %v4132, 0.5
    %v4261 = vsub.f32 %v4133, 0.5
    %v4262 = vsub.f32 %v4134, 0.5
    %v4263 = vsub.f32 %v4135, 0.5
    %v4264 = vsub.f32 %v4136, 0.5
    %v4265 = vsub.f32 %v4137, 0.5
    %v4266 = vsub.f32 %v4138, 0.5
    %v4267 = vsub.f32 %v4139, 0.5
    %v4268 = vsub.f32 %v4140, 0.5
    %v4269 = vsub.f32 %v4141, 0.5
    %v4270 = vsub.f32 %v4142, 0.5
    %v4271 = vsub.f32 %v4143, 0.5
    %v4272 = vsub.f32 %v4144, 0.5
    %v4273 = vsub.f32 %v4145, 0.5
    %v4274 = vsub.f32 %v4146, 0.5
    %v4275 = vsub.f32 %v4147, 0.5
    %v4276 = vsub.f32 %v4148, 0.5
    %v4277 = vsub.f32 %v4149, 0.5
    %v4278 = vsub.f32 %v4150, 0.5
    %v4279 = vsub.f32 %v4151, 0.5
    %v4280 = vsub.f32 %v4152, 0.5
    %v4281 = vsub.f32 %v4153, 0.5
    %v4282 = vsub.f32 %v4154, 0.5
    %v4283 = vsub.f32 %v4155, 0.5
    %v4284 = vsub.f32 %v4156, 0.5
    %v4285 = vsub.f32 %v4157, 0.5
    %v4286 = vsub.f32 %v4158, 0.5
    %v4287 = vsub.f32 %v4159, 0.5
    %v4288 = vsub.f32 %v4160, 0.5
    %v4289 = vsub.f32 %v4161, 0.5
    %v4290 = vsub.f32 %v4162, 0.5
    %v4291 = vsub.f32 %v4163, 0.5
    %v4292 = vsub.f32 %v4164, 0.5
    %v4293 = vsub.f32 %v4165, 0.5
    %v4294 = vsub.f32 %v4166, 0.5
    %v4295 = vsub.f32 %v4167, 0.5
    %v4296 = vsub.f32 %v4168, 0.5
    %v4297 = vsub.f32 %v4169, 0.5
    %v4298 = vsub.f32 %v4170, 0.5
    %v4299 = vsub.f32 %v4171, 0.5
    %v4300 = vsub.f32 %v4172, 0.5
    %v4301 = vsub.f32 %v4173, 0.5
    %v4302 = vsub.f32 %v4174, 0.5
    %v4303 = vsub.f32 %v4175, 0.5
    %v4304 = vsub.f32 %v4176, 0.5
    %v4305 = vsub.f32 %v4177, 0.5
    %v4306 = vsub.f32 %v4178, 0.5
    %v4307 = vsub.f32 %v4179, 0.5
    %v4308 = vsub.f32 %v4180, 0.5
    %v4309 = vsub.f32 %v4181, 0.5
    %v4310 = vsub.f32 %v4182, 0.5
    %v4311 = vsub.f32 %v4183, 0.5
    %v4312 = vsub.f32 %v4184, 0.5
    %v4313 = vsub.f32 %v4185, 0.5
    %v4314 = vsub.f32 %v4186, 0.5
    %v4315 = vsub.f32 %v4187, 0.5
    %v4316 = vsub.f32 %v4188, 0.5
    %v4317 = vsub.f32 %v4189, 0.5
    %v4318 = vsub.f32 %v4190, 0.5
    %v4319 = vsub.f32 %v4191, 0.5
    %v4320 = vsub.f32 %v4192, 0.5
    %v4321 = vsub.f32 %v4193, 0.5
    %v4322 = vsub.f32 %v4194, 0.5
    %v4323 = vsub.f32 %v4195, 0.5
    %v4324 = vsub.f32 %v4196, 0.5
    %v4325 = vsub.f32 %v4197, 0.5
    %v4326 = vsub.f32 %v4198, 0.5
    %v4327 = vsub.f32 %v4199, 0.5
    %v4328 = vsub.f32 %v4200, 0.5
    %v4329 = vsub.f32 %v4201, 0.5
    %v4330 = vsub.f32 %v4202, 0.5
    %v4331 = vsub.f32 %v4203, 0.5
    %v4332 = vsub.f32 %v4204, 0.5
    %v4333 = vsub.f32 %v4205, 0.5
    %v4334 = vsub.f32 %v4206, 0.5
    %v4335 = vsub.f32 %v4207, 0.5
    %v4336 = vsub.f32 %v4208, 0.5
    %v4337 = vsub.f32 %v4209, 0.5
    %v4338 = vsub.f32 %v4210, 0.5
    %v4339 = vsub.f32 %v4211, 0.5
    %v4340 = vsub.f32 %v4212, 0.5
    %v4341 = vsub.f32 %v4213, 0.5
    %v4342 = vsub.f32 %v4214, 0.5
    %v4343 = vsub.f32 %v4215, 0.5
    %v4344 = vsub.f32 %v4216, 0.5
    %v4345 = vsub.f32 %v4217, 0.5
    %v4346 = vsub.f32 %v4218, 0.5
    %v4347 = vsub.f32 %v4219, 0.5
    %v4348 = vsub.f32 %v4220, 0.5
    %v4349 = vsub.f32 %v4221, 0.5
    %v4350 = vsub.f32 %v4222, 0.5
    %v4351 = vsub.f32 %v4223, 0.5
    %v4352 = vsub.f32 %v4224, 0.5
    %v4353 = vsub.f32 %v4225, 0.5
    %v4354 = vsub.f32 %v4226, 0.5
    %v4355 = vsub.f32 %v4227, 0.5
    %v4356 = vsub.f32 %v4228, 0.5
    %v4357 = vsub.f32 %v4229, 0.5
    %v4358 = vsub.f32 %v4230, 0.5
    %v4359 = vsub.f32 %v4231, 0.5
    %v4360 = vsub.f32 %v4232, 0.5
    %v4361 = vsub.f32 %v4233, 0.5
    %v4362 = vsub.f32 %v4234, 0.5
    %v4363 = vsub.f32 %v4235, 0.5
    %v4364 = vsub.f32 %v4236, 0.5
    %v4365 = vsub.f32 %v4237, 0.5
    %v4366 = vsub.f32 %v4238, 0.5
    %v4367 = vsub.f32 %v4239, 0.5
    %v4368 = vsub.f32 %v4240, 0.5
    %v4369 = vsub.f32 %v4241, 0.5
    %v4370 = vsub.f32 %v4242, 0.5
    %v4371 = vsub.f32 %v4243, 0.5
    %v4372 = vsub.f32 %v4244, 0.5
    %v4373 = vadd.f32 %v4245, %v4246
    %v4374 = vadd.f32 %v4373, %v4247
    %v4375 = vadd.f32 %v4374, %v4248
    %v4376 = vadd.f32 %v4375, %v4249
    %v4377 = vadd.f32 %v4376, %v4250
    %v4378 = vadd.f32 %v4377, %v4251
    %v4379 = vadd.f32 %v4378, %v4252
    %v4380 = vadd.f32 %v4379, %v4253
    %v4381 = vadd.f32 %v4380, %v4254
    %v4382 = vadd.f32 %v4381, %v4255
    %v4383 = vadd.f32 %v4382, %v4256
    %v4384 = vadd.f32 %v4383, %v4257
    %v4385 = vadd.f32 %v4384, %v4258
    %v4386 = vadd.f32 %v4385, %v4259
    %v4387 = vadd.f32 %v4386, %v4260
    %v4388 = vadd.f32 %v4387, %v4261
    %v4389 = vadd.f32 %v4388, %v4262
    %v4390 = vadd.f32 %v4389, %v4263
    %v4391 = vadd.f32 %v4390, %v4264
    %v4392 = vadd.f32 %v4391, %v4265
    %v4393 = vadd.f32 %v4392, %v4266
    %v4394 = vadd.f32 %v4393, %v4267
    %v4395 = vadd.f32 %v4394, %v4268
    %v4396 = vadd.f32 %v4395, %v4269
    %v4397 = vadd.f32 %v4396, %v4270
    %v4398 = vadd.f32 %v4397, %v4271
    %v4399 = vadd.f32 %v4398, %v4272
    %v4400 = vadd.f32 %v4399, %v4273
    %v4401 = vadd.f32 %v4400, %v4274
    %v4402 = vadd.f32 %v4401, %v4275
    %v4403 = vadd.f32 %v4402, %v4276
    %v4404 = vadd.f32 %v4403, %v4277
    %v4405 = vadd.f32 %v4404, %v4278
    %v4406 = vadd.f32 %v4405, %v4279
    %v4407 = vadd.f32 %v4406, %v4280
    %v4408 = vadd.f32 %v4407, %v4281
    %v4409 = vadd.f32 %v4408, %v4282
    %v4410 = vadd.f32 %v4409, %v4283
    %v4411 = vadd.f32 %v4410, %v4284
    %v4412 = vadd.f32 %v4411, %v4285
    %v4413 = vadd.f32 %v4412, %v4286
    %v4414 = vadd.f32 %v4413, %v4287
    %v4415 = vadd.f32 %v4414, %v4288
    %v4416 = vadd.f32 %v4415, %v4289
    %v4417 = vadd.f32 %v4416, %v4290
    %v4418 = vadd.f32 %v4417, %v4291
    %v4419 = vadd.f32 %v4418, %v4292
    %v4420 = vadd.f32 %v4419, %v4293
    %v4421 = vadd.f32 %v4420, %v4294
    %v4422 = vadd.f32 %v4421, %v4295
    %v4423 = vadd.f32 %v4422, %v4296
    %v4424 = vadd.f32 %v4423, %v4297
    %v4425 = vadd.f32 %v4424, %v4298
    %v4426 = vadd.f32 %v4425, %v4299
    %v4427 = vadd.f32 %v4426, %v4300
    %v4428 = vadd.f32 %v4427, %v4301
    %v4429 = vadd.f32 %v4428, %v4302
    %v4430 = vadd.f32 %v4429, %v4303
    %v4431 = vadd.f32 %v4430, %v4304
    %v4432 = vadd.f32 %v4431, %v4305
    %v4433 = vadd.f32 %v4432, %v4306
    %v4434 = vadd.f32 %v4433, %v4307
    %v4435 = vadd.f32 %v4434, %v4308
    %v4436 = vadd.f32 %v4435, %v4309
    %v4437 = vadd.f32 %v4436, %v4310
    %v4438 = vadd.f32 %v4437, %v4311
    %v4439 = vadd.f32 %v4438, %v4312
    %v4440 = vadd.f32 %v4439, %v4313
    %v4441 = vadd.f32 %v4440, %v4314
    %v4442 = vadd.f32 %v4441, %v4315
    %v4443 = vadd.f32 %v4442, %v4316
    %v4444 = vadd.f32 %v4443, %v4317
    %v4445 = vadd.f32 %v4444, %v4318
    %v4446 = vadd.f32 %v4445, %v4319
    %v4447 = vadd.f32 %v4446, %v4320
    %v4448 = vadd.f32 %v4447, %v4321
    %v4449 = vadd.f32 %v4448, %v4322
    %v4450 = vadd.f32 %v4449, %v4323
    %v4451 = vadd.f32 %v4450, %v4324
    %v4452 = vadd.f32 %v4451, %v4325
    %v4453 = vadd.f32 %v4452, %v4326
    %v4454 = vadd.f32 %v4453, %v4327
    %v4455 = vadd.f32 %v4454, %v4328
    %v4456 = vadd.f32 %v4455, %v4329
    %v4457 = vadd.f32 %v4456, %v4330
    %v4458 = vadd.f32 %v4457, %v4331
    %v4459 = vadd.f32 %v4458, %v4332
    %v4460 = vadd.f32 %v4459, %v4333
    %v4461 = vadd.f32 %v4460, %v4334
    %v4462 = vadd.f32 %v4461, %v4335
    %v4463 = vadd.f32 %v4462, %v4336
    %v4464 = vadd.f32 %v4463, %v4337
    %v4465 = vadd.f32 %v4464, %v4338
    %v4466 = vadd.f32 %v4465, %v4339
    %v4467 = vadd.f32 %v4466, %v4340
    %v4468 = vadd.f32 %v4467, %v4341
    %v4469 = vadd.f32 %v4468, %v4342
    %v4470 = vadd.f32 %v4469, %v4343
    %v4471 = vadd.f32 %v4470, %v4344
    %v4472 = vadd.f32 %v4471, %v4345
    %v4473 = vadd.f32 %v4472, %v4346
    %v4474 = vadd.f32 %v4473, %v4347
    %v4475 = vadd.f32 %v4474, %v4348
    %v4476 = vadd.f32 %v4475, %v4349
    %v4477 = vadd.f32 %v4476, %v4350
    %v4478 = vadd.f32 %v4477, %v4351
    %v4479 = vadd.f32 %v4478, %v4352
    %v4480 = vadd.f32 %v4479, %v4353
    %v4481 = vadd.f32 %v4480, %v4354
    %v4482 = vadd.f32 %v4481, %v4355
    %v4483 = vadd.f32 %v4482, %v4356
    %v4484 = vadd.f32 %v4483, %v4357
    %v4485 = vadd.f32 %v4484, %v4358
    %v4486 = vadd.f32 %v4485, %v4359
    %v4487 = vadd.f32 %v4486, %v4360
    %v4488 = vadd.f32 %v4487, %v4361
    %v4489 = vadd.f32 %v4488, %v4362
    %v4490 = vadd.f32 %v4489, %v4363
    %v4491 = vadd.f32 %v4490, %v4364
    %v4492 = vadd.f32 %v4491, %v4365
    %v4493 = vadd.f32 %v4492, %v4366
    %v4494 = vadd.f32 %v4493, %v4367
    %v4495 = vadd.f32 %v4494, %v4368
    %v4496 = vadd.f32 %v4495, %v4369
    %v4497 = vadd.f32 %v4496, %v4370
    %v4498 = vadd.f32 %v4497, %v4371
    %v4499 = vadd.f32 %v4498, %v4372
    %4500 = vadd.xlane.f32.xlu0 %v4499
    %v4501 = vpop.xlane.xlu0 %4500
    %v4502 = vrot.slane %v4501, 4
    %v4503 = vadd.f32 %v4501, %v4502
    %v4504 = vrot.slane %v4503, 2
    %v4505 = vadd.f32 %v4503, %v4504
    %v4506 = vrot.slane %v4505, 1
    %v4507 = vadd.f32 %v4505, %v4506
    %s4508 = vtos %v4507
    %v4509 = vstv %s4508
    %v4510 = vadd.f32 %v4509, 0.0
    %v4511 = vmax.f32 %v2927, 1e-30
    %v4512 = vlog2.pop %v4511
    %v4513 = vmul.f32 %v4512, 0.6931472
    %v4514 = vsub.f32 0.0, %v4513
    %v4515 = vmul.f32 %v2927, %v2927
    %v4516 = vmul.f32 %v2910, %v2910
    %v4517 = vadd.f32 %v4515, %v4516
    %v4518 = vmul.f32 %v4517, 0.5
    %v4519 = vadd.f32 %v4514, %v4518
    %v4520 = vsub.f32 %v4519, 0.5
    %v4522 = vlaneseq
    %v4523 = vshrl.u32 %v4522, 7
    %v4524 = vsub.s32 0, %v4523
    %v4525 = vrot.slane %v4520, %v4524
    %v4526 = vlaneseq
    %v4527 = vshrl.u32 %v4526, 7
    %v4528 = vsub.s32 2, %v4527
    %v4529 = vrot.slane %v4520, %v4528
    %vm4532 = vcmask 1040384
    %v4533 = vsel %vm4532, %v4525, 0.0
    %v4534 = vsel %vm4532, %v4529, 0.0
    %v4535 = vadd.f32 %v4533, %v4534
    %4536 = vadd.xlane.f32.xlu0 %v4535
    %v4537 = vpop.xlane.xlu0 %4536
    %v4538 = vrot.slane %v4537, 4
    %v4539 = vadd.f32 %v4537, %v4538
    %v4540 = vrot.slane %v4539, 2
    %v4541 = vadd.f32 %v4539, %v4540
    %v4542 = vrot.slane %v4541, 1
    %v4543 = vadd.f32 %v4541, %v4542
    %s4544 = vtos %v4543
    %v4545 = vstv %s4544
    %v4546 = vadd.f32 %v4510, %v4545
    %v4547 = vld [vmem:[#allocation11] sm:$0xf]
    %v4548 = vld [vmem:[#allocation11 + $0x4] sm:$0xf]
    %v4549 = vld [vmem:[#allocation11 + $0x8] sm:$0xf]
    %v4550 = vld [vmem:[#allocation11 + $0xc] sm:$0xf]
    %v4551 = vld [vmem:[#allocation11 + $0x10] sm:$0xf]
    %v4552 = vld [vmem:[#allocation11 + $0x14] sm:$0xf]
    %v4553 = vld [vmem:[#allocation11 + $0x18] sm:$0xf]
    %v4554 = vld [vmem:[#allocation11 + $0x1c] sm:$0xf]
    %v4555 = vld [vmem:[#allocation11 + $0x20] sm:$0xf]
    %v4556 = vld [vmem:[#allocation11 + $0x24] sm:$0xf]
    %v4557 = vld [vmem:[#allocation11 + $0x28] sm:$0xf]
    %v4558 = vld [vmem:[#allocation11 + $0x2c] sm:$0xf]
    %v4559 = vld [vmem:[#allocation11 + $0x30] sm:$0xf]
    %v4560 = vld [vmem:[#allocation11 + $0x34] sm:$0xf]
    %v4561 = vld [vmem:[#allocation11 + $0x38] sm:$0xf]
    %v4562 = vld [vmem:[#allocation11 + $0x3c] sm:$0xf]
    %v4563 = vld [vmem:[#allocation11 + $0x40] sm:$0xf]
    %v4564 = vld [vmem:[#allocation11 + $0x44] sm:$0xf]
    %v4565 = vld [vmem:[#allocation11 + $0x48] sm:$0xf]
    %v4566 = vld [vmem:[#allocation11 + $0x4c] sm:$0xf]
    %v4567 = vld [vmem:[#allocation11 + $0x50] sm:$0xf]
    %v4568 = vld [vmem:[#allocation11 + $0x54] sm:$0xf]
    %v4569 = vld [vmem:[#allocation11 + $0x58] sm:$0xf]
    %v4570 = vld [vmem:[#allocation11 + $0x5c] sm:$0xf]
    %v4571 = vld [vmem:[#allocation11 + $0x60] sm:$0xf]
    %v4572 = vld [vmem:[#allocation11 + $0x64] sm:$0xf]
    %v4573 = vld [vmem:[#allocation11 + $0x68] sm:$0xf]
    %v4574 = vld [vmem:[#allocation11 + $0x6c] sm:$0xf]
    %v4575 = vld [vmem:[#allocation11 + $0x70] sm:$0xf]
    %v4576 = vld [vmem:[#allocation11 + $0x74] sm:$0xf]
    %v4577 = vld [vmem:[#allocation11 + $0x78] sm:$0xf]
    %v4578 = vld [vmem:[#allocation11 + $0x7c] sm:$0xf]
    %v4579 = vunpack.c.l.bf16 %v4547
    %v4580 = vunpack.c.l.bf16 %v4548
    %v4581 = vunpack.c.l.bf16 %v4549
    %v4582 = vunpack.c.l.bf16 %v4550
    %v4583 = vunpack.c.l.bf16 %v4551
    %v4584 = vunpack.c.l.bf16 %v4552
    %v4585 = vunpack.c.l.bf16 %v4553
    %v4586 = vunpack.c.l.bf16 %v4554
    %v4587 = vunpack.c.l.bf16 %v4555
    %v4588 = vunpack.c.l.bf16 %v4556
    %v4589 = vunpack.c.l.bf16 %v4557
    %v4590 = vunpack.c.l.bf16 %v4558
    %v4591 = vunpack.c.l.bf16 %v4559
    %v4592 = vunpack.c.l.bf16 %v4560
    %v4593 = vunpack.c.l.bf16 %v4561
    %v4594 = vunpack.c.l.bf16 %v4562
    %v4595 = vunpack.c.l.bf16 %v4563
    %v4596 = vunpack.c.l.bf16 %v4564
    %v4597 = vunpack.c.l.bf16 %v4565
    %v4598 = vunpack.c.l.bf16 %v4566
    %v4599 = vunpack.c.l.bf16 %v4567
    %v4600 = vunpack.c.l.bf16 %v4568
    %v4601 = vunpack.c.l.bf16 %v4569
    %v4602 = vunpack.c.l.bf16 %v4570
    %v4603 = vunpack.c.l.bf16 %v4571
    %v4604 = vunpack.c.l.bf16 %v4572
    %v4605 = vunpack.c.l.bf16 %v4573
    %v4606 = vunpack.c.l.bf16 %v4574
    %v4607 = vunpack.c.l.bf16 %v4575
    %v4608 = vunpack.c.l.bf16 %v4576
    %v4609 = vunpack.c.l.bf16 %v4577
    %v4610 = vunpack.c.l.bf16 %v4578
    %v4611 = vld [vmem:[#allocation13] sm:$0xf]
    %v4612 = vld [vmem:[#allocation13 + $0x4] sm:$0xf]
    %v4613 = vld [vmem:[#allocation13 + $0x8] sm:$0xf]
    %v4614 = vld [vmem:[#allocation13 + $0xc] sm:$0xf]
    %v4615 = vld [vmem:[#allocation13 + $0x10] sm:$0xf]
    %v4616 = vld [vmem:[#allocation13 + $0x14] sm:$0xf]
    %v4617 = vld [vmem:[#allocation13 + $0x18] sm:$0xf]
    %v4618 = vld [vmem:[#allocation13 + $0x1c] sm:$0xf]
    %v4619 = vld [vmem:[#allocation13 + $0x20] sm:$0xf]
    %v4620 = vld [vmem:[#allocation13 + $0x24] sm:$0xf]
    %v4621 = vld [vmem:[#allocation13 + $0x28] sm:$0xf]
    %v4622 = vld [vmem:[#allocation13 + $0x2c] sm:$0xf]
    %v4623 = vld [vmem:[#allocation13 + $0x30] sm:$0xf]
    %v4624 = vld [vmem:[#allocation13 + $0x34] sm:$0xf]
    %v4625 = vld [vmem:[#allocation13 + $0x38] sm:$0xf]
    %v4626 = vld [vmem:[#allocation13 + $0x3c] sm:$0xf]
    %v4627 = vld [vmem:[#allocation13 + $0x40] sm:$0xf]
    %v4628 = vld [vmem:[#allocation13 + $0x44] sm:$0xf]
    %v4629 = vld [vmem:[#allocation13 + $0x48] sm:$0xf]
    %v4630 = vld [vmem:[#allocation13 + $0x4c] sm:$0xf]
    %v4631 = vld [vmem:[#allocation13 + $0x50] sm:$0xf]
    %v4632 = vld [vmem:[#allocation13 + $0x54] sm:$0xf]
    %v4633 = vld [vmem:[#allocation13 + $0x58] sm:$0xf]
    %v4634 = vld [vmem:[#allocation13 + $0x5c] sm:$0xf]
    %v4635 = vld [vmem:[#allocation13 + $0x60] sm:$0xf]
    %v4636 = vld [vmem:[#allocation13 + $0x64] sm:$0xf]
    %v4637 = vld [vmem:[#allocation13 + $0x68] sm:$0xf]
    %v4638 = vld [vmem:[#allocation13 + $0x6c] sm:$0xf]
    %v4639 = vld [vmem:[#allocation13 + $0x70] sm:$0xf]
    %v4640 = vld [vmem:[#allocation13 + $0x74] sm:$0xf]
    %v4641 = vld [vmem:[#allocation13 + $0x78] sm:$0xf]
    %v4642 = vld [vmem:[#allocation13 + $0x7c] sm:$0xf]
    %v4643 = vunpack.c.l.bf16 %v4611
    %v4644 = vunpack.c.l.bf16 %v4612
    %v4645 = vunpack.c.l.bf16 %v4613
    %v4646 = vunpack.c.l.bf16 %v4614
    %v4647 = vunpack.c.l.bf16 %v4615
    %v4648 = vunpack.c.l.bf16 %v4616
    %v4649 = vunpack.c.l.bf16 %v4617
    %v4650 = vunpack.c.l.bf16 %v4618
    %v4651 = vunpack.c.l.bf16 %v4619
    %v4652 = vunpack.c.l.bf16 %v4620
    %v4653 = vunpack.c.l.bf16 %v4621
    %v4654 = vunpack.c.l.bf16 %v4622
    %v4655 = vunpack.c.l.bf16 %v4623
    %v4656 = vunpack.c.l.bf16 %v4624
    %v4657 = vunpack.c.l.bf16 %v4625
    %v4658 = vunpack.c.l.bf16 %v4626
    %v4659 = vunpack.c.l.bf16 %v4627
    %v4660 = vunpack.c.l.bf16 %v4628
    %v4661 = vunpack.c.l.bf16 %v4629
    %v4662 = vunpack.c.l.bf16 %v4630
    %v4663 = vunpack.c.l.bf16 %v4631
    %v4664 = vunpack.c.l.bf16 %v4632
    %v4665 = vunpack.c.l.bf16 %v4633
    %v4666 = vunpack.c.l.bf16 %v4634
    %v4667 = vunpack.c.l.bf16 %v4635
    %v4668 = vunpack.c.l.bf16 %v4636
    %v4669 = vunpack.c.l.bf16 %v4637
    %v4670 = vunpack.c.l.bf16 %v4638
    %v4671 = vunpack.c.l.bf16 %v4639
    %v4672 = vunpack.c.l.bf16 %v4640
    %v4673 = vunpack.c.l.bf16 %v4641
    %v4674 = vunpack.c.l.bf16 %v4642
    %v4675 = vmax.f32 %v4643, 0.0
    %v4676 = vmax.f32 %v4644, 0.0
    %v4677 = vmax.f32 %v4645, 0.0
    %v4678 = vmax.f32 %v4646, 0.0
    %v4679 = vmax.f32 %v4647, 0.0
    %v4680 = vmax.f32 %v4648, 0.0
    %v4681 = vmax.f32 %v4649, 0.0
    %v4682 = vmax.f32 %v4650, 0.0
    %v4683 = vmax.f32 %v4651, 0.0
    %v4684 = vmax.f32 %v4652, 0.0
    %v4685 = vmax.f32 %v4653, 0.0
    %v4686 = vmax.f32 %v4654, 0.0
    %v4687 = vmax.f32 %v4655, 0.0
    %v4688 = vmax.f32 %v4656, 0.0
    %v4689 = vmax.f32 %v4657, 0.0
    %v4690 = vmax.f32 %v4658, 0.0
    %v4691 = vmax.f32 %v4659, 0.0
    %v4692 = vmax.f32 %v4660, 0.0
    %v4693 = vmax.f32 %v4661, 0.0
    %v4694 = vmax.f32 %v4662, 0.0
    %v4695 = vmax.f32 %v4663, 0.0
    %v4696 = vmax.f32 %v4664, 0.0
    %v4697 = vmax.f32 %v4665, 0.0
    %v4698 = vmax.f32 %v4666, 0.0
    %v4699 = vmax.f32 %v4667, 0.0
    %v4700 = vmax.f32 %v4668, 0.0
    %v4701 = vmax.f32 %v4669, 0.0
    %v4702 = vmax.f32 %v4670, 0.0
    %v4703 = vmax.f32 %v4671, 0.0
    %v4704 = vmax.f32 %v4672, 0.0
    %v4705 = vmax.f32 %v4673, 0.0
    %v4706 = vmax.f32 %v4674, 0.0
    %v4707 = vand.u32 2147483647, %v4643
    %v4708 = vand.u32 2147483647, %v4644
    %v4709 = vand.u32 2147483647, %v4645
    %v4710 = vand.u32 2147483647, %v4646
    %v4711 = vand.u32 2147483647, %v4647
    %v4712 = vand.u32 2147483647, %v4648
    %v4713 = vand.u32 2147483647, %v4649
    %v4714 = vand.u32 2147483647, %v4650
    %v4715 = vand.u32 2147483647, %v4651
    %v4716 = vand.u32 2147483647, %v4652
    %v4717 = vand.u32 2147483647, %v4653
    %v4718 = vand.u32 2147483647, %v4654
    %v4719 = vand.u32 2147483647, %v4655
    %v4720 = vand.u32 2147483647, %v4656
    %v4721 = vand.u32 2147483647, %v4657
    %v4722 = vand.u32 2147483647, %v4658
    %v4723 = vand.u32 2147483647, %v4659
    %v4724 = vand.u32 2147483647, %v4660
    %v4725 = vand.u32 2147483647, %v4661
    %v4726 = vand.u32 2147483647, %v4662
    %v4727 = vand.u32 2147483647, %v4663
    %v4728 = vand.u32 2147483647, %v4664
    %v4729 = vand.u32 2147483647, %v4665
    %v4730 = vand.u32 2147483647, %v4666
    %v4731 = vand.u32 2147483647, %v4667
    %v4732 = vand.u32 2147483647, %v4668
    %v4733 = vand.u32 2147483647, %v4669
    %v4734 = vand.u32 2147483647, %v4670
    %v4735 = vand.u32 2147483647, %v4671
    %v4736 = vand.u32 2147483647, %v4672
    %v4737 = vand.u32 2147483647, %v4673
    %v4738 = vand.u32 2147483647, %v4674
    %v4739 = vsub.f32 0.0, %v4707
    %v4740 = vsub.f32 0.0, %v4708
    %v4741 = vsub.f32 0.0, %v4709
    %v4742 = vsub.f32 0.0, %v4710
    %v4743 = vsub.f32 0.0, %v4711
    %v4744 = vsub.f32 0.0, %v4712
    %v4745 = vsub.f32 0.0, %v4713
    %v4746 = vsub.f32 0.0, %v4714
    %v4747 = vsub.f32 0.0, %v4715
    %v4748 = vsub.f32 0.0, %v4716
    %v4749 = vsub.f32 0.0, %v4717
    %v4750 = vsub.f32 0.0, %v4718
    %v4751 = vsub.f32 0.0, %v4719
    %v4752 = vsub.f32 0.0, %v4720
    %v4753 = vsub.f32 0.0, %v4721
    %v4754 = vsub.f32 0.0, %v4722
    %v4755 = vsub.f32 0.0, %v4723
    %v4756 = vsub.f32 0.0, %v4724
    %v4757 = vsub.f32 0.0, %v4725
    %v4758 = vsub.f32 0.0, %v4726
    %v4759 = vsub.f32 0.0, %v4727
    %v4760 = vsub.f32 0.0, %v4728
    %v4761 = vsub.f32 0.0, %v4729
    %v4762 = vsub.f32 0.0, %v4730
    %v4763 = vsub.f32 0.0, %v4731
    %v4764 = vsub.f32 0.0, %v4732
    %v4765 = vsub.f32 0.0, %v4733
    %v4766 = vsub.f32 0.0, %v4734
    %v4767 = vsub.f32 0.0, %v4735
    %v4768 = vsub.f32 0.0, %v4736
    %v4769 = vsub.f32 0.0, %v4737
    %v4770 = vsub.f32 0.0, %v4738
    %v4771 = vmul.f32 %v4739, 1.442695
    %v4772 = vpow.pop %v4771
    %v4773 = vmul.f32 %v4740, 1.442695
    %v4774 = vpow.pop %v4773
    %v4775 = vmul.f32 %v4741, 1.442695
    %v4776 = vpow.pop %v4775
    %v4777 = vmul.f32 %v4742, 1.442695
    %v4778 = vpow.pop %v4777
    %v4779 = vmul.f32 %v4743, 1.442695
    %v4780 = vpow.pop %v4779
    %v4781 = vmul.f32 %v4744, 1.442695
    %v4782 = vpow.pop %v4781
    %v4783 = vmul.f32 %v4745, 1.442695
    %v4784 = vpow.pop %v4783
    %v4785 = vmul.f32 %v4746, 1.442695
    %v4786 = vpow.pop %v4785
    %v4787 = vmul.f32 %v4747, 1.442695
    %v4788 = vpow.pop %v4787
    %v4789 = vmul.f32 %v4748, 1.442695
    %v4790 = vpow.pop %v4789
    %v4791 = vmul.f32 %v4749, 1.442695
    %v4792 = vpow.pop %v4791
    %v4793 = vmul.f32 %v4750, 1.442695
    %v4794 = vpow.pop %v4793
    %v4795 = vmul.f32 %v4751, 1.442695
    %v4796 = vpow.pop %v4795
    %v4797 = vmul.f32 %v4752, 1.442695
    %v4798 = vpow.pop %v4797
    %v4799 = vmul.f32 %v4753, 1.442695
    %v4800 = vpow.pop %v4799
    %v4801 = vmul.f32 %v4754, 1.442695
    %v4802 = vpow.pop %v4801
    %v4803 = vmul.f32 %v4755, 1.442695
    %v4804 = vpow.pop %v4803
    %v4805 = vmul.f32 %v4756, 1.442695
    %v4806 = vpow.pop %v4805
    %v4807 = vmul.f32 %v4757, 1.442695
    %v4808 = vpow.pop %v4807
    %v4809 = vmul.f32 %v4758, 1.442695
    %v4810 = vpow.pop %v4809
    %v4811 = vmul.f32 %v4759, 1.442695
    %v4812 = vpow.pop %v4811
    %v4813 = vmul.f32 %v4760, 1.442695
    %v4814 = vpow.pop %v4813
    %v4815 = vmul.f32 %v4761, 1.442695
    %v4816 = vpow.pop %v4815
    %v4817 = vmul.f32 %v4762, 1.442695
    %v4818 = vpow.pop %v4817
    %v4819 = vmul.f32 %v4763, 1.442695
    %v4820 = vpow.pop %v4819
    %v4821 = vmul.f32 %v4764, 1.442695
    %v4822 = vpow.pop %v4821
    %v4823 = vmul.f32 %v4765, 1.442695
    %v4824 = vpow.pop %v4823
    %v4825 = vmul.f32 %v4766, 1.442695
    %v4826 = vpow.pop %v4825
    %v4827 = vmul.f32 %v4767, 1.442695
    %v4828 = vpow.pop %v4827
    %v4829 = vmul.f32 %v4768, 1.442695
    %v4830 = vpow.pop %v4829
    %v4831 = vmul.f32 %v4769, 1.442695
    %v4832 = vpow.pop %v4831
    %v4833 = vmul.f32 %v4770, 1.442695
    %v4834 = vpow.pop %v4833
    %v4835 = vadd.f32 %v4772, 1.0
    %v4836 = vlog2.pop %v4835
    %v4837 = vmul.f32 %v4836, 0.6931472
    %v4838 = vmul.f32 -0.5, %v4772
    %v4839 = vadd.f32 %v4838, 1.0
    %v4840 = vmul.f32 %v4839, %v4772
    %v4841 = vand.u32 2147483647, %v4772
    %vm4842 = vcmp.lt.f32.partialorder %v4841, 0.0004427343
    %v4843 = vsel %vm4842, %v4840, %v4837
    %v4844 = vadd.f32 %v4774, 1.0
    %v4845 = vlog2.pop %v4844
    %v4846 = vmul.f32 %v4845, 0.6931472
    %v4847 = vmul.f32 -0.5, %v4774
    %v4848 = vadd.f32 %v4847, 1.0
    %v4849 = vmul.f32 %v4848, %v4774
    %v4850 = vand.u32 2147483647, %v4774
    %vm4851 = vcmp.lt.f32.partialorder %v4850, 0.0004427343
    %v4852 = vsel %vm4851, %v4849, %v4846
    %v4853 = vadd.f32 %v4776, 1.0
    %v4854 = vlog2.pop %v4853
    %v4855 = vmul.f32 %v4854, 0.6931472
    %v4856 = vmul.f32 -0.5, %v4776
    %v4857 = vadd.f32 %v4856, 1.0
    %v4858 = vmul.f32 %v4857, %v4776
    %v4859 = vand.u32 2147483647, %v4776
    %vm4860 = vcmp.lt.f32.partialorder %v4859, 0.0004427343
    %v4861 = vsel %vm4860, %v4858, %v4855
    %v4862 = vadd.f32 %v4778, 1.0
    %v4863 = vlog2.pop %v4862
    %v4864 = vmul.f32 %v4863, 0.6931472
    %v4865 = vmul.f32 -0.5, %v4778
    %v4866 = vadd.f32 %v4865, 1.0
    %v4867 = vmul.f32 %v4866, %v4778
    %v4868 = vand.u32 2147483647, %v4778
    %vm4869 = vcmp.lt.f32.partialorder %v4868, 0.0004427343
    %v4870 = vsel %vm4869, %v4867, %v4864
    %v4871 = vadd.f32 %v4780, 1.0
    %v4872 = vlog2.pop %v4871
    %v4873 = vmul.f32 %v4872, 0.6931472
    %v4874 = vmul.f32 -0.5, %v4780
    %v4875 = vadd.f32 %v4874, 1.0
    %v4876 = vmul.f32 %v4875, %v4780
    %v4877 = vand.u32 2147483647, %v4780
    %vm4878 = vcmp.lt.f32.partialorder %v4877, 0.0004427343
    %v4879 = vsel %vm4878, %v4876, %v4873
    %v4880 = vadd.f32 %v4782, 1.0
    %v4881 = vlog2.pop %v4880
    %v4882 = vmul.f32 %v4881, 0.6931472
    %v4883 = vmul.f32 -0.5, %v4782
    %v4884 = vadd.f32 %v4883, 1.0
    %v4885 = vmul.f32 %v4884, %v4782
    %v4886 = vand.u32 2147483647, %v4782
    %vm4887 = vcmp.lt.f32.partialorder %v4886, 0.0004427343
    %v4888 = vsel %vm4887, %v4885, %v4882
    %v4889 = vadd.f32 %v4784, 1.0
    %v4890 = vlog2.pop %v4889
    %v4891 = vmul.f32 %v4890, 0.6931472
    %v4892 = vmul.f32 -0.5, %v4784
    %v4893 = vadd.f32 %v4892, 1.0
    %v4894 = vmul.f32 %v4893, %v4784
    %v4895 = vand.u32 2147483647, %v4784
    %vm4896 = vcmp.lt.f32.partialorder %v4895, 0.0004427343
    %v4897 = vsel %vm4896, %v4894, %v4891
    %v4898 = vadd.f32 %v4786, 1.0
    %v4899 = vlog2.pop %v4898
    %v4900 = vmul.f32 %v4899, 0.6931472
    %v4901 = vmul.f32 -0.5, %v4786
    %v4902 = vadd.f32 %v4901, 1.0
    %v4903 = vmul.f32 %v4902, %v4786
    %v4904 = vand.u32 2147483647, %v4786
    %vm4905 = vcmp.lt.f32.partialorder %v4904, 0.0004427343
    %v4906 = vsel %vm4905, %v4903, %v4900
    %v4907 = vadd.f32 %v4788, 1.0
    %v4908 = vlog2.pop %v4907
    %v4909 = vmul.f32 %v4908, 0.6931472
    %v4910 = vmul.f32 -0.5, %v4788
    %v4911 = vadd.f32 %v4910, 1.0
    %v4912 = vmul.f32 %v4911, %v4788
    %v4913 = vand.u32 2147483647, %v4788
    %vm4914 = vcmp.lt.f32.partialorder %v4913, 0.0004427343
    %v4915 = vsel %vm4914, %v4912, %v4909
    %v4916 = vadd.f32 %v4790, 1.0
    %v4917 = vlog2.pop %v4916
    %v4918 = vmul.f32 %v4917, 0.6931472
    %v4919 = vmul.f32 -0.5, %v4790
    %v4920 = vadd.f32 %v4919, 1.0
    %v4921 = vmul.f32 %v4920, %v4790
    %v4922 = vand.u32 2147483647, %v4790
    %vm4923 = vcmp.lt.f32.partialorder %v4922, 0.0004427343
    %v4924 = vsel %vm4923, %v4921, %v4918
    %v4925 = vadd.f32 %v4792, 1.0
    %v4926 = vlog2.pop %v4925
    %v4927 = vmul.f32 %v4926, 0.6931472
    %v4928 = vmul.f32 -0.5, %v4792
    %v4929 = vadd.f32 %v4928, 1.0
    %v4930 = vmul.f32 %v4929, %v4792
    %v4931 = vand.u32 2147483647, %v4792
    %vm4932 = vcmp.lt.f32.partialorder %v4931, 0.0004427343
    %v4933 = vsel %vm4932, %v4930, %v4927
    %v4934 = vadd.f32 %v4794, 1.0
    %v4935 = vlog2.pop %v4934
    %v4936 = vmul.f32 %v4935, 0.6931472
    %v4937 = vmul.f32 -0.5, %v4794
    %v4938 = vadd.f32 %v4937, 1.0
    %v4939 = vmul.f32 %v4938, %v4794
    %v4940 = vand.u32 2147483647, %v4794
    %vm4941 = vcmp.lt.f32.partialorder %v4940, 0.0004427343
    %v4942 = vsel %vm4941, %v4939, %v4936
    %v4943 = vadd.f32 %v4796, 1.0
    %v4944 = vlog2.pop %v4943
    %v4945 = vmul.f32 %v4944, 0.6931472
    %v4946 = vmul.f32 -0.5, %v4796
    %v4947 = vadd.f32 %v4946, 1.0
    %v4948 = vmul.f32 %v4947, %v4796
    %v4949 = vand.u32 2147483647, %v4796
    %vm4950 = vcmp.lt.f32.partialorder %v4949, 0.0004427343
    %v4951 = vsel %vm4950, %v4948, %v4945
    %v4952 = vadd.f32 %v4798, 1.0
    %v4953 = vlog2.pop %v4952
    %v4954 = vmul.f32 %v4953, 0.6931472
    %v4955 = vmul.f32 -0.5, %v4798
    %v4956 = vadd.f32 %v4955, 1.0
    %v4957 = vmul.f32 %v4956, %v4798
    %v4958 = vand.u32 2147483647, %v4798
    %vm4959 = vcmp.lt.f32.partialorder %v4958, 0.0004427343
    %v4960 = vsel %vm4959, %v4957, %v4954
    %v4961 = vadd.f32 %v4800, 1.0
    %v4962 = vlog2.pop %v4961
    %v4963 = vmul.f32 %v4962, 0.6931472
    %v4964 = vmul.f32 -0.5, %v4800
    %v4965 = vadd.f32 %v4964, 1.0
    %v4966 = vmul.f32 %v4965, %v4800
    %v4967 = vand.u32 2147483647, %v4800
    %vm4968 = vcmp.lt.f32.partialorder %v4967, 0.0004427343
    %v4969 = vsel %vm4968, %v4966, %v4963
    %v4970 = vadd.f32 %v4802, 1.0
    %v4971 = vlog2.pop %v4970
    %v4972 = vmul.f32 %v4971, 0.6931472
    %v4973 = vmul.f32 -0.5, %v4802
    %v4974 = vadd.f32 %v4973, 1.0
    %v4975 = vmul.f32 %v4974, %v4802
    %v4976 = vand.u32 2147483647, %v4802
    %vm4977 = vcmp.lt.f32.partialorder %v4976, 0.0004427343
    %v4978 = vsel %vm4977, %v4975, %v4972
    %v4979 = vadd.f32 %v4804, 1.0
    %v4980 = vlog2.pop %v4979
    %v4981 = vmul.f32 %v4980, 0.6931472
    %v4982 = vmul.f32 -0.5, %v4804
    %v4983 = vadd.f32 %v4982, 1.0
    %v4984 = vmul.f32 %v4983, %v4804
    %v4985 = vand.u32 2147483647, %v4804
    %vm4986 = vcmp.lt.f32.partialorder %v4985, 0.0004427343
    %v4987 = vsel %vm4986, %v4984, %v4981
    %v4988 = vadd.f32 %v4806, 1.0
    %v4989 = vlog2.pop %v4988
    %v4990 = vmul.f32 %v4989, 0.6931472
    %v4991 = vmul.f32 -0.5, %v4806
    %v4992 = vadd.f32 %v4991, 1.0
    %v4993 = vmul.f32 %v4992, %v4806
    %v4994 = vand.u32 2147483647, %v4806
    %vm4995 = vcmp.lt.f32.partialorder %v4994, 0.0004427343
    %v4996 = vsel %vm4995, %v4993, %v4990
    %v4997 = vadd.f32 %v4808, 1.0
    %v4998 = vlog2.pop %v4997
    %v4999 = vmul.f32 %v4998, 0.6931472
    %v5000 = vmul.f32 -0.5, %v4808
    %v5001 = vadd.f32 %v5000, 1.0
    %v5002 = vmul.f32 %v5001, %v4808
    %v5003 = vand.u32 2147483647, %v4808
    %vm5004 = vcmp.lt.f32.partialorder %v5003, 0.0004427343
    %v5005 = vsel %vm5004, %v5002, %v4999
    %v5006 = vadd.f32 %v4810, 1.0
    %v5007 = vlog2.pop %v5006
    %v5008 = vmul.f32 %v5007, 0.6931472
    %v5009 = vmul.f32 -0.5, %v4810
    %v5010 = vadd.f32 %v5009, 1.0
    %v5011 = vmul.f32 %v5010, %v4810
    %v5012 = vand.u32 2147483647, %v4810
    %vm5013 = vcmp.lt.f32.partialorder %v5012, 0.0004427343
    %v5014 = vsel %vm5013, %v5011, %v5008
    %v5015 = vadd.f32 %v4812, 1.0
    %v5016 = vlog2.pop %v5015
    %v5017 = vmul.f32 %v5016, 0.6931472
    %v5018 = vmul.f32 -0.5, %v4812
    %v5019 = vadd.f32 %v5018, 1.0
    %v5020 = vmul.f32 %v5019, %v4812
    %v5021 = vand.u32 2147483647, %v4812
    %vm5022 = vcmp.lt.f32.partialorder %v5021, 0.0004427343
    %v5023 = vsel %vm5022, %v5020, %v5017
    %v5024 = vadd.f32 %v4814, 1.0
    %v5025 = vlog2.pop %v5024
    %v5026 = vmul.f32 %v5025, 0.6931472
    %v5027 = vmul.f32 -0.5, %v4814
    %v5028 = vadd.f32 %v5027, 1.0
    %v5029 = vmul.f32 %v5028, %v4814
    %v5030 = vand.u32 2147483647, %v4814
    %vm5031 = vcmp.lt.f32.partialorder %v5030, 0.0004427343
    %v5032 = vsel %vm5031, %v5029, %v5026
    %v5033 = vadd.f32 %v4816, 1.0
    %v5034 = vlog2.pop %v5033
    %v5035 = vmul.f32 %v5034, 0.6931472
    %v5036 = vmul.f32 -0.5, %v4816
    %v5037 = vadd.f32 %v5036, 1.0
    %v5038 = vmul.f32 %v5037, %v4816
    %v5039 = vand.u32 2147483647, %v4816
    %vm5040 = vcmp.lt.f32.partialorder %v5039, 0.0004427343
    %v5041 = vsel %vm5040, %v5038, %v5035
    %v5042 = vadd.f32 %v4818, 1.0
    %v5043 = vlog2.pop %v5042
    %v5044 = vmul.f32 %v5043, 0.6931472
    %v5045 = vmul.f32 -0.5, %v4818
    %v5046 = vadd.f32 %v5045, 1.0
    %v5047 = vmul.f32 %v5046, %v4818
    %v5048 = vand.u32 2147483647, %v4818
    %vm5049 = vcmp.lt.f32.partialorder %v5048, 0.0004427343
    %v5050 = vsel %vm5049, %v5047, %v5044
    %v5051 = vadd.f32 %v4820, 1.0
    %v5052 = vlog2.pop %v5051
    %v5053 = vmul.f32 %v5052, 0.6931472
    %v5054 = vmul.f32 -0.5, %v4820
    %v5055 = vadd.f32 %v5054, 1.0
    %v5056 = vmul.f32 %v5055, %v4820
    %v5057 = vand.u32 2147483647, %v4820
    %vm5058 = vcmp.lt.f32.partialorder %v5057, 0.0004427343
    %v5059 = vsel %vm5058, %v5056, %v5053
    %v5060 = vadd.f32 %v4822, 1.0
    %v5061 = vlog2.pop %v5060
    %v5062 = vmul.f32 %v5061, 0.6931472
    %v5063 = vmul.f32 -0.5, %v4822
    %v5064 = vadd.f32 %v5063, 1.0
    %v5065 = vmul.f32 %v5064, %v4822
    %v5066 = vand.u32 2147483647, %v4822
    %vm5067 = vcmp.lt.f32.partialorder %v5066, 0.0004427343
    %v5068 = vsel %vm5067, %v5065, %v5062
    %v5069 = vadd.f32 %v4824, 1.0
    %v5070 = vlog2.pop %v5069
    %v5071 = vmul.f32 %v5070, 0.6931472
    %v5072 = vmul.f32 -0.5, %v4824
    %v5073 = vadd.f32 %v5072, 1.0
    %v5074 = vmul.f32 %v5073, %v4824
    %v5075 = vand.u32 2147483647, %v4824
    %vm5076 = vcmp.lt.f32.partialorder %v5075, 0.0004427343
    %v5077 = vsel %vm5076, %v5074, %v5071
    %v5078 = vadd.f32 %v4826, 1.0
    %v5079 = vlog2.pop %v5078
    %v5080 = vmul.f32 %v5079, 0.6931472
    %v5081 = vmul.f32 -0.5, %v4826
    %v5082 = vadd.f32 %v5081, 1.0
    %v5083 = vmul.f32 %v5082, %v4826
    %v5084 = vand.u32 2147483647, %v4826
    %vm5085 = vcmp.lt.f32.partialorder %v5084, 0.0004427343
    %v5086 = vsel %vm5085, %v5083, %v5080
    %v5087 = vadd.f32 %v4828, 1.0
    %v5088 = vlog2.pop %v5087
    %v5089 = vmul.f32 %v5088, 0.6931472
    %v5090 = vmul.f32 -0.5, %v4828
    %v5091 = vadd.f32 %v5090, 1.0
    %v5092 = vmul.f32 %v5091, %v4828
    %v5093 = vand.u32 2147483647, %v4828
    %vm5094 = vcmp.lt.f32.partialorder %v5093, 0.0004427343
    %v5095 = vsel %vm5094, %v5092, %v5089
    %v5096 = vadd.f32 %v4830, 1.0
    %v5097 = vlog2.pop %v5096
    %v5098 = vmul.f32 %v5097, 0.6931472
    %v5099 = vmul.f32 -0.5, %v4830
    %v5100 = vadd.f32 %v5099, 1.0
    %v5101 = vmul.f32 %v5100, %v4830
    %v5102 = vand.u32 2147483647, %v4830
    %vm5103 = vcmp.lt.f32.partialorder %v5102, 0.0004427343
    %v5104 = vsel %vm5103, %v5101, %v5098
    %v5105 = vadd.f32 %v4832, 1.0
    %v5106 = vlog2.pop %v5105
    %v5107 = vmul.f32 %v5106, 0.6931472
    %v5108 = vmul.f32 -0.5, %v4832
    %v5109 = vadd.f32 %v5108, 1.0
    %v5110 = vmul.f32 %v5109, %v4832
    %v5111 = vand.u32 2147483647, %v4832
    %vm5112 = vcmp.lt.f32.partialorder %v5111, 0.0004427343
    %v5113 = vsel %vm5112, %v5110, %v5107
    %v5114 = vadd.f32 %v4834, 1.0
    %v5115 = vlog2.pop %v5114
    %v5116 = vmul.f32 %v5115, 0.6931472
    %v5117 = vmul.f32 -0.5, %v4834
    %v5118 = vadd.f32 %v5117, 1.0
    %v5119 = vmul.f32 %v5118, %v4834
    %v5120 = vand.u32 2147483647, %v4834
    %vm5121 = vcmp.lt.f32.partialorder %v5120, 0.0004427343
    %v5122 = vsel %vm5121, %v5119, %v5116
    %v5123 = vadd.f32 %v4675, %v4843
    %v5124 = vadd.f32 %v4676, %v4852
    %v5125 = vadd.f32 %v4677, %v4861
    %v5126 = vadd.f32 %v4678, %v4870
    %v5127 = vadd.f32 %v4679, %v4879
    %v5128 = vadd.f32 %v4680, %v4888
    %v5129 = vadd.f32 %v4681, %v4897
    %v5130 = vadd.f32 %v4682, %v4906
    %v5131 = vadd.f32 %v4683, %v4915
    %v5132 = vadd.f32 %v4684, %v4924
    %v5133 = vadd.f32 %v4685, %v4933
    %v5134 = vadd.f32 %v4686, %v4942
    %v5135 = vadd.f32 %v4687, %v4951
    %v5136 = vadd.f32 %v4688, %v4960
    %v5137 = vadd.f32 %v4689, %v4969
    %v5138 = vadd.f32 %v4690, %v4978
    %v5139 = vadd.f32 %v4691, %v4987
    %v5140 = vadd.f32 %v4692, %v4996
    %v5141 = vadd.f32 %v4693, %v5005
    %v5142 = vadd.f32 %v4694, %v5014
    %v5143 = vadd.f32 %v4695, %v5023
    %v5144 = vadd.f32 %v4696, %v5032
    %v5145 = vadd.f32 %v4697, %v5041
    %v5146 = vadd.f32 %v4698, %v5050
    %v5147 = vadd.f32 %v4699, %v5059
    %v5148 = vadd.f32 %v4700, %v5068
    %v5149 = vadd.f32 %v4701, %v5077
    %v5150 = vadd.f32 %v4702, %v5086
    %v5151 = vadd.f32 %v4703, %v5095
    %v5152 = vadd.f32 %v4704, %v5104
    %v5153 = vadd.f32 %v4705, %v5113
    %v5154 = vadd.f32 %v4706, %v5122
    %v5155 = vld [vmem:[#allocation14] sm:$0xf]
    %v5156 = vld [vmem:[#allocation14 + $0x4] sm:$0xf]
    %v5157 = vld [vmem:[#allocation14 + $0x8] sm:$0xf]
    %v5158 = vld [vmem:[#allocation14 + $0xc] sm:$0xf]
    %v5159 = vld [vmem:[#allocation14 + $0x10] sm:$0xf]
    %v5160 = vld [vmem:[#allocation14 + $0x14] sm:$0xf]
    %v5161 = vld [vmem:[#allocation14 + $0x18] sm:$0xf]
    %v5162 = vld [vmem:[#allocation14 + $0x1c] sm:$0xf]
    %v5163 = vld [vmem:[#allocation14 + $0x20] sm:$0xf]
    %v5164 = vld [vmem:[#allocation14 + $0x24] sm:$0xf]
    %v5165 = vld [vmem:[#allocation14 + $0x28] sm:$0xf]
    %v5166 = vld [vmem:[#allocation14 + $0x2c] sm:$0xf]
    %v5167 = vld [vmem:[#allocation14 + $0x30] sm:$0xf]
    %v5168 = vld [vmem:[#allocation14 + $0x34] sm:$0xf]
    %v5169 = vld [vmem:[#allocation14 + $0x38] sm:$0xf]
    %v5170 = vld [vmem:[#allocation14 + $0x3c] sm:$0xf]
    %v5171 = vld [vmem:[#allocation14 + $0x40] sm:$0xf]
    %v5172 = vld [vmem:[#allocation14 + $0x44] sm:$0xf]
    %v5173 = vld [vmem:[#allocation14 + $0x48] sm:$0xf]
    %v5174 = vld [vmem:[#allocation14 + $0x4c] sm:$0xf]
    %v5175 = vld [vmem:[#allocation14 + $0x50] sm:$0xf]
    %v5176 = vld [vmem:[#allocation14 + $0x54] sm:$0xf]
    %v5177 = vld [vmem:[#allocation14 + $0x58] sm:$0xf]
    %v5178 = vld [vmem:[#allocation14 + $0x5c] sm:$0xf]
    %v5179 = vld [vmem:[#allocation14 + $0x60] sm:$0xf]
    %v5180 = vld [vmem:[#allocation14 + $0x64] sm:$0xf]
    %v5181 = vld [vmem:[#allocation14 + $0x68] sm:$0xf]
    %v5182 = vld [vmem:[#allocation14 + $0x6c] sm:$0xf]
    %v5183 = vld [vmem:[#allocation14 + $0x70] sm:$0xf]
    %v5184 = vld [vmem:[#allocation14 + $0x74] sm:$0xf]
    %v5185 = vld [vmem:[#allocation14 + $0x78] sm:$0xf]
    %v5186 = vld [vmem:[#allocation14 + $0x7c] sm:$0xf]
    %v5187 = vunpack.c.l.bf16 %v5155
    %v5188 = vunpack.c.l.bf16 %v5156
    %v5189 = vunpack.c.l.bf16 %v5157
    %v5190 = vunpack.c.l.bf16 %v5158
    %v5191 = vunpack.c.l.bf16 %v5159
    %v5192 = vunpack.c.l.bf16 %v5160
    %v5193 = vunpack.c.l.bf16 %v5161
    %v5194 = vunpack.c.l.bf16 %v5162
    %v5195 = vunpack.c.l.bf16 %v5163
    %v5196 = vunpack.c.l.bf16 %v5164
    %v5197 = vunpack.c.l.bf16 %v5165
    %v5198 = vunpack.c.l.bf16 %v5166
    %v5199 = vunpack.c.l.bf16 %v5167
    %v5200 = vunpack.c.l.bf16 %v5168
    %v5201 = vunpack.c.l.bf16 %v5169
    %v5202 = vunpack.c.l.bf16 %v5170
    %v5203 = vunpack.c.l.bf16 %v5171
    %v5204 = vunpack.c.l.bf16 %v5172
    %v5205 = vunpack.c.l.bf16 %v5173
    %v5206 = vunpack.c.l.bf16 %v5174
    %v5207 = vunpack.c.l.bf16 %v5175
    %v5208 = vunpack.c.l.bf16 %v5176
    %v5209 = vunpack.c.l.bf16 %v5177
    %v5210 = vunpack.c.l.bf16 %v5178
    %v5211 = vunpack.c.l.bf16 %v5179
    %v5212 = vunpack.c.l.bf16 %v5180
    %v5213 = vunpack.c.l.bf16 %v5181
    %v5214 = vunpack.c.l.bf16 %v5182
    %v5215 = vunpack.c.l.bf16 %v5183
    %v5216 = vunpack.c.l.bf16 %v5184
    %v5217 = vunpack.c.l.bf16 %v5185
    %v5218 = vunpack.c.l.bf16 %v5186
    %v5219 = vmul.f32 %v5123, %v5187
    %v5220 = vmul.f32 %v5124, %v5188
    %v5221 = vmul.f32 %v5125, %v5189
    %v5222 = vmul.f32 %v5126, %v5190
    %v5223 = vmul.f32 %v5127, %v5191
    %v5224 = vmul.f32 %v5128, %v5192
    %v5225 = vmul.f32 %v5129, %v5193
    %v5226 = vmul.f32 %v5130, %v5194
    %v5227 = vmul.f32 %v5131, %v5195
    %v5228 = vmul.f32 %v5132, %v5196
    %v5229 = vmul.f32 %v5133, %v5197
    %v5230 = vmul.f32 %v5134, %v5198
    %v5231 = vmul.f32 %v5135, %v5199
    %v5232 = vmul.f32 %v5136, %v5200
    %v5233 = vmul.f32 %v5137, %v5201
    %v5234 = vmul.f32 %v5138, %v5202
    %v5235 = vmul.f32 %v5139, %v5203
    %v5236 = vmul.f32 %v5140, %v5204
    %v5237 = vmul.f32 %v5141, %v5205
    %v5238 = vmul.f32 %v5142, %v5206
    %v5239 = vmul.f32 %v5143, %v5207
    %v5240 = vmul.f32 %v5144, %v5208
    %v5241 = vmul.f32 %v5145, %v5209
    %v5242 = vmul.f32 %v5146, %v5210
    %v5243 = vmul.f32 %v5147, %v5211
    %v5244 = vmul.f32 %v5148, %v5212
    %v5245 = vmul.f32 %v5149, %v5213
    %v5246 = vmul.f32 %v5150, %v5214
    %v5247 = vmul.f32 %v5151, %v5215
    %v5248 = vmul.f32 %v5152, %v5216
    %v5249 = vmul.f32 %v5153, %v5217
    %v5250 = vmul.f32 %v5154, %v5218
    %v5251 = vadd.f32 %v4579, %v5219
    %v5252 = vadd.f32 %v4580, %v5220
    %v5253 = vadd.f32 %v4581, %v5221
    %v5254 = vadd.f32 %v4582, %v5222
    %v5255 = vadd.f32 %v4583, %v5223
    %v5256 = vadd.f32 %v4584, %v5224
    %v5257 = vadd.f32 %v4585, %v5225
    %v5258 = vadd.f32 %v4586, %v5226
    %v5259 = vadd.f32 %v4587, %v5227
    %v5260 = vadd.f32 %v4588, %v5228
    %v5261 = vadd.f32 %v4589, %v5229
    %v5262 = vadd.f32 %v4590, %v5230
    %v5263 = vadd.f32 %v4591, %v5231
    %v5264 = vadd.f32 %v4592, %v5232
    %v5265 = vadd.f32 %v4593, %v5233
    %v5266 = vadd.f32 %v4594, %v5234
    %v5267 = vadd.f32 %v4595, %v5235
    %v5268 = vadd.f32 %v4596, %v5236
    %v5269 = vadd.f32 %v4597, %v5237
    %v5270 = vadd.f32 %v4598, %v5238
    %v5271 = vadd.f32 %v4599, %v5239
    %v5272 = vadd.f32 %v4600, %v5240
    %v5273 = vadd.f32 %v4601, %v5241
    %v5274 = vadd.f32 %v4602, %v5242
    %v5275 = vadd.f32 %v4603, %v5243
    %v5276 = vadd.f32 %v4604, %v5244
    %v5277 = vadd.f32 %v4605, %v5245
    %v5278 = vadd.f32 %v4606, %v5246
    %v5279 = vadd.f32 %v4607, %v5247
    %v5280 = vadd.f32 %v4608, %v5248
    %v5281 = vadd.f32 %v4609, %v5249
    %v5282 = vadd.f32 %v4610, %v5250
    %v5283 = vld [vmem:[%s10] sm:$0x1]
    %v5284 = vunpack.c.l.bf16 %v5283
    %v5285 = vld [vmem:[%s11] sm:$0x1]
    %v5286 = vunpack.c.l.bf16 %v5285
    %v5287 = vmax.f32 %v5286, 0.0
    %v5288 = vand.u32 2147483647, %v5286
    %v5289 = vsub.f32 0.0, %v5288
    %v5290 = vmul.f32 %v5289, 1.442695
    %v5291 = vpow.pop %v5290
    %v5292 = vadd.f32 %v5291, 1.0
    %v5293 = vlog2.pop %v5292
    %v5294 = vmul.f32 %v5293, 0.6931472
    %v5295 = vmul.f32 -0.5, %v5291
    %v5296 = vadd.f32 %v5295, 1.0
    %v5297 = vmul.f32 %v5296, %v5291
    %v5298 = vand.u32 2147483647, %v5291
    %vm5299 = vcmp.lt.f32.partialorder %v5298, 0.0004427343
    %v5300 = vsel %vm5299, %v5297, %v5294
    %v5301 = vadd.f32 %v5287, %v5300
    %v5302 = vld [vmem:[%s12] sm:$0x1]
    %v5303 = vunpack.c.l.bf16 %v5302
    %v5304 = vmul.f32 %v5301, %v5303
    %v5305 = vadd.f32 %v5284, %v5304
    %v5306 = vlaneseq
    %v5307 = vshrl.u32 %v5306, 7
    %v5308 = vsub.s32 0, %v5307
    %v5309 = vrot.slane %v5305, %v5308
    %5310 = vmatprep.subr.mxu0 0.0
    %5311 = vmatpush1.msra.mxu0 %v5266
    %5312 = vmatprep.subr.mxu0 0.0
    %5313 = vmatpush1.msra.mxu0 %v5265
    %5314 = vmatprep.subr.mxu0 0.0
    %5315 = vmatpush1.msra.mxu0 %v5264
    %5316 = vmatprep.subr.mxu0 0.0
    %5317 = vmatpush1.msra.mxu0 %v5263
    %5318 = vmatprep.subr.mxu0 0.0
    %5319 = vmatpush1.msra.mxu0 %v5262
    %5320 = vmatprep.subr.mxu0 0.0
    %5321 = vmatpush1.msra.mxu0 %v5261
    %5322 = vmatprep.subr.mxu0 0.0
    %5323 = vmatpush1.msra.mxu0 %v5260
    %5324 = vmatprep.subr.mxu0 0.0
    %5325 = vmatpush1.msra.mxu0 %v5259
    %5326 = vmatprep.subr.mxu0 0.0
    %5327 = vmatpush1.msra.mxu0 %v5258
    %5328 = vmatprep.subr.mxu0 0.0
    %5329 = vmatpush1.msra.mxu0 %v5257
    %5330 = vmatprep.subr.mxu0 0.0
    %5331 = vmatpush1.msra.mxu0 %v5256
    %5332 = vmatprep.subr.mxu0 0.0
    %5333 = vmatpush1.msra.mxu0 %v5255
    %5334 = vmatprep.subr.mxu0 0.0
    %5335 = vmatpush1.msra.mxu0 %v5254
    %5336 = vmatprep.subr.mxu0 0.0
    %5337 = vmatpush1.msra.mxu0 %v5253
    %5338 = vmatprep.subr.mxu0 0.0
    %5339 = vmatpush1.msra.mxu0 %v5252
    %5340 = vmatprep.subr.mxu0 0.0
    %5341 = vmatpush1.msra.mxu0 %v5251
    %5342 = vmatprep.subr.mxu0 0.0
    %5343 = vmatpush2.msra.mxu0 %v5282
    %5344 = vmatprep.subr.mxu0 0.0
    %5345 = vmatpush2.msra.mxu0 %v5281
    %5346 = vmatprep.subr.mxu0 0.0
    %5347 = vmatpush2.msra.mxu0 %v5280
    %5348 = vmatprep.subr.mxu0 0.0
    %5349 = vmatpush2.msra.mxu0 %v5279
    %5350 = vmatprep.subr.mxu0 0.0
    %5351 = vmatpush2.msra.mxu0 %v5278
    %5352 = vmatprep.subr.mxu0 0.0
    %5353 = vmatpush2.msra.mxu0 %v5277
    %5354 = vmatprep.subr.mxu0 0.0
    %5355 = vmatpush2.msra.mxu0 %v5276
    %5356 = vmatprep.subr.mxu0 0.0
    %5357 = vmatpush2.msra.mxu0 %v5275
    %5358 = vmatprep.subr.mxu0 0.0
    %5359 = vmatpush2.msra.mxu0 %v5274
    %5360 = vmatprep.subr.mxu0 0.0
    %5361 = vmatpush2.msra.mxu0 %v5273
    %5362 = vmatprep.subr.mxu0 0.0
    %5363 = vmatpush2.msra.mxu0 %v5272
    %5364 = vmatprep.subr.mxu0 0.0
    %5365 = vmatpush2.msra.mxu0 %v5271
    %5366 = vmatprep.subr.mxu0 0.0
    %5367 = vmatpush2.msra.mxu0 %v5270
    %5368 = vmatprep.subr.mxu0 0.0
    %5369 = vmatpush2.msra.mxu0 %v5269
    %5370 = vmatprep.subr.mxu0 0.0
    %5371 = vmatpush2.msra.mxu0 %v5268
    %5372 = vmatprep.subr.mxu0 0.0
    %5373 = vmatpush2.msra.mxu0 %v5267
    %5374 = vmatprep.mubr.f32.mxu0 %v3091
    %5375 = vmatmul.mubr.f32.gmra.mxu0 %v3089
    %v5376 = vpop.f32.mrf.mxu0
    %v5377 = vadd.f32 %v5309, %v5376
    %v5378 = vpop.f32.mrf.mxu0
    %5379 = vdwg.mxu0
    %v5380 = vmax.f32 %v5123, 1e-30
    %v5381 = vmax.f32 %v5124, 1e-30
    %v5382 = vmax.f32 %v5125, 1e-30
    %v5383 = vmax.f32 %v5126, 1e-30
    %v5384 = vmax.f32 %v5127, 1e-30
    %v5385 = vmax.f32 %v5128, 1e-30
    %v5386 = vmax.f32 %v5129, 1e-30
    %v5387 = vmax.f32 %v5130, 1e-30
    %v5388 = vmax.f32 %v5131, 1e-30
    %v5389 = vmax.f32 %v5132, 1e-30
    %v5390 = vmax.f32 %v5133, 1e-30
    %v5391 = vmax.f32 %v5134, 1e-30
    %v5392 = vmax.f32 %v5135, 1e-30
    %v5393 = vmax.f32 %v5136, 1e-30
    %v5394 = vmax.f32 %v5137, 1e-30
    %v5395 = vmax.f32 %v5138, 1e-30
    %v5396 = vmax.f32 %v5139, 1e-30
    %v5397 = vmax.f32 %v5140, 1e-30
    %v5398 = vmax.f32 %v5141, 1e-30
    %v5399 = vmax.f32 %v5142, 1e-30
    %v5400 = vmax.f32 %v5143, 1e-30
    %v5401 = vmax.f32 %v5144, 1e-30
    %v5402 = vmax.f32 %v5145, 1e-30
    %v5403 = vmax.f32 %v5146, 1e-30
    %v5404 = vmax.f32 %v5147, 1e-30
    %v5405 = vmax.f32 %v5148, 1e-30
    %v5406 = vmax.f32 %v5149, 1e-30
    %v5407 = vmax.f32 %v5150, 1e-30
    %v5408 = vmax.f32 %v5151, 1e-30
    %v5409 = vmax.f32 %v5152, 1e-30
    %v5410 = vmax.f32 %v5153, 1e-30
    %v5411 = vmax.f32 %v5154, 1e-30
    %v5412 = vlog2.pop %v5380
    %v5413 = vmul.f32 %v5412, 0.6931472
    %v5414 = vlog2.pop %v5381
    %v5415 = vmul.f32 %v5414, 0.6931472
    %v5416 = vlog2.pop %v5382
    %v5417 = vmul.f32 %v5416, 0.6931472
    %v5418 = vlog2.pop %v5383
    %v5419 = vmul.f32 %v5418, 0.6931472
    %v5420 = vlog2.pop %v5384
    %v5421 = vmul.f32 %v5420, 0.6931472
    %v5422 = vlog2.pop %v5385
    %v5423 = vmul.f32 %v5422, 0.6931472
    %v5424 = vlog2.pop %v5386
    %v5425 = vmul.f32 %v5424, 0.6931472
    %v5426 = vlog2.pop %v5387
    %v5427 = vmul.f32 %v5426, 0.6931472
    %v5428 = vlog2.pop %v5388
    %v5429 = vmul.f32 %v5428, 0.6931472
    %v5430 = vlog2.pop %v5389
    %v5431 = vmul.f32 %v5430, 0.6931472
    %v5432 = vlog2.pop %v5390
    %v5433 = vmul.f32 %v5432, 0.6931472
    %v5434 = vlog2.pop %v5391
    %v5435 = vmul.f32 %v5434, 0.6931472
    %v5436 = vlog2.pop %v5392
    %v5437 = vmul.f32 %v5436, 0.6931472
    %v5438 = vlog2.pop %v5393
    %v5439 = vmul.f32 %v5438, 0.6931472
    %v5440 = vlog2.pop %v5394
    %v5441 = vmul.f32 %v5440, 0.6931472
    %v5442 = vlog2.pop %v5395
    %v5443 = vmul.f32 %v5442, 0.6931472
    %v5444 = vlog2.pop %v5396
    %v5445 = vmul.f32 %v5444, 0.6931472
    %v5446 = vlog2.pop %v5397
    %v5447 = vmul.f32 %v5446, 0.6931472
    %v5448 = vlog2.pop %v5398
    %v5449 = vmul.f32 %v5448, 0.6931472
    %v5450 = vlog2.pop %v5399
    %v5451 = vmul.f32 %v5450, 0.6931472
    %v5452 = vlog2.pop %v5400
    %v5453 = vmul.f32 %v5452, 0.6931472
    %v5454 = vlog2.pop %v5401
    %v5455 = vmul.f32 %v5454, 0.6931472
    %v5456 = vlog2.pop %v5402
    %v5457 = vmul.f32 %v5456, 0.6931472
    %v5458 = vlog2.pop %v5403
    %v5459 = vmul.f32 %v5458, 0.6931472
    %v5460 = vlog2.pop %v5404
    %v5461 = vmul.f32 %v5460, 0.6931472
    %v5462 = vlog2.pop %v5405
    %v5463 = vmul.f32 %v5462, 0.6931472
    %v5464 = vlog2.pop %v5406
    %v5465 = vmul.f32 %v5464, 0.6931472
    %v5466 = vlog2.pop %v5407
    %v5467 = vmul.f32 %v5466, 0.6931472
    %v5468 = vlog2.pop %v5408
    %v5469 = vmul.f32 %v5468, 0.6931472
    %v5470 = vlog2.pop %v5409
    %v5471 = vmul.f32 %v5470, 0.6931472
    %v5472 = vlog2.pop %v5410
    %v5473 = vmul.f32 %v5472, 0.6931472
    %v5474 = vlog2.pop %v5411
    %v5475 = vmul.f32 %v5474, 0.6931472
    %v5476 = vsub.f32 0.0, %v5413
    %v5477 = vsub.f32 0.0, %v5415
    %v5478 = vsub.f32 0.0, %v5417
    %v5479 = vsub.f32 0.0, %v5419
    %v5480 = vsub.f32 0.0, %v5421
    %v5481 = vsub.f32 0.0, %v5423
    %v5482 = vsub.f32 0.0, %v5425
    %v5483 = vsub.f32 0.0, %v5427
    %v5484 = vsub.f32 0.0, %v5429
    %v5485 = vsub.f32 0.0, %v5431
    %v5486 = vsub.f32 0.0, %v5433
    %v5487 = vsub.f32 0.0, %v5435
    %v5488 = vsub.f32 0.0, %v5437
    %v5489 = vsub.f32 0.0, %v5439
    %v5490 = vsub.f32 0.0, %v5441
    %v5491 = vsub.f32 0.0, %v5443
    %v5492 = vsub.f32 0.0, %v5445
    %v5493 = vsub.f32 0.0, %v5447
    %v5494 = vsub.f32 0.0, %v5449
    %v5495 = vsub.f32 0.0, %v5451
    %v5496 = vsub.f32 0.0, %v5453
    %v5497 = vsub.f32 0.0, %v5455
    %v5498 = vsub.f32 0.0, %v5457
    %v5499 = vsub.f32 0.0, %v5459
    %v5500 = vsub.f32 0.0, %v5461
    %v5501 = vsub.f32 0.0, %v5463
    %v5502 = vsub.f32 0.0, %v5465
    %v5503 = vsub.f32 0.0, %v5467
    %v5504 = vsub.f32 0.0, %v5469
    %v5505 = vsub.f32 0.0, %v5471
    %v5506 = vsub.f32 0.0, %v5473
    %v5507 = vsub.f32 0.0, %v5475
    %v5508 = vmul.f32 %v5123, %v5123
    %v5509 = vmul.f32 %v5124, %v5124
    %v5510 = vmul.f32 %v5125, %v5125
    %v5511 = vmul.f32 %v5126, %v5126
    %v5512 = vmul.f32 %v5127, %v5127
    %v5513 = vmul.f32 %v5128, %v5128
    %v5514 = vmul.f32 %v5129, %v5129
    %v5515 = vmul.f32 %v5130, %v5130
    %v5516 = vmul.f32 %v5131, %v5131
    %v5517 = vmul.f32 %v5132, %v5132
    %v5518 = vmul.f32 %v5133, %v5133
    %v5519 = vmul.f32 %v5134, %v5134
    %v5520 = vmul.f32 %v5135, %v5135
    %v5521 = vmul.f32 %v5136, %v5136
    %v5522 = vmul.f32 %v5137, %v5137
    %v5523 = vmul.f32 %v5138, %v5138
    %v5524 = vmul.f32 %v5139, %v5139
    %v5525 = vmul.f32 %v5140, %v5140
    %v5526 = vmul.f32 %v5141, %v5141
    %v5527 = vmul.f32 %v5142, %v5142
    %v5528 = vmul.f32 %v5143, %v5143
    %v5529 = vmul.f32 %v5144, %v5144
    %v5530 = vmul.f32 %v5145, %v5145
    %v5531 = vmul.f32 %v5146, %v5146
    %v5532 = vmul.f32 %v5147, %v5147
    %v5533 = vmul.f32 %v5148, %v5148
    %v5534 = vmul.f32 %v5149, %v5149
    %v5535 = vmul.f32 %v5150, %v5150
    %v5536 = vmul.f32 %v5151, %v5151
    %v5537 = vmul.f32 %v5152, %v5152
    %v5538 = vmul.f32 %v5153, %v5153
    %v5539 = vmul.f32 %v5154, %v5154
    %v5540 = vmul.f32 %v4579, %v4579
    %v5541 = vmul.f32 %v4580, %v4580
    %v5542 = vmul.f32 %v4581, %v4581
    %v5543 = vmul.f32 %v4582, %v4582
    %v5544 = vmul.f32 %v4583, %v4583
    %v5545 = vmul.f32 %v4584, %v4584
    %v5546 = vmul.f32 %v4585, %v4585
    %v5547 = vmul.f32 %v4586, %v4586
    %v5548 = vmul.f32 %v4587, %v4587
    %v5549 = vmul.f32 %v4588, %v4588
    %v5550 = vmul.f32 %v4589, %v4589
    %v5551 = vmul.f32 %v4590, %v4590
    %v5552 = vmul.f32 %v4591, %v4591
    %v5553 = vmul.f32 %v4592, %v4592
    %v5554 = vmul.f32 %v4593, %v4593
    %v5555 = vmul.f32 %v4594, %v4594
    %v5556 = vmul.f32 %v4595, %v4595
    %v5557 = vmul.f32 %v4596, %v4596
    %v5558 = vmul.f32 %v4597, %v4597
    %v5559 = vmul.f32 %v4598, %v4598
    %v5560 = vmul.f32 %v4599, %v4599
    %v5561 = vmul.f32 %v4600, %v4600
    %v5562 = vmul.f32 %v4601, %v4601
    %v5563 = vmul.f32 %v4602, %v4602
    %v5564 = vmul.f32 %v4603, %v4603
    %v5565 = vmul.f32 %v4604, %v4604
    %v5566 = vmul.f32 %v4605, %v4605
    %v5567 = vmul.f32 %v4606, %v4606
    %v5568 = vmul.f32 %v4607, %v4607
    %v5569 = vmul.f32 %v4608, %v4608
    %v5570 = vmul.f32 %v4609, %v4609
    %v5571 = vmul.f32 %v4610, %v4610
    %v5572 = vadd.f32 %v5508, %v5540
    %v5573 = vadd.f32 %v5509, %v5541
    %v5574 = vadd.f32 %v5510, %v5542
    %v5575 = vadd.f32 %v5511, %v5543
    %v5576 = vadd.f32 %v5512, %v5544
    %v5577 = vadd.f32 %v5513, %v5545
    %v5578 = vadd.f32 %v5514, %v5546
    %v5579 = vadd.f32 %v5515, %v5547
    %v5580 = vadd.f32 %v5516, %v5548
    %v5581 = vadd.f32 %v5517, %v5549
    %v5582 = vadd.f32 %v5518, %v5550
    %v5583 = vadd.f32 %v5519, %v5551
    %v5584 = vadd.f32 %v5520, %v5552
    %v5585 = vadd.f32 %v5521, %v5553
    %v5586 = vadd.f32 %v5522, %v5554
    %v5587 = vadd.f32 %v5523, %v5555
    %v5588 = vadd.f32 %v5524, %v5556
    %v5589 = vadd.f32 %v5525, %v5557
    %v5590 = vadd.f32 %v5526, %v5558
    %v5591 = vadd.f32 %v5527, %v5559
    %v5592 = vadd.f32 %v5528, %v5560
    %v5593 = vadd.f32 %v5529, %v5561
    %v5594 = vadd.f32 %v5530, %v5562
    %v5595 = vadd.f32 %v5531, %v5563
    %v5596 = vadd.f32 %v5532, %v5564
    %v5597 = vadd.f32 %v5533, %v5565
    %v5598 = vadd.f32 %v5534, %v5566
    %v5599 = vadd.f32 %v5535, %v5567
    %v5600 = vadd.f32 %v5536, %v5568
    %v5601 = vadd.f32 %v5537, %v5569
    %v5602 = vadd.f32 %v5538, %v5570
    %v5603 = vadd.f32 %v5539, %v5571
    %v5604 = vmul.f32 %v5572, 0.5
    %v5605 = vmul.f32 %v5573, 0.5
    %v5606 = vmul.f32 %v5574, 0.5
    %v5607 = vmul.f32 %v5575, 0.5
    %v5608 = vmul.f32 %v5576, 0.5
    %v5609 = vmul.f32 %v5577, 0.5
    %v5610 = vmul.f32 %v5578, 0.5
    %v5611 = vmul.f32 %v5579, 0.5
    %v5612 = vmul.f32 %v5580, 0.5
    %v5613 = vmul.f32 %v5581, 0.5
    %v5614 = vmul.f32 %v5582, 0.5
    %v5615 = vmul.f32 %v5583, 0.5
    %v5616 = vmul.f32 %v5584, 0.5
    %v5617 = vmul.f32 %v5585, 0.5
    %v5618 = vmul.f32 %v5586, 0.5
    %v5619 = vmul.f32 %v5587, 0.5
    %v5620 = vmul.f32 %v5588, 0.5
    %v5621 = vmul.f32 %v5589, 0.5
    %v5622 = vmul.f32 %v5590, 0.5
    %v5623 = vmul.f32 %v5591, 0.5
    %v5624 = vmul.f32 %v5592, 0.5
    %v5625 = vmul.f32 %v5593, 0.5
    %v5626 = vmul.f32 %v5594, 0.5
    %v5627 = vmul.f32 %v5595, 0.5
    %v5628 = vmul.f32 %v5596, 0.5
    %v5629 = vmul.f32 %v5597, 0.5
    %v5630 = vmul.f32 %v5598, 0.5
    %v5631 = vmul.f32 %v5599, 0.5
    %v5632 = vmul.f32 %v5600, 0.5
    %v5633 = vmul.f32 %v5601, 0.5
    %v5634 = vmul.f32 %v5602, 0.5
    %v5635 = vmul.f32 %v5603, 0.5
    %v5636 = vadd.f32 %v5476, %v5604
    %v5637 = vadd.f32 %v5477, %v5605
    %v5638 = vadd.f32 %v5478, %v5606
    %v5639 = vadd.f32 %v5479, %v5607
    %v5640 = vadd.f32 %v5480, %v5608
    %v5641 = vadd.f32 %v5481, %v5609
    %v5642 = vadd.f32 %v5482, %v5610
    %v5643 = vadd.f32 %v5483, %v5611
    %v5644 = vadd.f32 %v5484, %v5612
    %v5645 = vadd.f32 %v5485, %v5613
    %v5646 = vadd.f32 %v5486, %v5614
    %v5647 = vadd.f32 %v5487, %v5615
    %v5648 = vadd.f32 %v5488, %v5616
    %v5649 = vadd.f32 %v5489, %v5617
    %v5650 = vadd.f32 %v5490, %v5618
    %v5651 = vadd.f32 %v5491, %v5619
    %v5652 = vadd.f32 %v5492, %v5620
    %v5653 = vadd.f32 %v5493, %v5621
    %v5654 = vadd.f32 %v5494, %v5622
    %v5655 = vadd.f32 %v5495, %v5623
    %v5656 = vadd.f32 %v5496, %v5624
    %v5657 = vadd.f32 %v5497, %v5625
    %v5658 = vadd.f32 %v5498, %v5626
    %v5659 = vadd.f32 %v5499, %v5627
    %v5660 = vadd.f32 %v5500, %v5628
    %v5661 = vadd.f32 %v5501, %v5629
    %v5662 = vadd.f32 %v5502, %v5630
    %v5663 = vadd.f32 %v5503, %v5631
    %v5664 = vadd.f32 %v5504, %v5632
    %v5665 = vadd.f32 %v5505, %v5633
    %v5666 = vadd.f32 %v5506, %v5634
    %v5667 = vadd.f32 %v5507, %v5635
    %v5668 = vsub.f32 %v5636, 0.5
    %v5669 = vsub.f32 %v5637, 0.5
    %v5670 = vsub.f32 %v5638, 0.5
    %v5671 = vsub.f32 %v5639, 0.5
    %v5672 = vsub.f32 %v5640, 0.5
    %v5673 = vsub.f32 %v5641, 0.5
    %v5674 = vsub.f32 %v5642, 0.5
    %v5675 = vsub.f32 %v5643, 0.5
    %v5676 = vsub.f32 %v5644, 0.5
    %v5677 = vsub.f32 %v5645, 0.5
    %v5678 = vsub.f32 %v5646, 0.5
    %v5679 = vsub.f32 %v5647, 0.5
    %v5680 = vsub.f32 %v5648, 0.5
    %v5681 = vsub.f32 %v5649, 0.5
    %v5682 = vsub.f32 %v5650, 0.5
    %v5683 = vsub.f32 %v5651, 0.5
    %v5684 = vsub.f32 %v5652, 0.5
    %v5685 = vsub.f32 %v5653, 0.5
    %v5686 = vsub.f32 %v5654, 0.5
    %v5687 = vsub.f32 %v5655, 0.5
    %v5688 = vsub.f32 %v5656, 0.5
    %v5689 = vsub.f32 %v5657, 0.5
    %v5690 = vsub.f32 %v5658, 0.5
    %v5691 = vsub.f32 %v5659, 0.5
    %v5692 = vsub.f32 %v5660, 0.5
    %v5693 = vsub.f32 %v5661, 0.5
    %v5694 = vsub.f32 %v5662, 0.5
    %v5695 = vsub.f32 %v5663, 0.5
    %v5696 = vsub.f32 %v5664, 0.5
    %v5697 = vsub.f32 %v5665, 0.5
    %v5698 = vsub.f32 %v5666, 0.5
    %v5699 = vsub.f32 %v5667, 0.5
    %v5700 = vadd.f32 %v5668, %v5669
    %v5701 = vadd.f32 %v5700, %v5670
    %v5702 = vadd.f32 %v5701, %v5671
    %v5703 = vadd.f32 %v5702, %v5672
    %v5704 = vadd.f32 %v5703, %v5673
    %v5705 = vadd.f32 %v5704, %v5674
    %v5706 = vadd.f32 %v5705, %v5675
    %v5707 = vadd.f32 %v5706, %v5676
    %v5708 = vadd.f32 %v5707, %v5677
    %v5709 = vadd.f32 %v5708, %v5678
    %v5710 = vadd.f32 %v5709, %v5679
    %v5711 = vadd.f32 %v5710, %v5680
    %v5712 = vadd.f32 %v5711, %v5681
    %v5713 = vadd.f32 %v5712, %v5682
    %v5714 = vadd.f32 %v5713, %v5683
    %v5715 = vadd.f32 %v5714, %v5684
    %v5716 = vadd.f32 %v5715, %v5685
    %v5717 = vadd.f32 %v5716, %v5686
    %v5718 = vadd.f32 %v5717, %v5687
    %v5719 = vadd.f32 %v5718, %v5688
    %v5720 = vadd.f32 %v5719, %v5689
    %v5721 = vadd.f32 %v5720, %v5690
    %v5722 = vadd.f32 %v5721, %v5691
    %v5723 = vadd.f32 %v5722, %v5692
    %v5724 = vadd.f32 %v5723, %v5693
    %v5725 = vadd.f32 %v5724, %v5694
    %v5726 = vadd.f32 %v5725, %v5695
    %v5727 = vadd.f32 %v5726, %v5696
    %v5728 = vadd.f32 %v5727, %v5697
    %v5729 = vadd.f32 %v5728, %v5698
    %v5730 = vadd.f32 %v5729, %v5699
    %5731 = vadd.xlane.f32.xlu0 %v5730
    %v5732 = vpop.xlane.xlu0 %5731
    %v5733 = vrot.slane %v5732, 4
    %v5734 = vadd.f32 %v5732, %v5733
    %v5735 = vrot.slane %v5734, 2
    %v5736 = vadd.f32 %v5734, %v5735
    %v5737 = vrot.slane %v5736, 1
    %v5738 = vadd.f32 %v5736, %v5737
    %s5739 = vtos %v5738
    %v5740 = vstv %s5739
    %v5741 = vadd.f32 %v4546, %v5740
    %v5742 = vmax.f32 %v5301, 1e-30
    %v5743 = vlog2.pop %v5742
    %v5744 = vmul.f32 %v5743, 0.6931472
    %v5745 = vsub.f32 0.0, %v5744
    %v5746 = vmul.f32 %v5301, %v5301
    %v5747 = vmul.f32 %v5284, %v5284
    %v5748 = vadd.f32 %v5746, %v5747
    %v5749 = vmul.f32 %v5748, 0.5
    %v5750 = vadd.f32 %v5745, %v5749
    %v5751 = vsub.f32 %v5750, 0.5
    %v5752 = vsel %vm4532, %v5751, 0.0
    %5753 = vadd.xlane.f32.xlu0 %v5752
    %v5754 = vpop.xlane.xlu0 %5753
    %v5755 = vrot.slane %v5754, 4
    %v5756 = vadd.f32 %v5754, %v5755
    %v5757 = vrot.slane %v5756, 2
    %v5758 = vadd.f32 %v5756, %v5757
    %v5759 = vrot.slane %v5758, 1
    %v5760 = vadd.f32 %v5758, %v5759
    %s5761 = vtos %v5760
    %v5762 = vstv %s5761
    %v5763 = vadd.f32 %v5741, %v5762
    %5764 = vst [vmem:[#allocation16] sm:$0xff] %v5377
    %vm5765 = vcmask 0
    %5766 = vst.msk [vmem:[#allocation17] sm:$0x1] %vm5765, %v5763
    // Predicated region
    $region86: #{bayesian_base_forward.1} parent=1 // pred_check
      _
    $region87: #{bayesian_base_forward.1} parent=1 // pred_check_branch
      %5768 = sbr.rel (0) target = $region89
    $region88: #{bayesian_base_forward.1} parent=1 // pred_region
      %s5770 = ssub.s32 128, 128
      %5771 = vsyncadd [#allocation4], %s5770
      %s5773 = sshll.u32 [#allocation16], 4
      %s5774 = int_to_ptr.vmem [resolvable:$true] %s5773
      %5776 = dma.vmem_to_hbm [thread:$0]  %s5774, 128, %s13, [#allocation4]
    $region89: #{bayesian_base_forward.1} parent=1 // pred_fallthru
      _
    // Predicated region
    $region90: #{bayesian_base_forward.1} parent=1 // pred_check
      _
    $region91: #{bayesian_base_forward.1} parent=1 // pred_check_branch
      %5778 = sbr.rel (0) target = $region93
    $region92: #{bayesian_base_forward.1} parent=1 // pred_region
      %s5780 = ssub.s32 16, 16
      %5781 = vsyncadd [#allocation18], %s5780
      %s5783 = sshll.u32 [#allocation17], 4
      %s5784 = int_to_ptr.vmem [resolvable:$true] %s5783
      %5786 = dma.vmem_to_hbm [thread:$0]  %s5784, 16, %s14, [#allocation18]
    $region93: #{bayesian_base_forward.1} parent=1 // pred_fallthru
      _
    // Predicated region
    $region94: #{bayesian_base_forward.1} parent=1 // pred_check
      _
    $region95: #{bayesian_base_forward.1} parent=1 // pred_check_branch
      %5788 = sbr.rel (0) target = $region97
    $region96: #{bayesian_base_forward.1} parent=1 // pred_region
      %5789 = dma.done [#allocation4], 128
    $region97: #{bayesian_base_forward.1} parent=1 // pred_fallthru
      _
    // Predicated region
    $region98: #{bayesian_base_forward.1} parent=1 // pred_check
      _
    $region99: #{bayesian_base_forward.1} parent=1 // pred_check_branch
      %5791 = sbr.rel (0) target = $region101
    $region100: #{bayesian_base_forward.1} parent=1 // pred_region
      %5792 = dma.done [#allocation18], 16
    $region101: #{bayesian_base_forward.1} parent=1 // pred_fallthru
      _
    %5793 = vsyncpa [#allocation3], 1
    %5794 = vsyncpa [#allocation6], 1
    %5795 = vsyncpa [#allocation9], 1
    %5796 = vsyncpa [#allocation12], 1
    %5797 = vsyncpa [#allocation15], 1
    %5798 = vsyncpa [#allocation4], 1
    %5799 = vsyncpa [#allocation18], 1

</llo_original>
